<compile_context>
chip_gen: v6e
topology: v6e:2x2x1
jax: 0.10.0
libtpu: 0.0.40
codegen_flags: <defaults>
</compile_context>

<pallas_src>
import functools

import jax
import jax.numpy as jnp
from jax.experimental import pallas as pl
from jax.experimental.pallas import tpu as pltpu

EPS = 1e-4          # nn.BatchNorm2d(filters, eps=0.0001)
NEG_SLOPE = 0.02    # nn.LeakyReLU(negative_slope=0.02)


def _lrelu(x):
    return jnp.where(x >= 0, x, NEG_SLOPE * x)


def _residual_block_kernel(x_ref, w1_ref, w2_ref, g1_ref, be1_ref,
                           g2_ref, be2_ref, fold_ref, out_ref, pad_ref,
                           *, channels):
    """Single-block kernel (whole problem fits comfortably in VMEM).

    x_ref   : (N, H, F) f32, F = W*C fused lane axis (NHWC with W,C merged)
    w*_ref  : (3, F, F) bf16 banded conv weights (dy-indexed; dx taps + L/R pad folded in)
    g*/be*  : (1, F) f32 BN affine params, tiled over the W lane blocks
    fold_ref: (F, F) f32 tiled identity; row_stats @ fold = per-channel totals broadcast
              back over the W lane blocks (one tiny MXU matmul)
    out_ref : (N, H, F) f32
    pad_ref : (N, H+2, F) f32 scratch; rows 0 and H+1 are the zero dy-halo
    """
    N, H, F = x_ref.shape
    M = N * H
    inv_count = 1.0 / (N * H * (F // channels))        # 1 / (N*H*W)

    def conv3x3(w_ref):
        # 3 row-shifted (M, F) @ (F, F) MXU matmuls; bf16 operands, f32 accumulation.
        acc = None
        for dy in range(3):
            lhs = pad_ref[:, dy:dy + H, :].reshape(M, F).astype(jnp.bfloat16)
            part = jnp.dot(lhs, w_ref[dy], preferred_element_type=jnp.float32)
            acc = part if acc is None else acc + part
        return acc

    def batchnorm(acc, gamma, beta):
        # One-pass batch statistics (sum / sum-of-squares). The sublane reduction gives
        # per-(x, c) totals; the tiled-identity matmul folds the W blocks per channel and
        # broadcasts the result back into the fused lane layout in one shot.
        s = jnp.dot(jnp.sum(acc, axis=0, keepdims=True), fold_ref[...],
                    preferred_element_type=jnp.float32)
        ss = jnp.dot(jnp.sum(acc * acc, axis=0, keepdims=True), fold_ref[...],
                     preferred_element_type=jnp.float32)
        mean = s * inv_count
        var = ss * inv_count - mean * mean             # biased variance (training-mode BN)
        return (acc - mean) * (gamma * jax.lax.rsqrt(var + EPS)) + beta

    # Zero only the 1-row dy halo; the dx halo is folded into the banded weights and the
    # scratch is reused for conv2, so this happens exactly once.
    zero_row = jnp.zeros((N, 1, F), jnp.float32)
    pad_ref[:, 0:1, :] = zero_row
    pad_ref[:, H + 1:H + 2, :] = zero_row

    # ---- conv1 -> BN1 -> LeakyReLU ----  (conv bias exactly cancelled by BN)
    pad_ref[:, 1:H + 1, :] = x_ref[...]
    h = _lrelu(batchnorm(conv3x3(w1_ref), g1_ref[...], be1_ref[...]))

    # ---- conv2 -> BN2 ----  (reuse pad_ref; halo rows are still zero)
    pad_ref[:, 1:H + 1, :] = h.reshape(N, H, F)
    h = batchnorm(conv3x3(w2_ref), g2_ref[...], be2_ref[...])

    # ---- residual add + LeakyReLU; lane-dense store (F is a multiple of 128) ----
    out_ref[...] = _lrelu(h + x_ref[...].reshape(M, F)).reshape(N, H, F)


def _banded_weight(w_oihw, w_spatial, channels):
    """PyTorch (Cout, Cin, 3, 3) -> (3, W*C, W*C) bf16 banded matrices.

    band[dy, xi*C + ci, xo*C + co] = w[co, ci, dy, xi - xo + 1] for |xi - xo| <= 1,
    zero otherwise: folds the dx taps and the conv's left/right zero padding into the
    matmul contraction (K = W*C).
    """
    C, W = channels, w_spatial
    wk = jnp.transpose(w_oihw, (2, 3, 1, 0)).astype(jnp.float32)   # (dy, dx, ci, co)
    band = jnp.zeros((3, W * C, W * C), jnp.float32)
    for xo in range(W):
        for dx in range(3):
            xi = xo + dx - 1
            if 0 <= xi < W:
                band = band.at[:, xi * C:(xi + 1) * C,
                               xo * C:(xo + 1) * C].set(wk[:, dx])
    return band.astype(jnp.bfloat16)


@jax.jit
def residual_block(x_nchw, w1, b1, g1, be1, w2, b2, g2, be2):
    N, C, H, W = x_nchw.shape
    F = W * C
    # Conv biases are exactly cancelled by the training-mode BN mean subtraction that
    # immediately follows each conv -> dead inputs; not passed to the kernel.
    del b1, b2

    # NCHW -> NHWC (one transpose), then fuse (W, C) into the lane axis (free reshape).
    # No jnp.pad round trip: the dy halo is built inside the kernel.
    x = jnp.transpose(x_nchw, (0, 2, 3, 1)).astype(jnp.float32).reshape(N, H, F)

    w1b = _banded_weight(w1, W, C)
    w2b = _banded_weight(w2, W, C)
    tile = lambda v: jnp.tile(v.astype(jnp.float32), W).reshape(1, F)
    fold = jnp.tile(jnp.eye(C, dtype=jnp.float32), (W, W))          # (F, F)

    vmem = pl.BlockSpec(memory_space=pltpu.MemorySpace.VMEM)
    # TODO(synk): for large N*H*W, add a spatial row-tile grid (1-row halo) marked
    # "parallel" with a two-pass BN (per-tile sum/sumsq then normalize) so v7x's two
    # TensorCores and pipelined HBM<->VMEM DMA are used; at this shape the whole working
    # set is ~1.2 MiB of VMEM, so a single grid-less block is optimal.
    out = pl.pallas_call(
        functools.partial(_residual_block_kernel, channels=C),
        out_shape=jax.ShapeDtypeStruct((N, H, F), jnp.float32),
        in_specs=[vmem] * 8,
        out_specs=vmem,
        scratch_shapes=[pltpu.VMEM((N, H + 2, F), jnp.float32)],
        compiler_params=pltpu.CompilerParams(vmem_limit_bytes=32 * 1024 * 1024),
    )(x, w1b, w2b, tile(g1), tile(be1), tile(g2), tile(be2), fold)

    # fused lane axis -> NHWC -> NCHW
    return jnp.transpose(out.reshape(N, H, W, C), (0, 3, 1, 2))


def _reference(x_nchw, w1, b1, g1, be1, w2, b2, g2, be2,
               conv_dtype=jnp.float32):
    """Pure-JAX reference of the PyTorch forward (training-mode BN).

    conv_dtype=bfloat16 mirrors the kernel's MXU operand precision (f32 accumulation).
    """
    def conv(x, w, b):
        y = jax.lax.conv_general_dilated(
            x.astype(conv_dtype), w.astype(conv_dtype),
            window_strides=(1, 1), padding=((1, 1), (1, 1)),
            dimension_numbers=("NCHW", "OIHW", "NCHW"),
            preferred_element_type=jnp.float32)
        return y + b[None, :, None, None]

    def bn(x, g, be):
        mean = jnp.mean(x, axis=(0, 2, 3), keepdims=True)
        var = jnp.mean((x - mean) ** 2, axis=(0, 2, 3), keepdims=True)
        return (x - mean) * jax.lax.rsqrt(var + EPS) * g[None, :, None, None] \
            + be[None, :, None, None]

    out = _lrelu(bn(conv(x_nchw, w1, b1), g1, be1))
    out = bn(conv(out, w2, b2), g2, be2)
    return _lrelu(out + x_nchw)


if __name__ == "__main__":
    key = jax.random.PRNGKey(0)
    N, C, H, W = 2, 32, 8, 8      # batch=2, filters=32, spatial=8x8
    keys = jax.random.split(key, 10)

    fan_in = C * 3 * 3
    k = 1.0 / jnp.sqrt(fan_in)
    x = jax.random.normal(keys[0], (N, C, H, W), jnp.float32)
    w1 = jax.random.uniform(keys[1], (C, C, 3, 3), jnp.float32, -k, k)
    b1 = jax.random.uniform(keys[2], (C,), jnp.float32, -k, k)
    w2 = jax.random.uniform(keys[3], (C, C, 3, 3), jnp.float32, -k, k)
    b2 = jax.random.uniform(keys[4], (C,), jnp.float32, -k, k)
    g1 = 1.0 + 0.1 * jax.random.normal(keys[5], (C,), jnp.float32)
    be1 = 0.1 * jax.random.normal(keys[6], (C,), jnp.float32)
    g2 = 1.0 + 0.1 * jax.random.normal(keys[7], (C,), jnp.float32)
    be2 = 0.1 * jax.random.normal(keys[8], (C,), jnp.float32)

    out = residual_block(x, w1, b1, g1, be1, w2, b2, g2, be2)
    out = jax.block_until_ready(out)
    assert out.shape == (N, C, H, W)

    # Tight check vs. a reference using the same bf16 MXU operand precision
    # (f32 accumulation), plus a looser check vs. the full-f32 reference
    # (bf16 operands introduce ~1e-2-level deviations; BN/residual stay f32).
    ref_bf16 = _reference(x, w1, b1, g1, be1, w2, b2, g2, be2,
                          conv_dtype=jnp.bfloat16)
    ref_f32 = _reference(x, w1, b1, g1, be1, w2, b2, g2, be2,
                         conv_dtype=jnp.float32)
    err_bf16 = float(jnp.max(jnp.abs(out - ref_bf16)))
    err_f32 = float(jnp.max(jnp.abs(out - ref_f32)))
    assert jnp.allclose(out, ref_bf16, rtol=1e-2, atol=1e-2), \
        f"mismatch vs bf16-conv reference: max abs err = {err_bf16}"
    assert jnp.allclose(out, ref_f32, rtol=2e-2, atol=5e-2), \
        f"mismatch vs f32 reference: max abs err = {err_f32}"

    print("KERNEL_OK")
</pallas_src>

<mosaic_0001>
module attributes {stable_mosaic.version = 11 : i64} {
  func.func @_residual_block_kernel(%arg0: memref<2x8x256xf32, #tpu.memory_space<vmem>>, %arg1: memref<3x256x256xbf16, #tpu.memory_space<vmem>>, %arg2: memref<3x256x256xbf16, #tpu.memory_space<vmem>>, %arg3: memref<1x256xf32, #tpu.memory_space<vmem>>, %arg4: memref<1x256xf32, #tpu.memory_space<vmem>>, %arg5: memref<1x256xf32, #tpu.memory_space<vmem>>, %arg6: memref<1x256xf32, #tpu.memory_space<vmem>>, %arg7: memref<256x256xf32, #tpu.memory_space<vmem>>, %arg8: memref<2x8x256xf32, #tpu.memory_space<vmem>>, %arg9: memref<2x10x256xf32, #tpu.memory_space<vmem>>) attributes {dimension_semantics = [], scalar_prefetch = 0 : i64, scratch_operands = 1 : i64, tpu.core_type = #tpu.core_type<tc>} {
    %cst = arith.constant 0.000000e+00 : f32
    %0 = vector.broadcast %cst : f32 to vector<2x1x256xf32>
    %c0 = arith.constant 0 : index
    %c0_0 = arith.constant 0 : index
    %c0_1 = arith.constant 0 : index
    %1 = vector.load %arg9[%c0, %c0_0, %c0_1] : memref<2x10x256xf32, #tpu.memory_space<vmem>>, vector<2x1x256xf32>
    tpu.vector_store %arg9[%c0, %c0_0, %c0_1], %0 {strides = array<i32>} : memref<2x10x256xf32, #tpu.memory_space<vmem>>, vector<2x1x256xf32>,
    %c0_2 = arith.constant 0 : index
    %c9 = arith.constant 9 : index
    %c0_3 = arith.constant 0 : index
    %2 = vector.load %arg9[%c0_2, %c9, %c0_3] : memref<2x10x256xf32, #tpu.memory_space<vmem>>, vector<2x1x256xf32>
    tpu.vector_store %arg9[%c0_2, %c9, %c0_3], %0 {strides = array<i32>} : memref<2x10x256xf32, #tpu.memory_space<vmem>>, vector<2x1x256xf32>,
    %c0_4 = arith.constant 0 : index
    %c0_5 = arith.constant 0 : index
    %c0_6 = arith.constant 0 : index
    %3 = vector.load %arg0[%c0_4, %c0_5, %c0_6] : memref<2x8x256xf32, #tpu.memory_space<vmem>>, vector<2x8x256xf32>
    %c0_7 = arith.constant 0 : index
    %c1 = arith.constant 1 : index
    %c0_8 = arith.constant 0 : index
    %4 = vector.load %arg9[%c0_7, %c1, %c0_8] : memref<2x10x256xf32, #tpu.memory_space<vmem>>, vector<2x8x256xf32>
    tpu.vector_store %arg9[%c0_7, %c1, %c0_8], %3 {strides = array<i32>} : memref<2x10x256xf32, #tpu.memory_space<vmem>>, vector<2x8x256xf32>,
    %c0_9 = arith.constant 0 : index
    %c0_10 = arith.constant 0 : index
    %c0_11 = arith.constant 0 : index
    %5 = vector.load %arg9[%c0_9, %c0_10, %c0_11] : memref<2x10x256xf32, #tpu.memory_space<vmem>>, vector<2x8x256xf32>
    %6 = vector.shape_cast %5 : vector<2x8x256xf32> to vector<16x256xf32>
    %7 = arith.truncf %6 : vector<16x256xf32> to vector<16x256xbf16>
    %c0_12 = arith.constant 0 : index
    %c0_13 = arith.constant 0 : index
    %c0_14 = arith.constant 0 : index
    %8 = vector.load %arg1[%c0_12, %c0_13, %c0_14] : memref<3x256x256xbf16, #tpu.memory_space<vmem>>, vector<1x256x256xbf16>
    %9 = vector.shape_cast %8 : vector<1x256x256xbf16> to vector<256x256xbf16>
    %cst_15 = arith.constant dense<0.000000e+00> : vector<16x256xf32>
    %10 = tpu.matmul %7, %9, %cst_15 {dimension_numbers = #tpu.dot_dimension_numbers<[1], [0], [0], [1], [0, 0, 1, 1], [], []>} : vector<16x256xbf16>, vector<256x256xbf16>, vector<16x256xf32> -> vector<16x256xf32>
    %c0_16 = arith.constant 0 : index
    %c1_17 = arith.constant 1 : index
    %c0_18 = arith.constant 0 : index
    %11 = vector.load %arg9[%c0_16, %c1_17, %c0_18] : memref<2x10x256xf32, #tpu.memory_space<vmem>>, vector<2x8x256xf32>
    %12 = vector.shape_cast %11 : vector<2x8x256xf32> to vector<16x256xf32>
    %13 = arith.truncf %12 : vector<16x256xf32> to vector<16x256xbf16>
    %c1_19 = arith.constant 1 : index
    %c0_20 = arith.constant 0 : index
    %c0_21 = arith.constant 0 : index
    %14 = vector.load %arg1[%c1_19, %c0_20, %c0_21] : memref<3x256x256xbf16, #tpu.memory_space<vmem>>, vector<1x256x256xbf16>
    %15 = vector.shape_cast %14 : vector<1x256x256xbf16> to vector<256x256xbf16>
    %cst_22 = arith.constant dense<0.000000e+00> : vector<16x256xf32>
    %16 = tpu.matmul %13, %15, %cst_22 {dimension_numbers = #tpu.dot_dimension_numbers<[1], [0], [0], [1], [0, 0, 1, 1], [], []>} : vector<16x256xbf16>, vector<256x256xbf16>, vector<16x256xf32> -> vector<16x256xf32>
    %17 = arith.addf %10, %16 : vector<16x256xf32>
    %c0_23 = arith.constant 0 : index
    %c2 = arith.constant 2 : index
    %c0_24 = arith.constant 0 : index
    %18 = vector.load %arg9[%c0_23, %c2, %c0_24] : memref<2x10x256xf32, #tpu.memory_space<vmem>>, vector<2x8x256xf32>
    %19 = vector.shape_cast %18 : vector<2x8x256xf32> to vector<16x256xf32>
    %20 = arith.truncf %19 : vector<16x256xf32> to vector<16x256xbf16>
    %c2_25 = arith.constant 2 : index
    %c0_26 = arith.constant 0 : index
    %c0_27 = arith.constant 0 : index
    %21 = vector.load %arg1[%c2_25, %c0_26, %c0_27] : memref<3x256x256xbf16, #tpu.memory_space<vmem>>, vector<1x256x256xbf16>
    %22 = vector.shape_cast %21 : vector<1x256x256xbf16> to vector<256x256xbf16>
    %cst_28 = arith.constant dense<0.000000e+00> : vector<16x256xf32>
    %23 = tpu.matmul %20, %22, %cst_28 {dimension_numbers = #tpu.dot_dimension_numbers<[1], [0], [0], [1], [0, 0, 1, 1], [], []>} : vector<16x256xbf16>, vector<256x256xbf16>, vector<16x256xf32> -> vector<16x256xf32>
    %24 = arith.addf %17, %23 : vector<16x256xf32>
    %c0_29 = arith.constant 0 : index
    %c0_30 = arith.constant 0 : index
    %25 = vector.load %arg3[%c0_29, %c0_30] : memref<1x256xf32, #tpu.memory_space<vmem>>, vector<1x256xf32>
    %c0_31 = arith.constant 0 : index
    %c0_32 = arith.constant 0 : index
    %26 = vector.load %arg4[%c0_31, %c0_32] : memref<1x256xf32, #tpu.memory_space<vmem>>, vector<1x256xf32>
    %cst_33 = arith.constant dense<0.000000e+00> : vector<256xf32>
    %27 = vector.multi_reduction <add>, %24, %cst_33 [0] : vector<16x256xf32> to vector<256xf32>
    %28 = vector.shape_cast %27 : vector<256xf32> to vector<1x256xf32>
    %c0_34 = arith.constant 0 : index
    %c0_35 = arith.constant 0 : index
    %29 = vector.load %arg7[%c0_34, %c0_35] : memref<256x256xf32, #tpu.memory_space<vmem>>, vector<256x256xf32>
    %cst_36 = arith.constant dense<0.000000e+00> : vector<1x256xf32>
    %30 = tpu.matmul %28, %29, %cst_36 {dimension_numbers = #tpu.dot_dimension_numbers<[1], [0], [0], [1], [0, 0, 1, 1], [], []>} : vector<1x256xf32>, vector<256x256xf32>, vector<1x256xf32> -> vector<1x256xf32>
    %31 = arith.mulf %24, %24 : vector<16x256xf32>
    %cst_37 = arith.constant dense<0.000000e+00> : vector<256xf32>
    %32 = vector.multi_reduction <add>, %31, %cst_37 [0] : vector<16x256xf32> to vector<256xf32>
    %33 = vector.shape_cast %32 : vector<256xf32> to vector<1x256xf32>
    %c0_38 = arith.constant 0 : index
    %c0_39 = arith.constant 0 : index
    %34 = vector.load %arg7[%c0_38, %c0_39] : memref<256x256xf32, #tpu.memory_space<vmem>>, vector<256x256xf32>
    %cst_40 = arith.constant dense<0.000000e+00> : vector<1x256xf32>
    %35 = tpu.matmul %33, %34, %cst_40 {dimension_numbers = #tpu.dot_dimension_numbers<[1], [0], [0], [1], [0, 0, 1, 1], [], []>} : vector<1x256xf32>, vector<256x256xf32>, vector<1x256xf32> -> vector<1x256xf32>
    %cst_41 = arith.constant 7.812500e-03 : f32
    %36 = vector.broadcast %cst_41 : f32 to vector<1x256xf32>
    %37 = arith.mulf %30, %36 : vector<1x256xf32>
    %cst_42 = arith.constant 7.812500e-03 : f32
    %38 = vector.broadcast %cst_42 : f32 to vector<1x256xf32>
    %39 = arith.mulf %35, %38 : vector<1x256xf32>
    %40 = arith.mulf %37, %37 : vector<1x256xf32>
    %41 = arith.subf %39, %40 : vector<1x256xf32>
    %42 = vector.broadcast %37 : vector<1x256xf32> to vector<16x256xf32>
    %43 = arith.subf %24, %42 : vector<16x256xf32>
    %cst_43 = arith.constant 9.99999974E-5 : f32
    %44 = vector.broadcast %cst_43 : f32 to vector<1x256xf32>
    %45 = arith.addf %41, %44 : vector<1x256xf32>
    %46 = math.rsqrt %45 : vector<1x256xf32>
    %47 = arith.mulf %25, %46 : vector<1x256xf32>
    %48 = vector.broadcast %47 : vector<1x256xf32> to vector<16x256xf32>
    %49 = arith.mulf %43, %48 : vector<16x256xf32>
    %50 = vector.broadcast %26 : vector<1x256xf32> to vector<16x256xf32>
    %51 = arith.addf %49, %50 : vector<16x256xf32>
    %cst_44 = arith.constant 0.000000e+00 : f32
    %52 = vector.broadcast %cst_44 : f32 to vector<16x256xf32>
    %53 = arith.cmpf oge, %51, %52 : vector<16x256xf32>
    %cst_45 = arith.constant 2.000000e-02 : f32
    %54 = vector.broadcast %cst_45 : f32 to vector<16x256xf32>
    %55 = arith.mulf %54, %51 : vector<16x256xf32>
    %56 = arith.select %53, %51, %55 : vector<16x256xi1>, vector<16x256xf32>
    %57 = vector.shape_cast %56 : vector<16x256xf32> to vector<2x8x256xf32>
    %c0_46 = arith.constant 0 : index
    %c1_47 = arith.constant 1 : index
    %c0_48 = arith.constant 0 : index
    %58 = vector.load %arg9[%c0_46, %c1_47, %c0_48] : memref<2x10x256xf32, #tpu.memory_space<vmem>>, vector<2x8x256xf32>
    tpu.vector_store %arg9[%c0_46, %c1_47, %c0_48], %57 {strides = array<i32>} : memref<2x10x256xf32, #tpu.memory_space<vmem>>, vector<2x8x256xf32>,
    %c0_49 = arith.constant 0 : index
    %c0_50 = arith.constant 0 : index
    %c0_51 = arith.constant 0 : index
    %59 = vector.load %arg9[%c0_49, %c0_50, %c0_51] : memref<2x10x256xf32, #tpu.memory_space<vmem>>, vector<2x8x256xf32>
    %60 = vector.shape_cast %59 : vector<2x8x256xf32> to vector<16x256xf32>
    %61 = arith.truncf %60 : vector<16x256xf32> to vector<16x256xbf16>
    %c0_52 = arith.constant 0 : index
    %c0_53 = arith.constant 0 : index
    %c0_54 = arith.constant 0 : index
    %62 = vector.load %arg2[%c0_52, %c0_53, %c0_54] : memref<3x256x256xbf16, #tpu.memory_space<vmem>>, vector<1x256x256xbf16>
    %63 = vector.shape_cast %62 : vector<1x256x256xbf16> to vector<256x256xbf16>
    %cst_55 = arith.constant dense<0.000000e+00> : vector<16x256xf32>
    %64 = tpu.matmul %61, %63, %cst_55 {dimension_numbers = #tpu.dot_dimension_numbers<[1], [0], [0], [1], [0, 0, 1, 1], [], []>} : vector<16x256xbf16>, vector<256x256xbf16>, vector<16x256xf32> -> vector<16x256xf32>
    %c0_56 = arith.constant 0 : index
    %c1_57 = arith.constant 1 : index
    %c0_58 = arith.constant 0 : index
    %65 = vector.load %arg9[%c0_56, %c1_57, %c0_58] : memref<2x10x256xf32, #tpu.memory_space<vmem>>, vector<2x8x256xf32>
    %66 = vector.shape_cast %65 : vector<2x8x256xf32> to vector<16x256xf32>
    %67 = arith.truncf %66 : vector<16x256xf32> to vector<16x256xbf16>
    %c1_59 = arith.constant 1 : index
    %c0_60 = arith.constant 0 : index
    %c0_61 = arith.constant 0 : index
    %68 = vector.load %arg2[%c1_59, %c0_60, %c0_61] : memref<3x256x256xbf16, #tpu.memory_space<vmem>>, vector<1x256x256xbf16>
    %69 = vector.shape_cast %68 : vector<1x256x256xbf16> to vector<256x256xbf16>
    %cst_62 = arith.constant dense<0.000000e+00> : vector<16x256xf32>
    %70 = tpu.matmul %67, %69, %cst_62 {dimension_numbers = #tpu.dot_dimension_numbers<[1], [0], [0], [1], [0, 0, 1, 1], [], []>} : vector<16x256xbf16>, vector<256x256xbf16>, vector<16x256xf32> -> vector<16x256xf32>
    %71 = arith.addf %64, %70 : vector<16x256xf32>
    %c0_63 = arith.constant 0 : index
    %c2_64 = arith.constant 2 : index
    %c0_65 = arith.constant 0 : index
    %72 = vector.load %arg9[%c0_63, %c2_64, %c0_65] : memref<2x10x256xf32, #tpu.memory_space<vmem>>, vector<2x8x256xf32>
    %73 = vector.shape_cast %72 : vector<2x8x256xf32> to vector<16x256xf32>
    %74 = arith.truncf %73 : vector<16x256xf32> to vector<16x256xbf16>
    %c2_66 = arith.constant 2 : index
    %c0_67 = arith.constant 0 : index
    %c0_68 = arith.constant 0 : index
    %75 = vector.load %arg2[%c2_66, %c0_67, %c0_68] : memref<3x256x256xbf16, #tpu.memory_space<vmem>>, vector<1x256x256xbf16>
    %76 = vector.shape_cast %75 : vector<1x256x256xbf16> to vector<256x256xbf16>
    %cst_69 = arith.constant dense<0.000000e+00> : vector<16x256xf32>
    %77 = tpu.matmul %74, %76, %cst_69 {dimension_numbers = #tpu.dot_dimension_numbers<[1], [0], [0], [1], [0, 0, 1, 1], [], []>} : vector<16x256xbf16>, vector<256x256xbf16>, vector<16x256xf32> -> vector<16x256xf32>
    %78 = arith.addf %71, %77 : vector<16x256xf32>
    %c0_70 = arith.constant 0 : index
    %c0_71 = arith.constant 0 : index
    %79 = vector.load %arg5[%c0_70, %c0_71] : memref<1x256xf32, #tpu.memory_space<vmem>>, vector<1x256xf32>
    %c0_72 = arith.constant 0 : index
    %c0_73 = arith.constant 0 : index
    %80 = vector.load %arg6[%c0_72, %c0_73] : memref<1x256xf32, #tpu.memory_space<vmem>>, vector<1x256xf32>
    %cst_74 = arith.constant dense<0.000000e+00> : vector<256xf32>
    %81 = vector.multi_reduction <add>, %78, %cst_74 [0] : vector<16x256xf32> to vector<256xf32>
    %82 = vector.shape_cast %81 : vector<256xf32> to vector<1x256xf32>
    %c0_75 = arith.constant 0 : index
    %c0_76 = arith.constant 0 : index
    %83 = vector.load %arg7[%c0_75, %c0_76] : memref<256x256xf32, #tpu.memory_space<vmem>>, vector<256x256xf32>
    %cst_77 = arith.constant dense<0.000000e+00> : vector<1x256xf32>
    %84 = tpu.matmul %82, %83, %cst_77 {dimension_numbers = #tpu.dot_dimension_numbers<[1], [0], [0], [1], [0, 0, 1, 1], [], []>} : vector<1x256xf32>, vector<256x256xf32>, vector<1x256xf32> -> vector<1x256xf32>
    %85 = arith.mulf %78, %78 : vector<16x256xf32>
    %cst_78 = arith.constant dense<0.000000e+00> : vector<256xf32>
    %86 = vector.multi_reduction <add>, %85, %cst_78 [0] : vector<16x256xf32> to vector<256xf32>
    %87 = vector.shape_cast %86 : vector<256xf32> to vector<1x256xf32>
    %c0_79 = arith.constant 0 : index
    %c0_80 = arith.constant 0 : index
    %88 = vector.load %arg7[%c0_79, %c0_80] : memref<256x256xf32, #tpu.memory_space<vmem>>, vector<256x256xf32>
    %cst_81 = arith.constant dense<0.000000e+00> : vector<1x256xf32>
    %89 = tpu.matmul %87, %88, %cst_81 {dimension_numbers = #tpu.dot_dimension_numbers<[1], [0], [0], [1], [0, 0, 1, 1], [], []>} : vector<1x256xf32>, vector<256x256xf32>, vector<1x256xf32> -> vector<1x256xf32>
    %cst_82 = arith.constant 7.812500e-03 : f32
    %90 = vector.broadcast %cst_82 : f32 to vector<1x256xf32>
    %91 = arith.mulf %84, %90 : vector<1x256xf32>
    %cst_83 = arith.constant 7.812500e-03 : f32
    %92 = vector.broadcast %cst_83 : f32 to vector<1x256xf32>
    %93 = arith.mulf %89, %92 : vector<1x256xf32>
    %94 = arith.mulf %91, %91 : vector<1x256xf32>
    %95 = arith.subf %93, %94 : vector<1x256xf32>
    %96 = vector.broadcast %91 : vector<1x256xf32> to vector<16x256xf32>
    %97 = arith.subf %78, %96 : vector<16x256xf32>
    %cst_84 = arith.constant 9.99999974E-5 : f32
    %98 = vector.broadcast %cst_84 : f32 to vector<1x256xf32>
    %99 = arith.addf %95, %98 : vector<1x256xf32>
    %100 = math.rsqrt %99 : vector<1x256xf32>
    %101 = arith.mulf %79, %100 : vector<1x256xf32>
    %102 = vector.broadcast %101 : vector<1x256xf32> to vector<16x256xf32>
    %103 = arith.mulf %97, %102 : vector<16x256xf32>
    %104 = vector.broadcast %80 : vector<1x256xf32> to vector<16x256xf32>
    %105 = arith.addf %103, %104 : vector<16x256xf32>
    %c0_85 = arith.constant 0 : index
    %c0_86 = arith.constant 0 : index
    %c0_87 = arith.constant 0 : index
    %106 = vector.load %arg0[%c0_85, %c0_86, %c0_87] : memref<2x8x256xf32, #tpu.memory_space<vmem>>, vector<2x8x256xf32>
    %107 = vector.shape_cast %106 : vector<2x8x256xf32> to vector<16x256xf32>
    %108 = arith.addf %105, %107 : vector<16x256xf32>
    %cst_88 = arith.constant 0.000000e+00 : f32
    %109 = vector.broadcast %cst_88 : f32 to vector<16x256xf32>
    %110 = arith.cmpf oge, %108, %109 : vector<16x256xf32>
    %cst_89 = arith.constant 2.000000e-02 : f32
    %111 = vector.broadcast %cst_89 : f32 to vector<16x256xf32>
    %112 = arith.mulf %111, %108 : vector<16x256xf32>
    %113 = arith.select %110, %108, %112 : vector<16x256xi1>, vector<16x256xf32>
    %114 = vector.shape_cast %113 : vector<16x256xf32> to vector<2x8x256xf32>
    %c0_90 = arith.constant 0 : index
    %c0_91 = arith.constant 0 : index
    %c0_92 = arith.constant 0 : index
    %115 = vector.load %arg8[%c0_90, %c0_91, %c0_92] : memref<2x8x256xf32, #tpu.memory_space<vmem>>, vector<2x8x256xf32>
    tpu.vector_store %arg8[%c0_90, %c0_91, %c0_92], %114 {strides = array<i32>} : memref<2x8x256xf32, #tpu.memory_space<vmem>>, vector<2x8x256xf32>,
    return
  }
}

</mosaic_0001>

<llo_original>
// kernel: tile.28
$region0: #{tile.28}
  #allocation0 [shape = 's32[1]{0}', space=sflag, size = 0x4, scoped, tag = 'scoped memory for tile.28']
  %s0 = inlined_call_operand.vmem [shape: f32[32,32], index: 0, kind: input, shape index: {}]
  %s1 = inlined_call_operand.vmem [shape: f32[8,32,8,32], index: 1, kind: output, shape index: {}]
  // Predicated region
  $region2: #{tile.28} parent=0 // pred_check
    _
  $region3: #{tile.28} parent=0 // pred_check_branch
    %3 = sbr.rel (0) target = $region5
  $region4: #{tile.28} parent=0 // pred_region
    _
  $region5: #{tile.28} parent=0 // pred_fallthru
    _
  %v4 = vld [vmem:[%s0] ss:$0 sm:$0xff]
  %5 = vst [vmem:[%s1] sm:$0xff] %v4
  %s6 = scalar_lea.vmem %s1, 256
  %7 = vst [vmem:[%s6] sm:$0xff] %v4
  %s8 = scalar_lea.vmem %s1, 512
  %9 = vst [vmem:[%s8] sm:$0xff] %v4
  %s10 = scalar_lea.vmem %s1, 768
  %11 = vst [vmem:[%s10] sm:$0xff] %v4
  %s12 = scalar_lea.vmem %s1, 1024
  %13 = vst [vmem:[%s12] sm:$0xff] %v4
  %s14 = scalar_lea.vmem %s1, 1280
  %15 = vst [vmem:[%s14] sm:$0xff] %v4
  %s16 = scalar_lea.vmem %s1, 1536
  %17 = vst [vmem:[%s16] sm:$0xff] %v4
  %s18 = scalar_lea.vmem %s1, 1792
  %19 = vst [vmem:[%s18] sm:$0xff] %v4
  %s20 = scalar_lea.vmem %s0, 1
  %v21 = vld [vmem:[%s20] ss:$0 sm:$0xff]
  %s22 = scalar_lea.vmem %s1, 8
  %23 = vst [vmem:[%s22] sm:$0xff] %v21
  %s24 = scalar_lea.vmem %s1, 264
  %25 = vst [vmem:[%s24] sm:$0xff] %v21
  %s26 = scalar_lea.vmem %s1, 520
  %27 = vst [vmem:[%s26] sm:$0xff] %v21
  %s28 = scalar_lea.vmem %s1, 776
  %29 = vst [vmem:[%s28] sm:$0xff] %v21
  %s30 = scalar_lea.vmem %s1, 1032
  %31 = vst [vmem:[%s30] sm:$0xff] %v21
  %s32 = scalar_lea.vmem %s1, 1288
  %33 = vst [vmem:[%s32] sm:$0xff] %v21
  %s34 = scalar_lea.vmem %s1, 1544
  %35 = vst [vmem:[%s34] sm:$0xff] %v21
  %s36 = scalar_lea.vmem %s1, 1800
  %37 = vst [vmem:[%s36] sm:$0xff] %v21
  %s38 = scalar_lea.vmem %s0, 2
  %v39 = vld [vmem:[%s38] ss:$0 sm:$0xff]
  %s40 = scalar_lea.vmem %s1, 16
  %41 = vst [vmem:[%s40] sm:$0xff] %v39
  %s42 = scalar_lea.vmem %s1, 272
  %43 = vst [vmem:[%s42] sm:$0xff] %v39
  %s44 = scalar_lea.vmem %s1, 528
  %45 = vst [vmem:[%s44] sm:$0xff] %v39
  %s46 = scalar_lea.vmem %s1, 784
  %47 = vst [vmem:[%s46] sm:$0xff] %v39
  %s48 = scalar_lea.vmem %s1, 1040
  %49 = vst [vmem:[%s48] sm:$0xff] %v39
  %s50 = scalar_lea.vmem %s1, 1296
  %51 = vst [vmem:[%s50] sm:$0xff] %v39
  %s52 = scalar_lea.vmem %s1, 1552
  %53 = vst [vmem:[%s52] sm:$0xff] %v39
  %s54 = scalar_lea.vmem %s1, 1808
  %55 = vst [vmem:[%s54] sm:$0xff] %v39
  %s56 = scalar_lea.vmem %s0, 3
  %v57 = vld [vmem:[%s56] ss:$0 sm:$0xff]
  %s58 = scalar_lea.vmem %s1, 24
  %59 = vst [vmem:[%s58] sm:$0xff] %v57
  %s60 = scalar_lea.vmem %s1, 280
  %61 = vst [vmem:[%s60] sm:$0xff] %v57
  %s62 = scalar_lea.vmem %s1, 536
  %63 = vst [vmem:[%s62] sm:$0xff] %v57
  %s64 = scalar_lea.vmem %s1, 792
  %65 = vst [vmem:[%s64] sm:$0xff] %v57
  %s66 = scalar_lea.vmem %s1, 1048
  %67 = vst [vmem:[%s66] sm:$0xff] %v57
  %s68 = scalar_lea.vmem %s1, 1304
  %69 = vst [vmem:[%s68] sm:$0xff] %v57
  %s70 = scalar_lea.vmem %s1, 1560
  %71 = vst [vmem:[%s70] sm:$0xff] %v57
  %s72 = scalar_lea.vmem %s1, 1816
  %73 = vst [vmem:[%s72] sm:$0xff] %v57
  %s74 = scalar_lea.vmem %s0, 4
  %v75 = vld [vmem:[%s74] ss:$0 sm:$0xff]
  %s76 = scalar_lea.vmem %s1, 32
  %77 = vst [vmem:[%s76] sm:$0xff] %v75
  %s78 = scalar_lea.vmem %s1, 288
  %79 = vst [vmem:[%s78] sm:$0xff] %v75
  %s80 = scalar_lea.vmem %s1, 544
  %81 = vst [vmem:[%s80] sm:$0xff] %v75
  %s82 = scalar_lea.vmem %s1, 800
  %83 = vst [vmem:[%s82] sm:$0xff] %v75
  %s84 = scalar_lea.vmem %s1, 1056
  %85 = vst [vmem:[%s84] sm:$0xff] %v75
  %s86 = scalar_lea.vmem %s1, 1312
  %87 = vst [vmem:[%s86] sm:$0xff] %v75
  %s88 = scalar_lea.vmem %s1, 1568
  %89 = vst [vmem:[%s88] sm:$0xff] %v75
  %s90 = scalar_lea.vmem %s1, 1824
  %91 = vst [vmem:[%s90] sm:$0xff] %v75
  %s92 = scalar_lea.vmem %s0, 5
  %v93 = vld [vmem:[%s92] ss:$0 sm:$0xff]
  %s94 = scalar_lea.vmem %s1, 40
  %95 = vst [vmem:[%s94] sm:$0xff] %v93
  %s96 = scalar_lea.vmem %s1, 296
  %97 = vst [vmem:[%s96] sm:$0xff] %v93
  %s98 = scalar_lea.vmem %s1, 552
  %99 = vst [vmem:[%s98] sm:$0xff] %v93
  %s100 = scalar_lea.vmem %s1, 808
  %101 = vst [vmem:[%s100] sm:$0xff] %v93
  %s102 = scalar_lea.vmem %s1, 1064
  %103 = vst [vmem:[%s102] sm:$0xff] %v93
  %s104 = scalar_lea.vmem %s1, 1320
  %105 = vst [vmem:[%s104] sm:$0xff] %v93
  %s106 = scalar_lea.vmem %s1, 1576
  %107 = vst [vmem:[%s106] sm:$0xff] %v93
  %s108 = scalar_lea.vmem %s1, 1832
  %109 = vst [vmem:[%s108] sm:$0xff] %v93
  %s110 = scalar_lea.vmem %s0, 6
  %v111 = vld [vmem:[%s110] ss:$0 sm:$0xff]
  %s112 = scalar_lea.vmem %s1, 48
  %113 = vst [vmem:[%s112] sm:$0xff] %v111
  %s114 = scalar_lea.vmem %s1, 304
  %115 = vst [vmem:[%s114] sm:$0xff] %v111
  %s116 = scalar_lea.vmem %s1, 560
  %117 = vst [vmem:[%s116] sm:$0xff] %v111
  %s118 = scalar_lea.vmem %s1, 816
  %119 = vst [vmem:[%s118] sm:$0xff] %v111
  %s120 = scalar_lea.vmem %s1, 1072
  %121 = vst [vmem:[%s120] sm:$0xff] %v111
  %s122 = scalar_lea.vmem %s1, 1328
  %123 = vst [vmem:[%s122] sm:$0xff] %v111
  %s124 = scalar_lea.vmem %s1, 1584
  %125 = vst [vmem:[%s124] sm:$0xff] %v111
  %s126 = scalar_lea.vmem %s1, 1840
  %127 = vst [vmem:[%s126] sm:$0xff] %v111
  %s128 = scalar_lea.vmem %s0, 7
  %v129 = vld [vmem:[%s128] ss:$0 sm:$0xff]
  %s130 = scalar_lea.vmem %s1, 56
  %131 = vst [vmem:[%s130] sm:$0xff] %v129
  %s132 = scalar_lea.vmem %s1, 312
  %133 = vst [vmem:[%s132] sm:$0xff] %v129
  %s134 = scalar_lea.vmem %s1, 568
  %135 = vst [vmem:[%s134] sm:$0xff] %v129
  %s136 = scalar_lea.vmem %s1, 824
  %137 = vst [vmem:[%s136] sm:$0xff] %v129
  %s138 = scalar_lea.vmem %s1, 1080
  %139 = vst [vmem:[%s138] sm:$0xff] %v129
  %s140 = scalar_lea.vmem %s1, 1336
  %141 = vst [vmem:[%s140] sm:$0xff] %v129
  %s142 = scalar_lea.vmem %s1, 1592
  %143 = vst [vmem:[%s142] sm:$0xff] %v129
  %s144 = scalar_lea.vmem %s1, 1848
  %145 = vst [vmem:[%s144] sm:$0xff] %v129
  %s146 = scalar_lea.vmem %s0, 8
  %v147 = vld [vmem:[%s146] ss:$0 sm:$0xff]
  %s148 = scalar_lea.vmem %s1, 64
  %149 = vst [vmem:[%s148] sm:$0xff] %v147
  %s150 = scalar_lea.vmem %s1, 320
  %151 = vst [vmem:[%s150] sm:$0xff] %v147
  %s152 = scalar_lea.vmem %s1, 576
  %153 = vst [vmem:[%s152] sm:$0xff] %v147
  %s154 = scalar_lea.vmem %s1, 832
  %155 = vst [vmem:[%s154] sm:$0xff] %v147
  %s156 = scalar_lea.vmem %s1, 1088
  %157 = vst [vmem:[%s156] sm:$0xff] %v147
  %s158 = scalar_lea.vmem %s1, 1344
  %159 = vst [vmem:[%s158] sm:$0xff] %v147
  %s160 = scalar_lea.vmem %s1, 1600
  %161 = vst [vmem:[%s160] sm:$0xff] %v147
  %s162 = scalar_lea.vmem %s1, 1856
  %163 = vst [vmem:[%s162] sm:$0xff] %v147
  %s164 = scalar_lea.vmem %s0, 8
  %s165 = scalar_lea.vmem %s164, 1
  %v166 = vld [vmem:[%s165] ss:$0 sm:$0xff]
  %s167 = scalar_lea.vmem %s1, 72
  %168 = vst [vmem:[%s167] sm:$0xff] %v166
  %s169 = scalar_lea.vmem %s1, 328
  %170 = vst [vmem:[%s169] sm:$0xff] %v166
  %s171 = scalar_lea.vmem %s1, 584
  %172 = vst [vmem:[%s171] sm:$0xff] %v166
  %s173 = scalar_lea.vmem %s1, 840
  %174 = vst [vmem:[%s173] sm:$0xff] %v166
  %s175 = scalar_lea.vmem %s1, 1096
  %176 = vst [vmem:[%s175] sm:$0xff] %v166
  %s177 = scalar_lea.vmem %s1, 1352
  %178 = vst [vmem:[%s177] sm:$0xff] %v166
  %s179 = scalar_lea.vmem %s1, 1608
  %180 = vst [vmem:[%s179] sm:$0xff] %v166
  %s181 = scalar_lea.vmem %s1, 1864
  %182 = vst [vmem:[%s181] sm:$0xff] %v166
  %s183 = scalar_lea.vmem %s0, 8
  %s184 = scalar_lea.vmem %s183, 2
  %v185 = vld [vmem:[%s184] ss:$0 sm:$0xff]
  %s186 = scalar_lea.vmem %s1, 80
  %187 = vst [vmem:[%s186] sm:$0xff] %v185
  %s188 = scalar_lea.vmem %s1, 336
  %189 = vst [vmem:[%s188] sm:$0xff] %v185
  %s190 = scalar_lea.vmem %s1, 592
  %191 = vst [vmem:[%s190] sm:$0xff] %v185
  %s192 = scalar_lea.vmem %s1, 848
  %193 = vst [vmem:[%s192] sm:$0xff] %v185
  %s194 = scalar_lea.vmem %s1, 1104
  %195 = vst [vmem:[%s194] sm:$0xff] %v185
  %s196 = scalar_lea.vmem %s1, 1360
  %197 = vst [vmem:[%s196] sm:$0xff] %v185
  %s198 = scalar_lea.vmem %s1, 1616
  %199 = vst [vmem:[%s198] sm:$0xff] %v185
  %s200 = scalar_lea.vmem %s1, 1872
  %201 = vst [vmem:[%s200] sm:$0xff] %v185
  %s202 = scalar_lea.vmem %s0, 8
  %s203 = scalar_lea.vmem %s202, 3
  %v204 = vld [vmem:[%s203] ss:$0 sm:$0xff]
  %s205 = scalar_lea.vmem %s1, 88
  %206 = vst [vmem:[%s205] sm:$0xff] %v204
  %s207 = scalar_lea.vmem %s1, 344
  %208 = vst [vmem:[%s207] sm:$0xff] %v204
  %s209 = scalar_lea.vmem %s1, 600
  %210 = vst [vmem:[%s209] sm:$0xff] %v204
  %s211 = scalar_lea.vmem %s1, 856
  %212 = vst [vmem:[%s211] sm:$0xff] %v204
  %s213 = scalar_lea.vmem %s1, 1112
  %214 = vst [vmem:[%s213] sm:$0xff] %v204
  %s215 = scalar_lea.vmem %s1, 1368
  %216 = vst [vmem:[%s215] sm:$0xff] %v204
  %s217 = scalar_lea.vmem %s1, 1624
  %218 = vst [vmem:[%s217] sm:$0xff] %v204
  %s219 = scalar_lea.vmem %s1, 1880
  %220 = vst [vmem:[%s219] sm:$0xff] %v204
  %s221 = scalar_lea.vmem %s0, 8
  %s222 = scalar_lea.vmem %s221, 4
  %v223 = vld [vmem:[%s222] ss:$0 sm:$0xff]
  %s224 = scalar_lea.vmem %s1, 96
  %225 = vst [vmem:[%s224] sm:$0xff] %v223
  %s226 = scalar_lea.vmem %s1, 352
  %227 = vst [vmem:[%s226] sm:$0xff] %v223
  %s228 = scalar_lea.vmem %s1, 608
  %229 = vst [vmem:[%s228] sm:$0xff] %v223
  %s230 = scalar_lea.vmem %s1, 864
  %231 = vst [vmem:[%s230] sm:$0xff] %v223
  %s232 = scalar_lea.vmem %s1, 1120
  %233 = vst [vmem:[%s232] sm:$0xff] %v223
  %s234 = scalar_lea.vmem %s1, 1376
  %235 = vst [vmem:[%s234] sm:$0xff] %v223
  %s236 = scalar_lea.vmem %s1, 1632
  %237 = vst [vmem:[%s236] sm:$0xff] %v223
  %s238 = scalar_lea.vmem %s1, 1888
  %239 = vst [vmem:[%s238] sm:$0xff] %v223
  %s240 = scalar_lea.vmem %s0, 8
  %s241 = scalar_lea.vmem %s240, 5
  %v242 = vld [vmem:[%s241] ss:$0 sm:$0xff]
  %s243 = scalar_lea.vmem %s1, 104
  %244 = vst [vmem:[%s243] sm:$0xff] %v242
  %s245 = scalar_lea.vmem %s1, 360
  %246 = vst [vmem:[%s245] sm:$0xff] %v242
  %s247 = scalar_lea.vmem %s1, 616
  %248 = vst [vmem:[%s247] sm:$0xff] %v242
  %s249 = scalar_lea.vmem %s1, 872
  %250 = vst [vmem:[%s249] sm:$0xff] %v242
  %s251 = scalar_lea.vmem %s1, 1128
  %252 = vst [vmem:[%s251] sm:$0xff] %v242
  %s253 = scalar_lea.vmem %s1, 1384
  %254 = vst [vmem:[%s253] sm:$0xff] %v242
  %s255 = scalar_lea.vmem %s1, 1640
  %256 = vst [vmem:[%s255] sm:$0xff] %v242
  %s257 = scalar_lea.vmem %s1, 1896
  %258 = vst [vmem:[%s257] sm:$0xff] %v242
  %s259 = scalar_lea.vmem %s0, 8
  %s260 = scalar_lea.vmem %s259, 6
  %v261 = vld [vmem:[%s260] ss:$0 sm:$0xff]
  %s262 = scalar_lea.vmem %s1, 112
  %263 = vst [vmem:[%s262] sm:$0xff] %v261
  %s264 = scalar_lea.vmem %s1, 368
  %265 = vst [vmem:[%s264] sm:$0xff] %v261
  %s266 = scalar_lea.vmem %s1, 624
  %267 = vst [vmem:[%s266] sm:$0xff] %v261
  %s268 = scalar_lea.vmem %s1, 880
  %269 = vst [vmem:[%s268] sm:$0xff] %v261
  %s270 = scalar_lea.vmem %s1, 1136
  %271 = vst [vmem:[%s270] sm:$0xff] %v261
  %s272 = scalar_lea.vmem %s1, 1392
  %273 = vst [vmem:[%s272] sm:$0xff] %v261
  %s274 = scalar_lea.vmem %s1, 1648
  %275 = vst [vmem:[%s274] sm:$0xff] %v261
  %s276 = scalar_lea.vmem %s1, 1904
  %277 = vst [vmem:[%s276] sm:$0xff] %v261
  %s278 = scalar_lea.vmem %s0, 8
  %s279 = scalar_lea.vmem %s278, 7
  %v280 = vld [vmem:[%s279] ss:$0 sm:$0xff]
  %s281 = scalar_lea.vmem %s1, 120
  %282 = vst [vmem:[%s281] sm:$0xff] %v280
  %s283 = scalar_lea.vmem %s1, 376
  %284 = vst [vmem:[%s283] sm:$0xff] %v280
  %s285 = scalar_lea.vmem %s1, 632
  %286 = vst [vmem:[%s285] sm:$0xff] %v280
  %s287 = scalar_lea.vmem %s1, 888
  %288 = vst [vmem:[%s287] sm:$0xff] %v280
  %s289 = scalar_lea.vmem %s1, 1144
  %290 = vst [vmem:[%s289] sm:$0xff] %v280
  %s291 = scalar_lea.vmem %s1, 1400
  %292 = vst [vmem:[%s291] sm:$0xff] %v280
  %s293 = scalar_lea.vmem %s1, 1656
  %294 = vst [vmem:[%s293] sm:$0xff] %v280
  %s295 = scalar_lea.vmem %s1, 1912
  %296 = vst [vmem:[%s295] sm:$0xff] %v280
  %s297 = scalar_lea.vmem %s0, 16
  %v298 = vld [vmem:[%s297] ss:$0 sm:$0xff]
  %s299 = scalar_lea.vmem %s1, 128
  %300 = vst [vmem:[%s299] sm:$0xff] %v298
  %s301 = scalar_lea.vmem %s1, 384
  %302 = vst [vmem:[%s301] sm:$0xff] %v298
  %s303 = scalar_lea.vmem %s1, 640
  %304 = vst [vmem:[%s303] sm:$0xff] %v298
  %s305 = scalar_lea.vmem %s1, 896
  %306 = vst [vmem:[%s305] sm:$0xff] %v298
  %s307 = scalar_lea.vmem %s1, 1152
  %308 = vst [vmem:[%s307] sm:$0xff] %v298
  %s309 = scalar_lea.vmem %s1, 1408
  %310 = vst [vmem:[%s309] sm:$0xff] %v298
  %s311 = scalar_lea.vmem %s1, 1664
  %312 = vst [vmem:[%s311] sm:$0xff] %v298
  %s313 = scalar_lea.vmem %s1, 1920
  %314 = vst [vmem:[%s313] sm:$0xff] %v298
  %s315 = scalar_lea.vmem %s0, 16
  %s316 = scalar_lea.vmem %s315, 1
  %v317 = vld [vmem:[%s316] ss:$0 sm:$0xff]
  %s318 = scalar_lea.vmem %s1, 136
  %319 = vst [vmem:[%s318] sm:$0xff] %v317
  %s320 = scalar_lea.vmem %s1, 392
  %321 = vst [vmem:[%s320] sm:$0xff] %v317
  %s322 = scalar_lea.vmem %s1, 648
  %323 = vst [vmem:[%s322] sm:$0xff] %v317
  %s324 = scalar_lea.vmem %s1, 904
  %325 = vst [vmem:[%s324] sm:$0xff] %v317
  %s326 = scalar_lea.vmem %s1, 1160
  %327 = vst [vmem:[%s326] sm:$0xff] %v317
  %s328 = scalar_lea.vmem %s1, 1416
  %329 = vst [vmem:[%s328] sm:$0xff] %v317
  %s330 = scalar_lea.vmem %s1, 1672
  %331 = vst [vmem:[%s330] sm:$0xff] %v317
  %s332 = scalar_lea.vmem %s1, 1928
  %333 = vst [vmem:[%s332] sm:$0xff] %v317
  %s334 = scalar_lea.vmem %s0, 16
  %s335 = scalar_lea.vmem %s334, 2
  %v336 = vld [vmem:[%s335] ss:$0 sm:$0xff]
  %s337 = scalar_lea.vmem %s1, 144
  %338 = vst [vmem:[%s337] sm:$0xff] %v336
  %s339 = scalar_lea.vmem %s1, 400
  %340 = vst [vmem:[%s339] sm:$0xff] %v336
  %s341 = scalar_lea.vmem %s1, 656
  %342 = vst [vmem:[%s341] sm:$0xff] %v336
  %s343 = scalar_lea.vmem %s1, 912
  %344 = vst [vmem:[%s343] sm:$0xff] %v336
  %s345 = scalar_lea.vmem %s1, 1168
  %346 = vst [vmem:[%s345] sm:$0xff] %v336
  %s347 = scalar_lea.vmem %s1, 1424
  %348 = vst [vmem:[%s347] sm:$0xff] %v336
  %s349 = scalar_lea.vmem %s1, 1680
  %350 = vst [vmem:[%s349] sm:$0xff] %v336
  %s351 = scalar_lea.vmem %s1, 1936
  %352 = vst [vmem:[%s351] sm:$0xff] %v336
  %s353 = scalar_lea.vmem %s0, 16
  %s354 = scalar_lea.vmem %s353, 3
  %v355 = vld [vmem:[%s354] ss:$0 sm:$0xff]
  %s356 = scalar_lea.vmem %s1, 152
  %357 = vst [vmem:[%s356] sm:$0xff] %v355
  %s358 = scalar_lea.vmem %s1, 408
  %359 = vst [vmem:[%s358] sm:$0xff] %v355
  %s360 = scalar_lea.vmem %s1, 664
  %361 = vst [vmem:[%s360] sm:$0xff] %v355
  %s362 = scalar_lea.vmem %s1, 920
  %363 = vst [vmem:[%s362] sm:$0xff] %v355
  %s364 = scalar_lea.vmem %s1, 1176
  %365 = vst [vmem:[%s364] sm:$0xff] %v355
  %s366 = scalar_lea.vmem %s1, 1432
  %367 = vst [vmem:[%s366] sm:$0xff] %v355
  %s368 = scalar_lea.vmem %s1, 1688
  %369 = vst [vmem:[%s368] sm:$0xff] %v355
  %s370 = scalar_lea.vmem %s1, 1944
  %371 = vst [vmem:[%s370] sm:$0xff] %v355
  %s372 = scalar_lea.vmem %s0, 16
  %s373 = scalar_lea.vmem %s372, 4
  %v374 = vld [vmem:[%s373] ss:$0 sm:$0xff]
  %s375 = scalar_lea.vmem %s1, 160
  %376 = vst [vmem:[%s375] sm:$0xff] %v374
  %s377 = scalar_lea.vmem %s1, 416
  %378 = vst [vmem:[%s377] sm:$0xff] %v374
  %s379 = scalar_lea.vmem %s1, 672
  %380 = vst [vmem:[%s379] sm:$0xff] %v374
  %s381 = scalar_lea.vmem %s1, 928
  %382 = vst [vmem:[%s381] sm:$0xff] %v374
  %s383 = scalar_lea.vmem %s1, 1184
  %384 = vst [vmem:[%s383] sm:$0xff] %v374
  %s385 = scalar_lea.vmem %s1, 1440
  %386 = vst [vmem:[%s385] sm:$0xff] %v374
  %s387 = scalar_lea.vmem %s1, 1696
  %388 = vst [vmem:[%s387] sm:$0xff] %v374
  %s389 = scalar_lea.vmem %s1, 1952
  %390 = vst [vmem:[%s389] sm:$0xff] %v374
  %s391 = scalar_lea.vmem %s0, 16
  %s392 = scalar_lea.vmem %s391, 5
  %v393 = vld [vmem:[%s392] ss:$0 sm:$0xff]
  %s394 = scalar_lea.vmem %s1, 168
  %395 = vst [vmem:[%s394] sm:$0xff] %v393
  %s396 = scalar_lea.vmem %s1, 424
  %397 = vst [vmem:[%s396] sm:$0xff] %v393
  %s398 = scalar_lea.vmem %s1, 680
  %399 = vst [vmem:[%s398] sm:$0xff] %v393
  %s400 = scalar_lea.vmem %s1, 936
  %401 = vst [vmem:[%s400] sm:$0xff] %v393
  %s402 = scalar_lea.vmem %s1, 1192
  %403 = vst [vmem:[%s402] sm:$0xff] %v393
  %s404 = scalar_lea.vmem %s1, 1448
  %405 = vst [vmem:[%s404] sm:$0xff] %v393
  %s406 = scalar_lea.vmem %s1, 1704
  %407 = vst [vmem:[%s406] sm:$0xff] %v393
  %s408 = scalar_lea.vmem %s1, 1960
  %409 = vst [vmem:[%s408] sm:$0xff] %v393
  %s410 = scalar_lea.vmem %s0, 16
  %s411 = scalar_lea.vmem %s410, 6
  %v412 = vld [vmem:[%s411] ss:$0 sm:$0xff]
  %s413 = scalar_lea.vmem %s1, 176
  %414 = vst [vmem:[%s413] sm:$0xff] %v412
  %s415 = scalar_lea.vmem %s1, 432
  %416 = vst [vmem:[%s415] sm:$0xff] %v412
  %s417 = scalar_lea.vmem %s1, 688
  %418 = vst [vmem:[%s417] sm:$0xff] %v412
  %s419 = scalar_lea.vmem %s1, 944
  %420 = vst [vmem:[%s419] sm:$0xff] %v412
  %s421 = scalar_lea.vmem %s1, 1200
  %422 = vst [vmem:[%s421] sm:$0xff] %v412
  %s423 = scalar_lea.vmem %s1, 1456
  %424 = vst [vmem:[%s423] sm:$0xff] %v412
  %s425 = scalar_lea.vmem %s1, 1712
  %426 = vst [vmem:[%s425] sm:$0xff] %v412
  %s427 = scalar_lea.vmem %s1, 1968
  %428 = vst [vmem:[%s427] sm:$0xff] %v412
  %s429 = scalar_lea.vmem %s0, 16
  %s430 = scalar_lea.vmem %s429, 7
  %v431 = vld [vmem:[%s430] ss:$0 sm:$0xff]
  %s432 = scalar_lea.vmem %s1, 184
  %433 = vst [vmem:[%s432] sm:$0xff] %v431
  %s434 = scalar_lea.vmem %s1, 440
  %435 = vst [vmem:[%s434] sm:$0xff] %v431
  %s436 = scalar_lea.vmem %s1, 696
  %437 = vst [vmem:[%s436] sm:$0xff] %v431
  %s438 = scalar_lea.vmem %s1, 952
  %439 = vst [vmem:[%s438] sm:$0xff] %v431
  %s440 = scalar_lea.vmem %s1, 1208
  %441 = vst [vmem:[%s440] sm:$0xff] %v431
  %s442 = scalar_lea.vmem %s1, 1464
  %443 = vst [vmem:[%s442] sm:$0xff] %v431
  %s444 = scalar_lea.vmem %s1, 1720
  %445 = vst [vmem:[%s444] sm:$0xff] %v431
  %s446 = scalar_lea.vmem %s1, 1976
  %447 = vst [vmem:[%s446] sm:$0xff] %v431
  %s448 = scalar_lea.vmem %s0, 24
  %v449 = vld [vmem:[%s448] ss:$0 sm:$0xff]
  %s450 = scalar_lea.vmem %s1, 192
  %451 = vst [vmem:[%s450] sm:$0xff] %v449
  %s452 = scalar_lea.vmem %s1, 448
  %453 = vst [vmem:[%s452] sm:$0xff] %v449
  %s454 = scalar_lea.vmem %s1, 704
  %455 = vst [vmem:[%s454] sm:$0xff] %v449
  %s456 = scalar_lea.vmem %s1, 960
  %457 = vst [vmem:[%s456] sm:$0xff] %v449
  %s458 = scalar_lea.vmem %s1, 1216
  %459 = vst [vmem:[%s458] sm:$0xff] %v449
  %s460 = scalar_lea.vmem %s1, 1472
  %461 = vst [vmem:[%s460] sm:$0xff] %v449
  %s462 = scalar_lea.vmem %s1, 1728
  %463 = vst [vmem:[%s462] sm:$0xff] %v449
  %s464 = scalar_lea.vmem %s1, 1984
  %465 = vst [vmem:[%s464] sm:$0xff] %v449
  %s466 = scalar_lea.vmem %s0, 24
  %s467 = scalar_lea.vmem %s466, 1
  %v468 = vld [vmem:[%s467] ss:$0 sm:$0xff]
  %s469 = scalar_lea.vmem %s1, 200
  %470 = vst [vmem:[%s469] sm:$0xff] %v468
  %s471 = scalar_lea.vmem %s1, 456
  %472 = vst [vmem:[%s471] sm:$0xff] %v468
  %s473 = scalar_lea.vmem %s1, 712
  %474 = vst [vmem:[%s473] sm:$0xff] %v468
  %s475 = scalar_lea.vmem %s1, 968
  %476 = vst [vmem:[%s475] sm:$0xff] %v468
  %s477 = scalar_lea.vmem %s1, 1224
  %478 = vst [vmem:[%s477] sm:$0xff] %v468
  %s479 = scalar_lea.vmem %s1, 1480
  %480 = vst [vmem:[%s479] sm:$0xff] %v468
  %s481 = scalar_lea.vmem %s1, 1736
  %482 = vst [vmem:[%s481] sm:$0xff] %v468
  %s483 = scalar_lea.vmem %s1, 1992
  %484 = vst [vmem:[%s483] sm:$0xff] %v468
  %s485 = scalar_lea.vmem %s0, 24
  %s486 = scalar_lea.vmem %s485, 2
  %v487 = vld [vmem:[%s486] ss:$0 sm:$0xff]
  %s488 = scalar_lea.vmem %s1, 208
  %489 = vst [vmem:[%s488] sm:$0xff] %v487
  %s490 = scalar_lea.vmem %s1, 464
  %491 = vst [vmem:[%s490] sm:$0xff] %v487
  %s492 = scalar_lea.vmem %s1, 720
  %493 = vst [vmem:[%s492] sm:$0xff] %v487
  %s494 = scalar_lea.vmem %s1, 976
  %495 = vst [vmem:[%s494] sm:$0xff] %v487
  %s496 = scalar_lea.vmem %s1, 1232
  %497 = vst [vmem:[%s496] sm:$0xff] %v487
  %s498 = scalar_lea.vmem %s1, 1488
  %499 = vst [vmem:[%s498] sm:$0xff] %v487
  %s500 = scalar_lea.vmem %s1, 1744
  %501 = vst [vmem:[%s500] sm:$0xff] %v487
  %s502 = scalar_lea.vmem %s1, 2000
  %503 = vst [vmem:[%s502] sm:$0xff] %v487
  %s504 = scalar_lea.vmem %s0, 24
  %s505 = scalar_lea.vmem %s504, 3
  %v506 = vld [vmem:[%s505] ss:$0 sm:$0xff]
  %s507 = scalar_lea.vmem %s1, 216
  %508 = vst [vmem:[%s507] sm:$0xff] %v506
  %s509 = scalar_lea.vmem %s1, 472
  %510 = vst [vmem:[%s509] sm:$0xff] %v506
  %s511 = scalar_lea.vmem %s1, 728
  %512 = vst [vmem:[%s511] sm:$0xff] %v506
  %s513 = scalar_lea.vmem %s1, 984
  %514 = vst [vmem:[%s513] sm:$0xff] %v506
  %s515 = scalar_lea.vmem %s1, 1240
  %516 = vst [vmem:[%s515] sm:$0xff] %v506
  %s517 = scalar_lea.vmem %s1, 1496
  %518 = vst [vmem:[%s517] sm:$0xff] %v506
  %s519 = scalar_lea.vmem %s1, 1752
  %520 = vst [vmem:[%s519] sm:$0xff] %v506
  %s521 = scalar_lea.vmem %s1, 2008
  %522 = vst [vmem:[%s521] sm:$0xff] %v506
  %s523 = scalar_lea.vmem %s0, 24
  %s524 = scalar_lea.vmem %s523, 4
  %v525 = vld [vmem:[%s524] ss:$0 sm:$0xff]
  %s526 = scalar_lea.vmem %s1, 224
  %527 = vst [vmem:[%s526] sm:$0xff] %v525
  %s528 = scalar_lea.vmem %s1, 480
  %529 = vst [vmem:[%s528] sm:$0xff] %v525
  %s530 = scalar_lea.vmem %s1, 736
  %531 = vst [vmem:[%s530] sm:$0xff] %v525
  %s532 = scalar_lea.vmem %s1, 992
  %533 = vst [vmem:[%s532] sm:$0xff] %v525
  %s534 = scalar_lea.vmem %s1, 1248
  %535 = vst [vmem:[%s534] sm:$0xff] %v525
  %s536 = scalar_lea.vmem %s1, 1504
  %537 = vst [vmem:[%s536] sm:$0xff] %v525
  %s538 = scalar_lea.vmem %s1, 1760
  %539 = vst [vmem:[%s538] sm:$0xff] %v525
  %s540 = scalar_lea.vmem %s1, 2016
  %541 = vst [vmem:[%s540] sm:$0xff] %v525
  %s542 = scalar_lea.vmem %s0, 24
  %s543 = scalar_lea.vmem %s542, 5
  %v544 = vld [vmem:[%s543] ss:$0 sm:$0xff]
  %s545 = scalar_lea.vmem %s1, 232
  %546 = vst [vmem:[%s545] sm:$0xff] %v544
  %s547 = scalar_lea.vmem %s1, 488
  %548 = vst [vmem:[%s547] sm:$0xff] %v544
  %s549 = scalar_lea.vmem %s1, 744
  %550 = vst [vmem:[%s549] sm:$0xff] %v544
  %s551 = scalar_lea.vmem %s1, 1000
  %552 = vst [vmem:[%s551] sm:$0xff] %v544
  %s553 = scalar_lea.vmem %s1, 1256
  %554 = vst [vmem:[%s553] sm:$0xff] %v544
  %s555 = scalar_lea.vmem %s1, 1512
  %556 = vst [vmem:[%s555] sm:$0xff] %v544
  %s557 = scalar_lea.vmem %s1, 1768
  %558 = vst [vmem:[%s557] sm:$0xff] %v544
  %s559 = scalar_lea.vmem %s1, 2024
  %560 = vst [vmem:[%s559] sm:$0xff] %v544
  %s561 = scalar_lea.vmem %s0, 24
  %s562 = scalar_lea.vmem %s561, 6
  %v563 = vld [vmem:[%s562] ss:$0 sm:$0xff]
  %s564 = scalar_lea.vmem %s1, 240
  %565 = vst [vmem:[%s564] sm:$0xff] %v563
  %s566 = scalar_lea.vmem %s1, 496
  %567 = vst [vmem:[%s566] sm:$0xff] %v563
  %s568 = scalar_lea.vmem %s1, 752
  %569 = vst [vmem:[%s568] sm:$0xff] %v563
  %s570 = scalar_lea.vmem %s1, 1008
  %571 = vst [vmem:[%s570] sm:$0xff] %v563
  %s572 = scalar_lea.vmem %s1, 1264
  %573 = vst [vmem:[%s572] sm:$0xff] %v563
  %s574 = scalar_lea.vmem %s1, 1520
  %575 = vst [vmem:[%s574] sm:$0xff] %v563
  %s576 = scalar_lea.vmem %s1, 1776
  %577 = vst [vmem:[%s576] sm:$0xff] %v563
  %s578 = scalar_lea.vmem %s1, 2032
  %579 = vst [vmem:[%s578] sm:$0xff] %v563
  %s580 = scalar_lea.vmem %s0, 24
  %s581 = scalar_lea.vmem %s580, 7
  %v582 = vld [vmem:[%s581] ss:$0 sm:$0xff]
  %s583 = scalar_lea.vmem %s1, 248
  %584 = vst [vmem:[%s583] sm:$0xff] %v582
  %s585 = scalar_lea.vmem %s1, 504
  %586 = vst [vmem:[%s585] sm:$0xff] %v582
  %s587 = scalar_lea.vmem %s1, 760
  %588 = vst [vmem:[%s587] sm:$0xff] %v582
  %s589 = scalar_lea.vmem %s1, 1016
  %590 = vst [vmem:[%s589] sm:$0xff] %v582
  %s591 = scalar_lea.vmem %s1, 1272
  %592 = vst [vmem:[%s591] sm:$0xff] %v582
  %s593 = scalar_lea.vmem %s1, 1528
  %594 = vst [vmem:[%s593] sm:$0xff] %v582
  %s595 = scalar_lea.vmem %s1, 1784
  %596 = vst [vmem:[%s595] sm:$0xff] %v582
  %s597 = scalar_lea.vmem %s1, 2040
  %598 = vst [vmem:[%s597] sm:$0xff] %v582

// kernel: tile.29
$region0: #{tile.29}
  %s0 = inlined_call_operand.vmem [shape: f32[8,32,8,32], index: 0, kind: input, shape index: {}]
  %s1 = inlined_call_operand.vmem [shape: f32[256,256], index: 1, kind: output, shape index: {}]
  %v2 = vld [vmem:[%s0] ss:$4 sm:$0xff]
  %vm3 = vcmask 261120
  %4 = vst.msk [vmem:[%s1] ss:$8 sm:$0x3] %vm3, %v2
  %s5 = scalar_lea.vmem %s1, 4294967281
  %6 = vst.msk [vmem:[%s5] ss:$8 sm:$0xc] %vm3, %v2
  %s7 = scalar_lea.vmem %s1, 4294967266
  %8 = vst.msk [vmem:[%s7] ss:$8 sm:$0x30] %vm3, %v2
  %s9 = scalar_lea.vmem %s1, 4294967251
  %10 = vst.msk [vmem:[%s9] ss:$8 sm:$0xc0] %vm3, %v2
  %s11 = scalar_lea.vmem %s0, 32
  %v12 = vld [vmem:[%s11] ss:$4 sm:$0xff]
  %vm13 = vcmask 261120
  %s14 = scalar_lea.vmem %s1, 4
  %15 = vst.msk [vmem:[%s14] ss:$8 sm:$0x3] %vm13, %v12
  %s16 = scalar_lea.vmem %s1, 4294967285
  %17 = vst.msk [vmem:[%s16] ss:$8 sm:$0xc] %vm13, %v12
  %s18 = scalar_lea.vmem %s1, 4294967270
  %19 = vst.msk [vmem:[%s18] ss:$8 sm:$0x30] %vm13, %v12
  %s20 = scalar_lea.vmem %s1, 4294967255
  %21 = vst.msk [vmem:[%s20] ss:$8 sm:$0xc0] %vm13, %v12
  %s22 = scalar_lea.vmem %s0, 64
  %v23 = vld [vmem:[%s22] ss:$4 sm:$0xff]
  %vm24 = vcmask 261120
  %s25 = scalar_lea.vmem %s1, 16
  %26 = vst.msk [vmem:[%s25] ss:$8 sm:$0x3] %vm24, %v23
  %s27 = scalar_lea.vmem %s1, 1
  %28 = vst.msk [vmem:[%s27] ss:$8 sm:$0xc] %vm24, %v23
  %s29 = scalar_lea.vmem %s1, 4294967282
  %30 = vst.msk [vmem:[%s29] ss:$8 sm:$0x30] %vm24, %v23
  %s31 = scalar_lea.vmem %s1, 4294967267
  %32 = vst.msk [vmem:[%s31] ss:$8 sm:$0xc0] %vm24, %v23
  %s33 = scalar_lea.vmem %s0, 96
  %v34 = vld [vmem:[%s33] ss:$4 sm:$0xff]
  %vm35 = vcmask 261120
  %s36 = scalar_lea.vmem %s1, 20
  %37 = vst.msk [vmem:[%s36] ss:$8 sm:$0x3] %vm35, %v34
  %s38 = scalar_lea.vmem %s1, 5
  %39 = vst.msk [vmem:[%s38] ss:$8 sm:$0xc] %vm35, %v34
  %s40 = scalar_lea.vmem %s1, 4294967286
  %41 = vst.msk [vmem:[%s40] ss:$8 sm:$0x30] %vm35, %v34
  %s42 = scalar_lea.vmem %s1, 4294967271
  %43 = vst.msk [vmem:[%s42] ss:$8 sm:$0xc0] %vm35, %v34
  %s44 = scalar_lea.vmem %s0, 128
  %v45 = vld [vmem:[%s44] ss:$4 sm:$0xff]
  %vm46 = vcmask 261120
  %s47 = scalar_lea.vmem %s1, 32
  %48 = vst.msk [vmem:[%s47] ss:$8 sm:$0x3] %vm46, %v45
  %s49 = scalar_lea.vmem %s1, 17
  %50 = vst.msk [vmem:[%s49] ss:$8 sm:$0xc] %vm46, %v45
  %s51 = scalar_lea.vmem %s1, 2
  %52 = vst.msk [vmem:[%s51] ss:$8 sm:$0x30] %vm46, %v45
  %s53 = scalar_lea.vmem %s1, 4294967283
  %54 = vst.msk [vmem:[%s53] ss:$8 sm:$0xc0] %vm46, %v45
  %s55 = scalar_lea.vmem %s0, 160
  %v56 = vld [vmem:[%s55] ss:$4 sm:$0xff]
  %vm57 = vcmask 261120
  %s58 = scalar_lea.vmem %s1, 36
  %59 = vst.msk [vmem:[%s58] ss:$8 sm:$0x3] %vm57, %v56
  %s60 = scalar_lea.vmem %s1, 21
  %61 = vst.msk [vmem:[%s60] ss:$8 sm:$0xc] %vm57, %v56
  %s62 = scalar_lea.vmem %s1, 6
  %63 = vst.msk [vmem:[%s62] ss:$8 sm:$0x30] %vm57, %v56
  %s64 = scalar_lea.vmem %s1, 4294967287
  %65 = vst.msk [vmem:[%s64] ss:$8 sm:$0xc0] %vm57, %v56
  %s66 = scalar_lea.vmem %s0, 192
  %v67 = vld [vmem:[%s66] ss:$4 sm:$0xff]
  %vm68 = vcmask 261120
  %s69 = scalar_lea.vmem %s1, 48
  %70 = vst.msk [vmem:[%s69] ss:$8 sm:$0x3] %vm68, %v67
  %s71 = scalar_lea.vmem %s1, 33
  %72 = vst.msk [vmem:[%s71] ss:$8 sm:$0xc] %vm68, %v67
  %s73 = scalar_lea.vmem %s1, 18
  %74 = vst.msk [vmem:[%s73] ss:$8 sm:$0x30] %vm68, %v67
  %s75 = scalar_lea.vmem %s1, 3
  %76 = vst.msk [vmem:[%s75] ss:$8 sm:$0xc0] %vm68, %v67
  %s77 = scalar_lea.vmem %s0, 224
  %v78 = vld [vmem:[%s77] ss:$4 sm:$0xff]
  %vm79 = vcmask 261120
  %s80 = scalar_lea.vmem %s1, 52
  %81 = vst.msk [vmem:[%s80] ss:$8 sm:$0x3] %vm79, %v78
  %s82 = scalar_lea.vmem %s1, 37
  %83 = vst.msk [vmem:[%s82] ss:$8 sm:$0xc] %vm79, %v78
  %s84 = scalar_lea.vmem %s1, 22
  %85 = vst.msk [vmem:[%s84] ss:$8 sm:$0x30] %vm79, %v78
  %s86 = scalar_lea.vmem %s1, 7
  %87 = vst.msk [vmem:[%s86] ss:$8 sm:$0xc0] %vm79, %v78
  %s88 = scalar_lea.vmem %s0, 256
  %v89 = vld [vmem:[%s88] ss:$4 sm:$0xff]
  %vm90 = vcmask 261120
  %s91 = scalar_lea.vmem %s1, 64
  %92 = vst.msk [vmem:[%s91] ss:$8 sm:$0x3] %vm90, %v89
  %s93 = scalar_lea.vmem %s1, 49
  %94 = vst.msk [vmem:[%s93] ss:$8 sm:$0xc] %vm90, %v89
  %s95 = scalar_lea.vmem %s1, 34
  %96 = vst.msk [vmem:[%s95] ss:$8 sm:$0x30] %vm90, %v89
  %s97 = scalar_lea.vmem %s1, 19
  %98 = vst.msk [vmem:[%s97] ss:$8 sm:$0xc0] %vm90, %v89
  %s99 = scalar_lea.vmem %s0, 288
  %v100 = vld [vmem:[%s99] ss:$4 sm:$0xff]
  %vm101 = vcmask 261120
  %s102 = scalar_lea.vmem %s1, 68
  %103 = vst.msk [vmem:[%s102] ss:$8 sm:$0x3] %vm101, %v100
  %s104 = scalar_lea.vmem %s1, 53
  %105 = vst.msk [vmem:[%s104] ss:$8 sm:$0xc] %vm101, %v100
  %s106 = scalar_lea.vmem %s1, 38
  %107 = vst.msk [vmem:[%s106] ss:$8 sm:$0x30] %vm101, %v100
  %s108 = scalar_lea.vmem %s1, 23
  %109 = vst.msk [vmem:[%s108] ss:$8 sm:$0xc0] %vm101, %v100
  %s110 = scalar_lea.vmem %s0, 320
  %v111 = vld [vmem:[%s110] ss:$4 sm:$0xff]
  %vm112 = vcmask 261120
  %s113 = scalar_lea.vmem %s1, 80
  %114 = vst.msk [vmem:[%s113] ss:$8 sm:$0x3] %vm112, %v111
  %s115 = scalar_lea.vmem %s1, 65
  %116 = vst.msk [vmem:[%s115] ss:$8 sm:$0xc] %vm112, %v111
  %s117 = scalar_lea.vmem %s1, 50
  %118 = vst.msk [vmem:[%s117] ss:$8 sm:$0x30] %vm112, %v111
  %s119 = scalar_lea.vmem %s1, 35
  %120 = vst.msk [vmem:[%s119] ss:$8 sm:$0xc0] %vm112, %v111
  %s121 = scalar_lea.vmem %s0, 352
  %v122 = vld [vmem:[%s121] ss:$4 sm:$0xff]
  %vm123 = vcmask 261120
  %s124 = scalar_lea.vmem %s1, 84
  %125 = vst.msk [vmem:[%s124] ss:$8 sm:$0x3] %vm123, %v122
  %s126 = scalar_lea.vmem %s1, 69
  %127 = vst.msk [vmem:[%s126] ss:$8 sm:$0xc] %vm123, %v122
  %s128 = scalar_lea.vmem %s1, 54
  %129 = vst.msk [vmem:[%s128] ss:$8 sm:$0x30] %vm123, %v122
  %s130 = scalar_lea.vmem %s1, 39
  %131 = vst.msk [vmem:[%s130] ss:$8 sm:$0xc0] %vm123, %v122
  %s132 = scalar_lea.vmem %s0, 384
  %v133 = vld [vmem:[%s132] ss:$4 sm:$0xff]
  %vm134 = vcmask 261120
  %s135 = scalar_lea.vmem %s1, 96
  %136 = vst.msk [vmem:[%s135] ss:$8 sm:$0x3] %vm134, %v133
  %s137 = scalar_lea.vmem %s1, 81
  %138 = vst.msk [vmem:[%s137] ss:$8 sm:$0xc] %vm134, %v133
  %s139 = scalar_lea.vmem %s1, 66
  %140 = vst.msk [vmem:[%s139] ss:$8 sm:$0x30] %vm134, %v133
  %s141 = scalar_lea.vmem %s1, 51
  %142 = vst.msk [vmem:[%s141] ss:$8 sm:$0xc0] %vm134, %v133
  %s143 = scalar_lea.vmem %s0, 416
  %v144 = vld [vmem:[%s143] ss:$4 sm:$0xff]
  %vm145 = vcmask 261120
  %s146 = scalar_lea.vmem %s1, 100
  %147 = vst.msk [vmem:[%s146] ss:$8 sm:$0x3] %vm145, %v144
  %s148 = scalar_lea.vmem %s1, 85
  %149 = vst.msk [vmem:[%s148] ss:$8 sm:$0xc] %vm145, %v144
  %s150 = scalar_lea.vmem %s1, 70
  %151 = vst.msk [vmem:[%s150] ss:$8 sm:$0x30] %vm145, %v144
  %s152 = scalar_lea.vmem %s1, 55
  %153 = vst.msk [vmem:[%s152] ss:$8 sm:$0xc0] %vm145, %v144
  %s154 = scalar_lea.vmem %s0, 448
  %v155 = vld [vmem:[%s154] ss:$4 sm:$0xff]
  %vm156 = vcmask 261120
  %s157 = scalar_lea.vmem %s1, 112
  %158 = vst.msk [vmem:[%s157] ss:$8 sm:$0x3] %vm156, %v155
  %s159 = scalar_lea.vmem %s1, 97
  %160 = vst.msk [vmem:[%s159] ss:$8 sm:$0xc] %vm156, %v155
  %s161 = scalar_lea.vmem %s1, 82
  %162 = vst.msk [vmem:[%s161] ss:$8 sm:$0x30] %vm156, %v155
  %s163 = scalar_lea.vmem %s1, 67
  %164 = vst.msk [vmem:[%s163] ss:$8 sm:$0xc0] %vm156, %v155
  %s165 = scalar_lea.vmem %s0, 480
  %v166 = vld [vmem:[%s165] ss:$4 sm:$0xff]
  %vm167 = vcmask 261120
  %s168 = scalar_lea.vmem %s1, 116
  %169 = vst.msk [vmem:[%s168] ss:$8 sm:$0x3] %vm167, %v166
  %s170 = scalar_lea.vmem %s1, 101
  %171 = vst.msk [vmem:[%s170] ss:$8 sm:$0xc] %vm167, %v166
  %s172 = scalar_lea.vmem %s1, 86
  %173 = vst.msk [vmem:[%s172] ss:$8 sm:$0x30] %vm167, %v166
  %s174 = scalar_lea.vmem %s1, 71
  %175 = vst.msk [vmem:[%s174] ss:$8 sm:$0xc0] %vm167, %v166
  %s176 = scalar_lea.vmem %s0, 512
  %v177 = vld [vmem:[%s176] ss:$4 sm:$0xff]
  %vm178 = vcmask 261120
  %s179 = scalar_lea.vmem %s1, 128
  %180 = vst.msk [vmem:[%s179] ss:$8 sm:$0x3] %vm178, %v177
  %s181 = scalar_lea.vmem %s1, 113
  %182 = vst.msk [vmem:[%s181] ss:$8 sm:$0xc] %vm178, %v177
  %s183 = scalar_lea.vmem %s1, 98
  %184 = vst.msk [vmem:[%s183] ss:$8 sm:$0x30] %vm178, %v177
  %s185 = scalar_lea.vmem %s1, 83
  %186 = vst.msk [vmem:[%s185] ss:$8 sm:$0xc0] %vm178, %v177
  %s187 = scalar_lea.vmem %s0, 544
  %v188 = vld [vmem:[%s187] ss:$4 sm:$0xff]
  %vm189 = vcmask 261120
  %s190 = scalar_lea.vmem %s1, 132
  %191 = vst.msk [vmem:[%s190] ss:$8 sm:$0x3] %vm189, %v188
  %s192 = scalar_lea.vmem %s1, 117
  %193 = vst.msk [vmem:[%s192] ss:$8 sm:$0xc] %vm189, %v188
  %s194 = scalar_lea.vmem %s1, 102
  %195 = vst.msk [vmem:[%s194] ss:$8 sm:$0x30] %vm189, %v188
  %s196 = scalar_lea.vmem %s1, 87
  %197 = vst.msk [vmem:[%s196] ss:$8 sm:$0xc0] %vm189, %v188
  %s198 = scalar_lea.vmem %s0, 576
  %v199 = vld [vmem:[%s198] ss:$4 sm:$0xff]
  %vm200 = vcmask 261120
  %s201 = scalar_lea.vmem %s1, 144
  %202 = vst.msk [vmem:[%s201] ss:$8 sm:$0x3] %vm200, %v199
  %s203 = scalar_lea.vmem %s1, 129
  %204 = vst.msk [vmem:[%s203] ss:$8 sm:$0xc] %vm200, %v199
  %s205 = scalar_lea.vmem %s1, 114
  %206 = vst.msk [vmem:[%s205] ss:$8 sm:$0x30] %vm200, %v199
  %s207 = scalar_lea.vmem %s1, 99
  %208 = vst.msk [vmem:[%s207] ss:$8 sm:$0xc0] %vm200, %v199
  %s209 = scalar_lea.vmem %s0, 608
  %v210 = vld [vmem:[%s209] ss:$4 sm:$0xff]
  %vm211 = vcmask 261120
  %s212 = scalar_lea.vmem %s1, 148
  %213 = vst.msk [vmem:[%s212] ss:$8 sm:$0x3] %vm211, %v210
  %s214 = scalar_lea.vmem %s1, 133
  %215 = vst.msk [vmem:[%s214] ss:$8 sm:$0xc] %vm211, %v210
  %s216 = scalar_lea.vmem %s1, 118
  %217 = vst.msk [vmem:[%s216] ss:$8 sm:$0x30] %vm211, %v210
  %s218 = scalar_lea.vmem %s1, 103
  %219 = vst.msk [vmem:[%s218] ss:$8 sm:$0xc0] %vm211, %v210
  %s220 = scalar_lea.vmem %s0, 640
  %v221 = vld [vmem:[%s220] ss:$4 sm:$0xff]
  %vm222 = vcmask 261120
  %s223 = scalar_lea.vmem %s1, 160
  %224 = vst.msk [vmem:[%s223] ss:$8 sm:$0x3] %vm222, %v221
  %s225 = scalar_lea.vmem %s1, 145
  %226 = vst.msk [vmem:[%s225] ss:$8 sm:$0xc] %vm222, %v221
  %s227 = scalar_lea.vmem %s1, 130
  %228 = vst.msk [vmem:[%s227] ss:$8 sm:$0x30] %vm222, %v221
  %s229 = scalar_lea.vmem %s1, 115
  %230 = vst.msk [vmem:[%s229] ss:$8 sm:$0xc0] %vm222, %v221
  %s231 = scalar_lea.vmem %s0, 672
  %v232 = vld [vmem:[%s231] ss:$4 sm:$0xff]
  %vm233 = vcmask 261120
  %s234 = scalar_lea.vmem %s1, 164
  %235 = vst.msk [vmem:[%s234] ss:$8 sm:$0x3] %vm233, %v232
  %s236 = scalar_lea.vmem %s1, 149
  %237 = vst.msk [vmem:[%s236] ss:$8 sm:$0xc] %vm233, %v232
  %s238 = scalar_lea.vmem %s1, 134
  %239 = vst.msk [vmem:[%s238] ss:$8 sm:$0x30] %vm233, %v232
  %s240 = scalar_lea.vmem %s1, 119
  %241 = vst.msk [vmem:[%s240] ss:$8 sm:$0xc0] %vm233, %v232
  %s242 = scalar_lea.vmem %s0, 704
  %v243 = vld [vmem:[%s242] ss:$4 sm:$0xff]
  %vm244 = vcmask 261120
  %s245 = scalar_lea.vmem %s1, 176
  %246 = vst.msk [vmem:[%s245] ss:$8 sm:$0x3] %vm244, %v243
  %s247 = scalar_lea.vmem %s1, 161
  %248 = vst.msk [vmem:[%s247] ss:$8 sm:$0xc] %vm244, %v243
  %s249 = scalar_lea.vmem %s1, 146
  %250 = vst.msk [vmem:[%s249] ss:$8 sm:$0x30] %vm244, %v243
  %s251 = scalar_lea.vmem %s1, 131
  %252 = vst.msk [vmem:[%s251] ss:$8 sm:$0xc0] %vm244, %v243
  %s253 = scalar_lea.vmem %s0, 736
  %v254 = vld [vmem:[%s253] ss:$4 sm:$0xff]
  %vm255 = vcmask 261120
  %s256 = scalar_lea.vmem %s1, 180
  %257 = vst.msk [vmem:[%s256] ss:$8 sm:$0x3] %vm255, %v254
  %s258 = scalar_lea.vmem %s1, 165
  %259 = vst.msk [vmem:[%s258] ss:$8 sm:$0xc] %vm255, %v254
  %s260 = scalar_lea.vmem %s1, 150
  %261 = vst.msk [vmem:[%s260] ss:$8 sm:$0x30] %vm255, %v254
  %s262 = scalar_lea.vmem %s1, 135
  %263 = vst.msk [vmem:[%s262] ss:$8 sm:$0xc0] %vm255, %v254
  %s264 = scalar_lea.vmem %s0, 768
  %v265 = vld [vmem:[%s264] ss:$4 sm:$0xff]
  %vm266 = vcmask 261120
  %s267 = scalar_lea.vmem %s1, 192
  %268 = vst.msk [vmem:[%s267] ss:$8 sm:$0x3] %vm266, %v265
  %s269 = scalar_lea.vmem %s1, 177
  %270 = vst.msk [vmem:[%s269] ss:$8 sm:$0xc] %vm266, %v265
  %s271 = scalar_lea.vmem %s1, 162
  %272 = vst.msk [vmem:[%s271] ss:$8 sm:$0x30] %vm266, %v265
  %s273 = scalar_lea.vmem %s1, 147
  %274 = vst.msk [vmem:[%s273] ss:$8 sm:$0xc0] %vm266, %v265
  %s275 = scalar_lea.vmem %s0, 800
  %v276 = vld [vmem:[%s275] ss:$4 sm:$0xff]
  %vm277 = vcmask 261120
  %s278 = scalar_lea.vmem %s1, 196
  %279 = vst.msk [vmem:[%s278] ss:$8 sm:$0x3] %vm277, %v276
  %s280 = scalar_lea.vmem %s1, 181
  %281 = vst.msk [vmem:[%s280] ss:$8 sm:$0xc] %vm277, %v276
  %s282 = scalar_lea.vmem %s1, 166
  %283 = vst.msk [vmem:[%s282] ss:$8 sm:$0x30] %vm277, %v276
  %s284 = scalar_lea.vmem %s1, 151
  %285 = vst.msk [vmem:[%s284] ss:$8 sm:$0xc0] %vm277, %v276
  %s286 = scalar_lea.vmem %s0, 832
  %v287 = vld [vmem:[%s286] ss:$4 sm:$0xff]
  %vm288 = vcmask 261120
  %s289 = scalar_lea.vmem %s1, 208
  %290 = vst.msk [vmem:[%s289] ss:$8 sm:$0x3] %vm288, %v287
  %s291 = scalar_lea.vmem %s1, 193
  %292 = vst.msk [vmem:[%s291] ss:$8 sm:$0xc] %vm288, %v287
  %s293 = scalar_lea.vmem %s1, 178
  %294 = vst.msk [vmem:[%s293] ss:$8 sm:$0x30] %vm288, %v287
  %s295 = scalar_lea.vmem %s1, 163
  %296 = vst.msk [vmem:[%s295] ss:$8 sm:$0xc0] %vm288, %v287
  %s297 = scalar_lea.vmem %s0, 864
  %v298 = vld [vmem:[%s297] ss:$4 sm:$0xff]
  %vm299 = vcmask 261120
  %s300 = scalar_lea.vmem %s1, 212
  %301 = vst.msk [vmem:[%s300] ss:$8 sm:$0x3] %vm299, %v298
  %s302 = scalar_lea.vmem %s1, 197
  %303 = vst.msk [vmem:[%s302] ss:$8 sm:$0xc] %vm299, %v298
  %s304 = scalar_lea.vmem %s1, 182
  %305 = vst.msk [vmem:[%s304] ss:$8 sm:$0x30] %vm299, %v298
  %s306 = scalar_lea.vmem %s1, 167
  %307 = vst.msk [vmem:[%s306] ss:$8 sm:$0xc0] %vm299, %v298
  %s308 = scalar_lea.vmem %s0, 896
  %v309 = vld [vmem:[%s308] ss:$4 sm:$0xff]
  %vm310 = vcmask 261120
  %s311 = scalar_lea.vmem %s1, 224
  %312 = vst.msk [vmem:[%s311] ss:$8 sm:$0x3] %vm310, %v309
  %s313 = scalar_lea.vmem %s1, 209
  %314 = vst.msk [vmem:[%s313] ss:$8 sm:$0xc] %vm310, %v309
  %s315 = scalar_lea.vmem %s1, 194
  %316 = vst.msk [vmem:[%s315] ss:$8 sm:$0x30] %vm310, %v309
  %s317 = scalar_lea.vmem %s1, 179
  %318 = vst.msk [vmem:[%s317] ss:$8 sm:$0xc0] %vm310, %v309
  %s319 = scalar_lea.vmem %s0, 928
  %v320 = vld [vmem:[%s319] ss:$4 sm:$0xff]
  %vm321 = vcmask 261120
  %s322 = scalar_lea.vmem %s1, 228
  %323 = vst.msk [vmem:[%s322] ss:$8 sm:$0x3] %vm321, %v320
  %s324 = scalar_lea.vmem %s1, 213
  %325 = vst.msk [vmem:[%s324] ss:$8 sm:$0xc] %vm321, %v320
  %s326 = scalar_lea.vmem %s1, 198
  %327 = vst.msk [vmem:[%s326] ss:$8 sm:$0x30] %vm321, %v320
  %s328 = scalar_lea.vmem %s1, 183
  %329 = vst.msk [vmem:[%s328] ss:$8 sm:$0xc0] %vm321, %v320
  %s330 = scalar_lea.vmem %s0, 960
  %v331 = vld [vmem:[%s330] ss:$4 sm:$0xff]
  %vm332 = vcmask 261120
  %s333 = scalar_lea.vmem %s1, 240
  %334 = vst.msk [vmem:[%s333] ss:$8 sm:$0x3] %vm332, %v331
  %s335 = scalar_lea.vmem %s1, 225
  %336 = vst.msk [vmem:[%s335] ss:$8 sm:$0xc] %vm332, %v331
  %s337 = scalar_lea.vmem %s1, 210
  %338 = vst.msk [vmem:[%s337] ss:$8 sm:$0x30] %vm332, %v331
  %s339 = scalar_lea.vmem %s1, 195
  %340 = vst.msk [vmem:[%s339] ss:$8 sm:$0xc0] %vm332, %v331
  %s341 = scalar_lea.vmem %s0, 992
  %v342 = vld [vmem:[%s341] ss:$4 sm:$0xff]
  %vm343 = vcmask 261120
  %s344 = scalar_lea.vmem %s1, 244
  %345 = vst.msk [vmem:[%s344] ss:$8 sm:$0x3] %vm343, %v342
  %s346 = scalar_lea.vmem %s1, 229
  %347 = vst.msk [vmem:[%s346] ss:$8 sm:$0xc] %vm343, %v342
  %s348 = scalar_lea.vmem %s1, 214
  %349 = vst.msk [vmem:[%s348] ss:$8 sm:$0x30] %vm343, %v342
  %s350 = scalar_lea.vmem %s1, 199
  %351 = vst.msk [vmem:[%s350] ss:$8 sm:$0xc0] %vm343, %v342
  %s352 = scalar_lea.vmem %s0, 1024
  %v353 = vld [vmem:[%s352] ss:$4 sm:$0xff]
  %vm354 = vcmask 261120
  %s355 = scalar_lea.vmem %s1, 256
  %356 = vst.msk [vmem:[%s355] ss:$8 sm:$0x3] %vm354, %v353
  %s357 = scalar_lea.vmem %s1, 241
  %358 = vst.msk [vmem:[%s357] ss:$8 sm:$0xc] %vm354, %v353
  %s359 = scalar_lea.vmem %s1, 226
  %360 = vst.msk [vmem:[%s359] ss:$8 sm:$0x30] %vm354, %v353
  %s361 = scalar_lea.vmem %s1, 211
  %362 = vst.msk [vmem:[%s361] ss:$8 sm:$0xc0] %vm354, %v353
  %s363 = scalar_lea.vmem %s0, 1056
  %v364 = vld [vmem:[%s363] ss:$4 sm:$0xff]
  %vm365 = vcmask 261120
  %s366 = scalar_lea.vmem %s1, 260
  %367 = vst.msk [vmem:[%s366] ss:$8 sm:$0x3] %vm365, %v364
  %s368 = scalar_lea.vmem %s1, 245
  %369 = vst.msk [vmem:[%s368] ss:$8 sm:$0xc] %vm365, %v364
  %s370 = scalar_lea.vmem %s1, 230
  %371 = vst.msk [vmem:[%s370] ss:$8 sm:$0x30] %vm365, %v364
  %s372 = scalar_lea.vmem %s1, 215
  %373 = vst.msk [vmem:[%s372] ss:$8 sm:$0xc0] %vm365, %v364
  %s374 = scalar_lea.vmem %s0, 1088
  %v375 = vld [vmem:[%s374] ss:$4 sm:$0xff]
  %vm376 = vcmask 261120
  %s377 = scalar_lea.vmem %s1, 272
  %378 = vst.msk [vmem:[%s377] ss:$8 sm:$0x3] %vm376, %v375
  %s379 = scalar_lea.vmem %s1, 257
  %380 = vst.msk [vmem:[%s379] ss:$8 sm:$0xc] %vm376, %v375
  %s381 = scalar_lea.vmem %s1, 242
  %382 = vst.msk [vmem:[%s381] ss:$8 sm:$0x30] %vm376, %v375
  %s383 = scalar_lea.vmem %s1, 227
  %384 = vst.msk [vmem:[%s383] ss:$8 sm:$0xc0] %vm376, %v375
  %s385 = scalar_lea.vmem %s0, 1120
  %v386 = vld [vmem:[%s385] ss:$4 sm:$0xff]
  %vm387 = vcmask 261120
  %s388 = scalar_lea.vmem %s1, 276
  %389 = vst.msk [vmem:[%s388] ss:$8 sm:$0x3] %vm387, %v386
  %s390 = scalar_lea.vmem %s1, 261
  %391 = vst.msk [vmem:[%s390] ss:$8 sm:$0xc] %vm387, %v386
  %s392 = scalar_lea.vmem %s1, 246
  %393 = vst.msk [vmem:[%s392] ss:$8 sm:$0x30] %vm387, %v386
  %s394 = scalar_lea.vmem %s1, 231
  %395 = vst.msk [vmem:[%s394] ss:$8 sm:$0xc0] %vm387, %v386
  %s396 = scalar_lea.vmem %s0, 1152
  %v397 = vld [vmem:[%s396] ss:$4 sm:$0xff]
  %vm398 = vcmask 261120
  %s399 = scalar_lea.vmem %s1, 288
  %400 = vst.msk [vmem:[%s399] ss:$8 sm:$0x3] %vm398, %v397
  %s401 = scalar_lea.vmem %s1, 273
  %402 = vst.msk [vmem:[%s401] ss:$8 sm:$0xc] %vm398, %v397
  %s403 = scalar_lea.vmem %s1, 258
  %404 = vst.msk [vmem:[%s403] ss:$8 sm:$0x30] %vm398, %v397
  %s405 = scalar_lea.vmem %s1, 243
  %406 = vst.msk [vmem:[%s405] ss:$8 sm:$0xc0] %vm398, %v397
  %s407 = scalar_lea.vmem %s0, 1184
  %v408 = vld [vmem:[%s407] ss:$4 sm:$0xff]
  %vm409 = vcmask 261120
  %s410 = scalar_lea.vmem %s1, 292
  %411 = vst.msk [vmem:[%s410] ss:$8 sm:$0x3] %vm409, %v408
  %s412 = scalar_lea.vmem %s1, 277
  %413 = vst.msk [vmem:[%s412] ss:$8 sm:$0xc] %vm409, %v408
  %s414 = scalar_lea.vmem %s1, 262
  %415 = vst.msk [vmem:[%s414] ss:$8 sm:$0x30] %vm409, %v408
  %s416 = scalar_lea.vmem %s1, 247
  %417 = vst.msk [vmem:[%s416] ss:$8 sm:$0xc0] %vm409, %v408
  %s418 = scalar_lea.vmem %s0, 1216
  %v419 = vld [vmem:[%s418] ss:$4 sm:$0xff]
  %vm420 = vcmask 261120
  %s421 = scalar_lea.vmem %s1, 304
  %422 = vst.msk [vmem:[%s421] ss:$8 sm:$0x3] %vm420, %v419
  %s423 = scalar_lea.vmem %s1, 289
  %424 = vst.msk [vmem:[%s423] ss:$8 sm:$0xc] %vm420, %v419
  %s425 = scalar_lea.vmem %s1, 274
  %426 = vst.msk [vmem:[%s425] ss:$8 sm:$0x30] %vm420, %v419
  %s427 = scalar_lea.vmem %s1, 259
  %428 = vst.msk [vmem:[%s427] ss:$8 sm:$0xc0] %vm420, %v419
  %s429 = scalar_lea.vmem %s0, 1248
  %v430 = vld [vmem:[%s429] ss:$4 sm:$0xff]
  %vm431 = vcmask 261120
  %s432 = scalar_lea.vmem %s1, 308
  %433 = vst.msk [vmem:[%s432] ss:$8 sm:$0x3] %vm431, %v430
  %s434 = scalar_lea.vmem %s1, 293
  %435 = vst.msk [vmem:[%s434] ss:$8 sm:$0xc] %vm431, %v430
  %s436 = scalar_lea.vmem %s1, 278
  %437 = vst.msk [vmem:[%s436] ss:$8 sm:$0x30] %vm431, %v430
  %s438 = scalar_lea.vmem %s1, 263
  %439 = vst.msk [vmem:[%s438] ss:$8 sm:$0xc0] %vm431, %v430
  %s440 = scalar_lea.vmem %s0, 1280
  %v441 = vld [vmem:[%s440] ss:$4 sm:$0xff]
  %vm442 = vcmask 261120
  %s443 = scalar_lea.vmem %s1, 320
  %444 = vst.msk [vmem:[%s443] ss:$8 sm:$0x3] %vm442, %v441
  %s445 = scalar_lea.vmem %s1, 305
  %446 = vst.msk [vmem:[%s445] ss:$8 sm:$0xc] %vm442, %v441
  %s447 = scalar_lea.vmem %s1, 290
  %448 = vst.msk [vmem:[%s447] ss:$8 sm:$0x30] %vm442, %v441
  %s449 = scalar_lea.vmem %s1, 275
  %450 = vst.msk [vmem:[%s449] ss:$8 sm:$0xc0] %vm442, %v441
  %s451 = scalar_lea.vmem %s0, 1312
  %v452 = vld [vmem:[%s451] ss:$4 sm:$0xff]
  %vm453 = vcmask 261120
  %s454 = scalar_lea.vmem %s1, 324
  %455 = vst.msk [vmem:[%s454] ss:$8 sm:$0x3] %vm453, %v452
  %s456 = scalar_lea.vmem %s1, 309
  %457 = vst.msk [vmem:[%s456] ss:$8 sm:$0xc] %vm453, %v452
  %s458 = scalar_lea.vmem %s1, 294
  %459 = vst.msk [vmem:[%s458] ss:$8 sm:$0x30] %vm453, %v452
  %s460 = scalar_lea.vmem %s1, 279
  %461 = vst.msk [vmem:[%s460] ss:$8 sm:$0xc0] %vm453, %v452
  %s462 = scalar_lea.vmem %s0, 1344
  %v463 = vld [vmem:[%s462] ss:$4 sm:$0xff]
  %vm464 = vcmask 261120
  %s465 = scalar_lea.vmem %s1, 336
  %466 = vst.msk [vmem:[%s465] ss:$8 sm:$0x3] %vm464, %v463
  %s467 = scalar_lea.vmem %s1, 321
  %468 = vst.msk [vmem:[%s467] ss:$8 sm:$0xc] %vm464, %v463
  %s469 = scalar_lea.vmem %s1, 306
  %470 = vst.msk [vmem:[%s469] ss:$8 sm:$0x30] %vm464, %v463
  %s471 = scalar_lea.vmem %s1, 291
  %472 = vst.msk [vmem:[%s471] ss:$8 sm:$0xc0] %vm464, %v463
  %s473 = scalar_lea.vmem %s0, 1376
  %v474 = vld [vmem:[%s473] ss:$4 sm:$0xff]
  %vm475 = vcmask 261120
  %s476 = scalar_lea.vmem %s1, 340
  %477 = vst.msk [vmem:[%s476] ss:$8 sm:$0x3] %vm475, %v474
  %s478 = scalar_lea.vmem %s1, 325
  %479 = vst.msk [vmem:[%s478] ss:$8 sm:$0xc] %vm475, %v474
  %s480 = scalar_lea.vmem %s1, 310
  %481 = vst.msk [vmem:[%s480] ss:$8 sm:$0x30] %vm475, %v474
  %s482 = scalar_lea.vmem %s1, 295
  %483 = vst.msk [vmem:[%s482] ss:$8 sm:$0xc0] %vm475, %v474
  %s484 = scalar_lea.vmem %s0, 1408
  %v485 = vld [vmem:[%s484] ss:$4 sm:$0xff]
  %vm486 = vcmask 261120
  %s487 = scalar_lea.vmem %s1, 352
  %488 = vst.msk [vmem:[%s487] ss:$8 sm:$0x3] %vm486, %v485
  %s489 = scalar_lea.vmem %s1, 337
  %490 = vst.msk [vmem:[%s489] ss:$8 sm:$0xc] %vm486, %v485
  %s491 = scalar_lea.vmem %s1, 322
  %492 = vst.msk [vmem:[%s491] ss:$8 sm:$0x30] %vm486, %v485
  %s493 = scalar_lea.vmem %s1, 307
  %494 = vst.msk [vmem:[%s493] ss:$8 sm:$0xc0] %vm486, %v485
  %s495 = scalar_lea.vmem %s0, 1440
  %v496 = vld [vmem:[%s495] ss:$4 sm:$0xff]
  %vm497 = vcmask 261120
  %s498 = scalar_lea.vmem %s1, 356
  %499 = vst.msk [vmem:[%s498] ss:$8 sm:$0x3] %vm497, %v496
  %s500 = scalar_lea.vmem %s1, 341
  %501 = vst.msk [vmem:[%s500] ss:$8 sm:$0xc] %vm497, %v496
  %s502 = scalar_lea.vmem %s1, 326
  %503 = vst.msk [vmem:[%s502] ss:$8 sm:$0x30] %vm497, %v496
  %s504 = scalar_lea.vmem %s1, 311
  %505 = vst.msk [vmem:[%s504] ss:$8 sm:$0xc0] %vm497, %v496
  %s506 = scalar_lea.vmem %s0, 1472
  %v507 = vld [vmem:[%s506] ss:$4 sm:$0xff]
  %vm508 = vcmask 261120
  %s509 = scalar_lea.vmem %s1, 368
  %510 = vst.msk [vmem:[%s509] ss:$8 sm:$0x3] %vm508, %v507
  %s511 = scalar_lea.vmem %s1, 353
  %512 = vst.msk [vmem:[%s511] ss:$8 sm:$0xc] %vm508, %v507
  %s513 = scalar_lea.vmem %s1, 338
  %514 = vst.msk [vmem:[%s513] ss:$8 sm:$0x30] %vm508, %v507
  %s515 = scalar_lea.vmem %s1, 323
  %516 = vst.msk [vmem:[%s515] ss:$8 sm:$0xc0] %vm508, %v507
  %s517 = scalar_lea.vmem %s0, 1504
  %v518 = vld [vmem:[%s517] ss:$4 sm:$0xff]
  %vm519 = vcmask 261120
  %s520 = scalar_lea.vmem %s1, 372
  %521 = vst.msk [vmem:[%s520] ss:$8 sm:$0x3] %vm519, %v518
  %s522 = scalar_lea.vmem %s1, 357
  %523 = vst.msk [vmem:[%s522] ss:$8 sm:$0xc] %vm519, %v518
  %s524 = scalar_lea.vmem %s1, 342
  %525 = vst.msk [vmem:[%s524] ss:$8 sm:$0x30] %vm519, %v518
  %s526 = scalar_lea.vmem %s1, 327
  %527 = vst.msk [vmem:[%s526] ss:$8 sm:$0xc0] %vm519, %v518
  %s528 = scalar_lea.vmem %s0, 1536
  %v529 = vld [vmem:[%s528] ss:$4 sm:$0xff]
  %vm530 = vcmask 261120
  %s531 = scalar_lea.vmem %s1, 384
  %532 = vst.msk [vmem:[%s531] ss:$8 sm:$0x3] %vm530, %v529
  %s533 = scalar_lea.vmem %s1, 369
  %534 = vst.msk [vmem:[%s533] ss:$8 sm:$0xc] %vm530, %v529
  %s535 = scalar_lea.vmem %s1, 354
  %536 = vst.msk [vmem:[%s535] ss:$8 sm:$0x30] %vm530, %v529
  %s537 = scalar_lea.vmem %s1, 339
  %538 = vst.msk [vmem:[%s537] ss:$8 sm:$0xc0] %vm530, %v529
  %s539 = scalar_lea.vmem %s0, 1568
  %v540 = vld [vmem:[%s539] ss:$4 sm:$0xff]
  %vm541 = vcmask 261120
  %s542 = scalar_lea.vmem %s1, 388
  %543 = vst.msk [vmem:[%s542] ss:$8 sm:$0x3] %vm541, %v540
  %s544 = scalar_lea.vmem %s1, 373
  %545 = vst.msk [vmem:[%s544] ss:$8 sm:$0xc] %vm541, %v540
  %s546 = scalar_lea.vmem %s1, 358
  %547 = vst.msk [vmem:[%s546] ss:$8 sm:$0x30] %vm541, %v540
  %s548 = scalar_lea.vmem %s1, 343
  %549 = vst.msk [vmem:[%s548] ss:$8 sm:$0xc0] %vm541, %v540
  %s550 = scalar_lea.vmem %s0, 1600
  %v551 = vld [vmem:[%s550] ss:$4 sm:$0xff]
  %vm552 = vcmask 261120
  %s553 = scalar_lea.vmem %s1, 400
  %554 = vst.msk [vmem:[%s553] ss:$8 sm:$0x3] %vm552, %v551
  %s555 = scalar_lea.vmem %s1, 385
  %556 = vst.msk [vmem:[%s555] ss:$8 sm:$0xc] %vm552, %v551
  %s557 = scalar_lea.vmem %s1, 370
  %558 = vst.msk [vmem:[%s557] ss:$8 sm:$0x30] %vm552, %v551
  %s559 = scalar_lea.vmem %s1, 355
  %560 = vst.msk [vmem:[%s559] ss:$8 sm:$0xc0] %vm552, %v551
  %s561 = scalar_lea.vmem %s0, 1632
  %v562 = vld [vmem:[%s561] ss:$4 sm:$0xff]
  %vm563 = vcmask 261120
  %s564 = scalar_lea.vmem %s1, 404
  %565 = vst.msk [vmem:[%s564] ss:$8 sm:$0x3] %vm563, %v562
  %s566 = scalar_lea.vmem %s1, 389
  %567 = vst.msk [vmem:[%s566] ss:$8 sm:$0xc] %vm563, %v562
  %s568 = scalar_lea.vmem %s1, 374
  %569 = vst.msk [vmem:[%s568] ss:$8 sm:$0x30] %vm563, %v562
  %s570 = scalar_lea.vmem %s1, 359
  %571 = vst.msk [vmem:[%s570] ss:$8 sm:$0xc0] %vm563, %v562
  %s572 = scalar_lea.vmem %s0, 1664
  %v573 = vld [vmem:[%s572] ss:$4 sm:$0xff]
  %vm574 = vcmask 261120
  %s575 = scalar_lea.vmem %s1, 416
  %576 = vst.msk [vmem:[%s575] ss:$8 sm:$0x3] %vm574, %v573
  %s577 = scalar_lea.vmem %s1, 401
  %578 = vst.msk [vmem:[%s577] ss:$8 sm:$0xc] %vm574, %v573
  %s579 = scalar_lea.vmem %s1, 386
  %580 = vst.msk [vmem:[%s579] ss:$8 sm:$0x30] %vm574, %v573
  %s581 = scalar_lea.vmem %s1, 371
  %582 = vst.msk [vmem:[%s581] ss:$8 sm:$0xc0] %vm574, %v573
  %s583 = scalar_lea.vmem %s0, 1696
  %v584 = vld [vmem:[%s583] ss:$4 sm:$0xff]
  %vm585 = vcmask 261120
  %s586 = scalar_lea.vmem %s1, 420
  %587 = vst.msk [vmem:[%s586] ss:$8 sm:$0x3] %vm585, %v584
  %s588 = scalar_lea.vmem %s1, 405
  %589 = vst.msk [vmem:[%s588] ss:$8 sm:$0xc] %vm585, %v584
  %s590 = scalar_lea.vmem %s1, 390
  %591 = vst.msk [vmem:[%s590] ss:$8 sm:$0x30] %vm585, %v584
  %s592 = scalar_lea.vmem %s1, 375
  %593 = vst.msk [vmem:[%s592] ss:$8 sm:$0xc0] %vm585, %v584
  %s594 = scalar_lea.vmem %s0, 1728
  %v595 = vld [vmem:[%s594] ss:$4 sm:$0xff]
  %vm596 = vcmask 261120
  %s597 = scalar_lea.vmem %s1, 432
  %598 = vst.msk [vmem:[%s597] ss:$8 sm:$0x3] %vm596, %v595
  %s599 = scalar_lea.vmem %s1, 417
  %600 = vst.msk [vmem:[%s599] ss:$8 sm:$0xc] %vm596, %v595
  %s601 = scalar_lea.vmem %s1, 402
  %602 = vst.msk [vmem:[%s601] ss:$8 sm:$0x30] %vm596, %v595
  %s603 = scalar_lea.vmem %s1, 387
  %604 = vst.msk [vmem:[%s603] ss:$8 sm:$0xc0] %vm596, %v595
  %s605 = scalar_lea.vmem %s0, 1760
  %v606 = vld [vmem:[%s605] ss:$4 sm:$0xff]
  %vm607 = vcmask 261120
  %s608 = scalar_lea.vmem %s1, 436
  %609 = vst.msk [vmem:[%s608] ss:$8 sm:$0x3] %vm607, %v606
  %s610 = scalar_lea.vmem %s1, 421
  %611 = vst.msk [vmem:[%s610] ss:$8 sm:$0xc] %vm607, %v606
  %s612 = scalar_lea.vmem %s1, 406
  %613 = vst.msk [vmem:[%s612] ss:$8 sm:$0x30] %vm607, %v606
  %s614 = scalar_lea.vmem %s1, 391
  %615 = vst.msk [vmem:[%s614] ss:$8 sm:$0xc0] %vm607, %v606
  %s616 = scalar_lea.vmem %s0, 1792
  %v617 = vld [vmem:[%s616] ss:$4 sm:$0xff]
  %vm618 = vcmask 261120
  %s619 = scalar_lea.vmem %s1, 448
  %620 = vst.msk [vmem:[%s619] ss:$8 sm:$0x3] %vm618, %v617
  %s621 = scalar_lea.vmem %s1, 433
  %622 = vst.msk [vmem:[%s621] ss:$8 sm:$0xc] %vm618, %v617
  %s623 = scalar_lea.vmem %s1, 418
  %624 = vst.msk [vmem:[%s623] ss:$8 sm:$0x30] %vm618, %v617
  %s625 = scalar_lea.vmem %s1, 403
  %626 = vst.msk [vmem:[%s625] ss:$8 sm:$0xc0] %vm618, %v617
  %s627 = scalar_lea.vmem %s0, 1824
  %v628 = vld [vmem:[%s627] ss:$4 sm:$0xff]
  %vm629 = vcmask 261120
  %s630 = scalar_lea.vmem %s1, 452
  %631 = vst.msk [vmem:[%s630] ss:$8 sm:$0x3] %vm629, %v628
  %s632 = scalar_lea.vmem %s1, 437
  %633 = vst.msk [vmem:[%s632] ss:$8 sm:$0xc] %vm629, %v628
  %s634 = scalar_lea.vmem %s1, 422
  %635 = vst.msk [vmem:[%s634] ss:$8 sm:$0x30] %vm629, %v628
  %s636 = scalar_lea.vmem %s1, 407
  %637 = vst.msk [vmem:[%s636] ss:$8 sm:$0xc0] %vm629, %v628
  %s638 = scalar_lea.vmem %s0, 1856
  %v639 = vld [vmem:[%s638] ss:$4 sm:$0xff]
  %vm640 = vcmask 261120
  %s641 = scalar_lea.vmem %s1, 464
  %642 = vst.msk [vmem:[%s641] ss:$8 sm:$0x3] %vm640, %v639
  %s643 = scalar_lea.vmem %s1, 449
  %644 = vst.msk [vmem:[%s643] ss:$8 sm:$0xc] %vm640, %v639
  %s645 = scalar_lea.vmem %s1, 434
  %646 = vst.msk [vmem:[%s645] ss:$8 sm:$0x30] %vm640, %v639
  %s647 = scalar_lea.vmem %s1, 419
  %648 = vst.msk [vmem:[%s647] ss:$8 sm:$0xc0] %vm640, %v639
  %s649 = scalar_lea.vmem %s0, 1888
  %v650 = vld [vmem:[%s649] ss:$4 sm:$0xff]
  %vm651 = vcmask 261120
  %s652 = scalar_lea.vmem %s1, 468
  %653 = vst.msk [vmem:[%s652] ss:$8 sm:$0x3] %vm651, %v650
  %s654 = scalar_lea.vmem %s1, 453
  %655 = vst.msk [vmem:[%s654] ss:$8 sm:$0xc] %vm651, %v650
  %s656 = scalar_lea.vmem %s1, 438
  %657 = vst.msk [vmem:[%s656] ss:$8 sm:$0x30] %vm651, %v650
  %s658 = scalar_lea.vmem %s1, 423
  %659 = vst.msk [vmem:[%s658] ss:$8 sm:$0xc0] %vm651, %v650
  %s660 = scalar_lea.vmem %s0, 1920
  %v661 = vld [vmem:[%s660] ss:$4 sm:$0xff]
  %vm662 = vcmask 261120
  %s663 = scalar_lea.vmem %s1, 480
  %664 = vst.msk [vmem:[%s663] ss:$8 sm:$0x3] %vm662, %v661
  %s665 = scalar_lea.vmem %s1, 465
  %666 = vst.msk [vmem:[%s665] ss:$8 sm:$0xc] %vm662, %v661
  %s667 = scalar_lea.vmem %s1, 450
  %668 = vst.msk [vmem:[%s667] ss:$8 sm:$0x30] %vm662, %v661
  %s669 = scalar_lea.vmem %s1, 435
  %670 = vst.msk [vmem:[%s669] ss:$8 sm:$0xc0] %vm662, %v661
  %s671 = scalar_lea.vmem %s0, 1952
  %v672 = vld [vmem:[%s671] ss:$4 sm:$0xff]
  %vm673 = vcmask 261120
  %s674 = scalar_lea.vmem %s1, 484
  %675 = vst.msk [vmem:[%s674] ss:$8 sm:$0x3] %vm673, %v672
  %s676 = scalar_lea.vmem %s1, 469
  %677 = vst.msk [vmem:[%s676] ss:$8 sm:$0xc] %vm673, %v672
  %s678 = scalar_lea.vmem %s1, 454
  %679 = vst.msk [vmem:[%s678] ss:$8 sm:$0x30] %vm673, %v672
  %s680 = scalar_lea.vmem %s1, 439
  %681 = vst.msk [vmem:[%s680] ss:$8 sm:$0xc0] %vm673, %v672
  %s682 = scalar_lea.vmem %s0, 1984
  %v683 = vld [vmem:[%s682] ss:$4 sm:$0xff]
  %vm684 = vcmask 261120
  %s685 = scalar_lea.vmem %s1, 496
  %686 = vst.msk [vmem:[%s685] ss:$8 sm:$0x3] %vm684, %v683
  %s687 = scalar_lea.vmem %s1, 481
  %688 = vst.msk [vmem:[%s687] ss:$8 sm:$0xc] %vm684, %v683
  %s689 = scalar_lea.vmem %s1, 466
  %690 = vst.msk [vmem:[%s689] ss:$8 sm:$0x30] %vm684, %v683
  %s691 = scalar_lea.vmem %s1, 451
  %692 = vst.msk [vmem:[%s691] ss:$8 sm:$0xc0] %vm684, %v683
  %s693 = scalar_lea.vmem %s0, 2016
  %v694 = vld [vmem:[%s693] ss:$4 sm:$0xff]
  %vm695 = vcmask 261120
  %s696 = scalar_lea.vmem %s1, 500
  %697 = vst.msk [vmem:[%s696] ss:$8 sm:$0x3] %vm695, %v694
  %s698 = scalar_lea.vmem %s1, 485
  %699 = vst.msk [vmem:[%s698] ss:$8 sm:$0xc] %vm695, %v694
  %s700 = scalar_lea.vmem %s1, 470
  %701 = vst.msk [vmem:[%s700] ss:$8 sm:$0x30] %vm695, %v694
  %s702 = scalar_lea.vmem %s1, 455
  %703 = vst.msk [vmem:[%s702] ss:$8 sm:$0xc0] %vm695, %v694
  %s704 = scalar_lea.vmem %s0, 3
  %v705 = vld [vmem:[%s704] ss:$8 sm:$0xf]
  %s706 = scalar_lea.vmem %s0, 3
  %v707 = vld [vmem:[%s706] ss:$8 sm:$0xf0]
  %vm708 = vcmask 1047556
  %v709 = vsel %vm708, %v707, %v705
  %710 = vrot.lane.b32.xlu0 %v709, 96
  %v711 = vpop.permute.xlu0 %710
  %vm712 = vcmask 1048320
  %713 = vst.msk [vmem:[%s1] sm:$0xff] %vm712, %v711
  %s714 = scalar_lea.vmem %s0, 131
  %v715 = vld [vmem:[%s714] ss:$8 sm:$0xf]
  %s716 = scalar_lea.vmem %s0, 131
  %v717 = vld [vmem:[%s716] ss:$8 sm:$0xf0]
  %vm718 = vcmask 1047556
  %v719 = vsel %vm718, %v717, %v715
  %720 = vrot.lane.b32.xlu0 %v719, 96
  %v721 = vpop.permute.xlu0 %720
  %vm722 = vcmask 1048320
  %s723 = scalar_lea.vmem %s1, 32
  %724 = vst.msk [vmem:[%s723] sm:$0xff] %vm722, %v721
  %s725 = scalar_lea.vmem %s0, 259
  %v726 = vld [vmem:[%s725] ss:$8 sm:$0xf]
  %s727 = scalar_lea.vmem %s0, 259
  %v728 = vld [vmem:[%s727] ss:$8 sm:$0xf0]
  %vm729 = vcmask 1047556
  %v730 = vsel %vm729, %v728, %v726
  %731 = vrot.lane.b32.xlu0 %v730, 96
  %v732 = vpop.permute.xlu0 %731
  %vm733 = vcmask 1048320
  %s734 = scalar_lea.vmem %s1, 64
  %735 = vst.msk [vmem:[%s734] sm:$0xff] %vm733, %v732
  %s736 = scalar_lea.vmem %s0, 387
  %v737 = vld [vmem:[%s736] ss:$8 sm:$0xf]
  %s738 = scalar_lea.vmem %s0, 387
  %v739 = vld [vmem:[%s738] ss:$8 sm:$0xf0]
  %vm740 = vcmask 1047556
  %v741 = vsel %vm740, %v739, %v737
  %742 = vrot.lane.b32.xlu0 %v741, 96
  %v743 = vpop.permute.xlu0 %742
  %vm744 = vcmask 1048320
  %s745 = scalar_lea.vmem %s1, 96
  %746 = vst.msk [vmem:[%s745] sm:$0xff] %vm744, %v743
  %s747 = scalar_lea.vmem %s0, 515
  %v748 = vld [vmem:[%s747] ss:$8 sm:$0xf]
  %s749 = scalar_lea.vmem %s0, 515
  %v750 = vld [vmem:[%s749] ss:$8 sm:$0xf0]
  %vm751 = vcmask 1047556
  %v752 = vsel %vm751, %v750, %v748
  %753 = vrot.lane.b32.xlu0 %v752, 96
  %v754 = vpop.permute.xlu0 %753
  %vm755 = vcmask 1048320
  %s756 = scalar_lea.vmem %s1, 128
  %757 = vst.msk [vmem:[%s756] sm:$0xff] %vm755, %v754
  %s758 = scalar_lea.vmem %s0, 643
  %v759 = vld [vmem:[%s758] ss:$8 sm:$0xf]
  %s760 = scalar_lea.vmem %s0, 643
  %v761 = vld [vmem:[%s760] ss:$8 sm:$0xf0]
  %vm762 = vcmask 1047556
  %v763 = vsel %vm762, %v761, %v759
  %764 = vrot.lane.b32.xlu0 %v763, 96
  %v765 = vpop.permute.xlu0 %764
  %vm766 = vcmask 1048320
  %s767 = scalar_lea.vmem %s1, 160
  %768 = vst.msk [vmem:[%s767] sm:$0xff] %vm766, %v765
  %s769 = scalar_lea.vmem %s0, 771
  %v770 = vld [vmem:[%s769] ss:$8 sm:$0xf]
  %s771 = scalar_lea.vmem %s0, 771
  %v772 = vld [vmem:[%s771] ss:$8 sm:$0xf0]
  %vm773 = vcmask 1047556
  %v774 = vsel %vm773, %v772, %v770
  %775 = vrot.lane.b32.xlu0 %v774, 96
  %v776 = vpop.permute.xlu0 %775
  %vm777 = vcmask 1048320
  %s778 = scalar_lea.vmem %s1, 192
  %779 = vst.msk [vmem:[%s778] sm:$0xff] %vm777, %v776
  %s780 = scalar_lea.vmem %s0, 899
  %v781 = vld [vmem:[%s780] ss:$8 sm:$0xf]
  %s782 = scalar_lea.vmem %s0, 899
  %v783 = vld [vmem:[%s782] ss:$8 sm:$0xf0]
  %vm784 = vcmask 1047556
  %v785 = vsel %vm784, %v783, %v781
  %786 = vrot.lane.b32.xlu0 %v785, 96
  %v787 = vpop.permute.xlu0 %786
  %vm788 = vcmask 1048320
  %s789 = scalar_lea.vmem %s1, 224
  %790 = vst.msk [vmem:[%s789] sm:$0xff] %vm788, %v787
  %s791 = scalar_lea.vmem %s0, 1027
  %v792 = vld [vmem:[%s791] ss:$8 sm:$0xf]
  %s793 = scalar_lea.vmem %s0, 1027
  %v794 = vld [vmem:[%s793] ss:$8 sm:$0xf0]
  %vm795 = vcmask 1047556
  %v796 = vsel %vm795, %v794, %v792
  %797 = vrot.lane.b32.xlu0 %v796, 96
  %v798 = vpop.permute.xlu0 %797
  %vm799 = vcmask 1048320
  %s800 = scalar_lea.vmem %s1, 256
  %801 = vst.msk [vmem:[%s800] sm:$0xff] %vm799, %v798
  %s802 = scalar_lea.vmem %s0, 1155
  %v803 = vld [vmem:[%s802] ss:$8 sm:$0xf]
  %s804 = scalar_lea.vmem %s0, 1155
  %v805 = vld [vmem:[%s804] ss:$8 sm:$0xf0]
  %vm806 = vcmask 1047556
  %v807 = vsel %vm806, %v805, %v803
  %808 = vrot.lane.b32.xlu0 %v807, 96
  %v809 = vpop.permute.xlu0 %808
  %vm810 = vcmask 1048320
  %s811 = scalar_lea.vmem %s1, 288
  %812 = vst.msk [vmem:[%s811] sm:$0xff] %vm810, %v809
  %s813 = scalar_lea.vmem %s0, 1283
  %v814 = vld [vmem:[%s813] ss:$8 sm:$0xf]
  %s815 = scalar_lea.vmem %s0, 1283
  %v816 = vld [vmem:[%s815] ss:$8 sm:$0xf0]
  %vm817 = vcmask 1047556
  %v818 = vsel %vm817, %v816, %v814
  %819 = vrot.lane.b32.xlu0 %v818, 96
  %v820 = vpop.permute.xlu0 %819
  %vm821 = vcmask 1048320
  %s822 = scalar_lea.vmem %s1, 320
  %823 = vst.msk [vmem:[%s822] sm:$0xff] %vm821, %v820
  %s824 = scalar_lea.vmem %s0, 1411
  %v825 = vld [vmem:[%s824] ss:$8 sm:$0xf]
  %s826 = scalar_lea.vmem %s0, 1411
  %v827 = vld [vmem:[%s826] ss:$8 sm:$0xf0]
  %vm828 = vcmask 1047556
  %v829 = vsel %vm828, %v827, %v825
  %830 = vrot.lane.b32.xlu0 %v829, 96
  %v831 = vpop.permute.xlu0 %830
  %vm832 = vcmask 1048320
  %s833 = scalar_lea.vmem %s1, 352
  %834 = vst.msk [vmem:[%s833] sm:$0xff] %vm832, %v831
  %s835 = scalar_lea.vmem %s0, 1539
  %v836 = vld [vmem:[%s835] ss:$8 sm:$0xf]
  %s837 = scalar_lea.vmem %s0, 1539
  %v838 = vld [vmem:[%s837] ss:$8 sm:$0xf0]
  %vm839 = vcmask 1047556
  %v840 = vsel %vm839, %v838, %v836
  %841 = vrot.lane.b32.xlu0 %v840, 96
  %v842 = vpop.permute.xlu0 %841
  %vm843 = vcmask 1048320
  %s844 = scalar_lea.vmem %s1, 384
  %845 = vst.msk [vmem:[%s844] sm:$0xff] %vm843, %v842
  %s846 = scalar_lea.vmem %s0, 1667
  %v847 = vld [vmem:[%s846] ss:$8 sm:$0xf]
  %s848 = scalar_lea.vmem %s0, 1667
  %v849 = vld [vmem:[%s848] ss:$8 sm:$0xf0]
  %vm850 = vcmask 1047556
  %v851 = vsel %vm850, %v849, %v847
  %852 = vrot.lane.b32.xlu0 %v851, 96
  %v853 = vpop.permute.xlu0 %852
  %vm854 = vcmask 1048320
  %s855 = scalar_lea.vmem %s1, 416
  %856 = vst.msk [vmem:[%s855] sm:$0xff] %vm854, %v853
  %s857 = scalar_lea.vmem %s0, 1795
  %v858 = vld [vmem:[%s857] ss:$8 sm:$0xf]
  %s859 = scalar_lea.vmem %s0, 1795
  %v860 = vld [vmem:[%s859] ss:$8 sm:$0xf0]
  %vm861 = vcmask 1047556
  %v862 = vsel %vm861, %v860, %v858
  %863 = vrot.lane.b32.xlu0 %v862, 96
  %v864 = vpop.permute.xlu0 %863
  %vm865 = vcmask 1048320
  %s866 = scalar_lea.vmem %s1, 448
  %867 = vst.msk [vmem:[%s866] sm:$0xff] %vm865, %v864
  %s868 = scalar_lea.vmem %s0, 1923
  %v869 = vld [vmem:[%s868] ss:$8 sm:$0xf]
  %s870 = scalar_lea.vmem %s0, 1923
  %v871 = vld [vmem:[%s870] ss:$8 sm:$0xf0]
  %vm872 = vcmask 1047556
  %v873 = vsel %vm872, %v871, %v869
  %874 = vrot.lane.b32.xlu0 %v873, 96
  %v875 = vpop.permute.xlu0 %874
  %vm876 = vcmask 1048320
  %s877 = scalar_lea.vmem %s1, 480
  %878 = vst.msk [vmem:[%s877] sm:$0xff] %vm876, %v875
  %s879 = scalar_lea.vmem %s0, 7
  %v880 = vld [vmem:[%s879] ss:$8 sm:$0xf]
  %s881 = scalar_lea.vmem %s0, 7
  %v882 = vld [vmem:[%s881] ss:$8 sm:$0xf0]
  %vm883 = vcmask 1047556
  %v884 = vsel %vm883, %v882, %v880
  %885 = vrot.lane.b32.xlu0 %v884, 96
  %v886 = vpop.permute.xlu0 %885
  %vm887 = vcmask 1048320
  %s888 = scalar_lea.vmem %s1, 8
  %889 = vst.msk [vmem:[%s888] sm:$0xff] %vm887, %v886
  %s890 = scalar_lea.vmem %s0, 135
  %v891 = vld [vmem:[%s890] ss:$8 sm:$0xf]
  %s892 = scalar_lea.vmem %s0, 135
  %v893 = vld [vmem:[%s892] ss:$8 sm:$0xf0]
  %vm894 = vcmask 1047556
  %v895 = vsel %vm894, %v893, %v891
  %896 = vrot.lane.b32.xlu0 %v895, 96
  %v897 = vpop.permute.xlu0 %896
  %vm898 = vcmask 1048320
  %s899 = scalar_lea.vmem %s1, 40
  %900 = vst.msk [vmem:[%s899] sm:$0xff] %vm898, %v897
  %s901 = scalar_lea.vmem %s0, 263
  %v902 = vld [vmem:[%s901] ss:$8 sm:$0xf]
  %s903 = scalar_lea.vmem %s0, 263
  %v904 = vld [vmem:[%s903] ss:$8 sm:$0xf0]
  %vm905 = vcmask 1047556
  %v906 = vsel %vm905, %v904, %v902
  %907 = vrot.lane.b32.xlu0 %v906, 96
  %v908 = vpop.permute.xlu0 %907
  %vm909 = vcmask 1048320
  %s910 = scalar_lea.vmem %s1, 72
  %911 = vst.msk [vmem:[%s910] sm:$0xff] %vm909, %v908
  %s912 = scalar_lea.vmem %s0, 391
  %v913 = vld [vmem:[%s912] ss:$8 sm:$0xf]
  %s914 = scalar_lea.vmem %s0, 391
  %v915 = vld [vmem:[%s914] ss:$8 sm:$0xf0]
  %vm916 = vcmask 1047556
  %v917 = vsel %vm916, %v915, %v913
  %918 = vrot.lane.b32.xlu0 %v917, 96
  %v919 = vpop.permute.xlu0 %918
  %vm920 = vcmask 1048320
  %s921 = scalar_lea.vmem %s1, 104
  %922 = vst.msk [vmem:[%s921] sm:$0xff] %vm920, %v919
  %s923 = scalar_lea.vmem %s0, 519
  %v924 = vld [vmem:[%s923] ss:$8 sm:$0xf]
  %s925 = scalar_lea.vmem %s0, 519
  %v926 = vld [vmem:[%s925] ss:$8 sm:$0xf0]
  %vm927 = vcmask 1047556
  %v928 = vsel %vm927, %v926, %v924
  %929 = vrot.lane.b32.xlu0 %v928, 96
  %v930 = vpop.permute.xlu0 %929
  %vm931 = vcmask 1048320
  %s932 = scalar_lea.vmem %s1, 136
  %933 = vst.msk [vmem:[%s932] sm:$0xff] %vm931, %v930
  %s934 = scalar_lea.vmem %s0, 647
  %v935 = vld [vmem:[%s934] ss:$8 sm:$0xf]
  %s936 = scalar_lea.vmem %s0, 647
  %v937 = vld [vmem:[%s936] ss:$8 sm:$0xf0]
  %vm938 = vcmask 1047556
  %v939 = vsel %vm938, %v937, %v935
  %940 = vrot.lane.b32.xlu0 %v939, 96
  %v941 = vpop.permute.xlu0 %940
  %vm942 = vcmask 1048320
  %s943 = scalar_lea.vmem %s1, 168
  %944 = vst.msk [vmem:[%s943] sm:$0xff] %vm942, %v941
  %s945 = scalar_lea.vmem %s0, 775
  %v946 = vld [vmem:[%s945] ss:$8 sm:$0xf]
  %s947 = scalar_lea.vmem %s0, 775
  %v948 = vld [vmem:[%s947] ss:$8 sm:$0xf0]
  %vm949 = vcmask 1047556
  %v950 = vsel %vm949, %v948, %v946
  %951 = vrot.lane.b32.xlu0 %v950, 96
  %v952 = vpop.permute.xlu0 %951
  %vm953 = vcmask 1048320
  %s954 = scalar_lea.vmem %s1, 200
  %955 = vst.msk [vmem:[%s954] sm:$0xff] %vm953, %v952
  %s956 = scalar_lea.vmem %s0, 903
  %v957 = vld [vmem:[%s956] ss:$8 sm:$0xf]
  %s958 = scalar_lea.vmem %s0, 903
  %v959 = vld [vmem:[%s958] ss:$8 sm:$0xf0]
  %vm960 = vcmask 1047556
  %v961 = vsel %vm960, %v959, %v957
  %962 = vrot.lane.b32.xlu0 %v961, 96
  %v963 = vpop.permute.xlu0 %962
  %vm964 = vcmask 1048320
  %s965 = scalar_lea.vmem %s1, 232
  %966 = vst.msk [vmem:[%s965] sm:$0xff] %vm964, %v963
  %s967 = scalar_lea.vmem %s0, 1031
  %v968 = vld [vmem:[%s967] ss:$8 sm:$0xf]
  %s969 = scalar_lea.vmem %s0, 1031
  %v970 = vld [vmem:[%s969] ss:$8 sm:$0xf0]
  %vm971 = vcmask 1047556
  %v972 = vsel %vm971, %v970, %v968
  %973 = vrot.lane.b32.xlu0 %v972, 96
  %v974 = vpop.permute.xlu0 %973
  %vm975 = vcmask 1048320
  %s976 = scalar_lea.vmem %s1, 264
  %977 = vst.msk [vmem:[%s976] sm:$0xff] %vm975, %v974
  %s978 = scalar_lea.vmem %s0, 1159
  %v979 = vld [vmem:[%s978] ss:$8 sm:$0xf]
  %s980 = scalar_lea.vmem %s0, 1159
  %v981 = vld [vmem:[%s980] ss:$8 sm:$0xf0]
  %vm982 = vcmask 1047556
  %v983 = vsel %vm982, %v981, %v979
  %984 = vrot.lane.b32.xlu0 %v983, 96
  %v985 = vpop.permute.xlu0 %984
  %vm986 = vcmask 1048320
  %s987 = scalar_lea.vmem %s1, 296
  %988 = vst.msk [vmem:[%s987] sm:$0xff] %vm986, %v985
  %s989 = scalar_lea.vmem %s0, 1287
  %v990 = vld [vmem:[%s989] ss:$8 sm:$0xf]
  %s991 = scalar_lea.vmem %s0, 1287
  %v992 = vld [vmem:[%s991] ss:$8 sm:$0xf0]
  %vm993 = vcmask 1047556
  %v994 = vsel %vm993, %v992, %v990
  %995 = vrot.lane.b32.xlu0 %v994, 96
  %v996 = vpop.permute.xlu0 %995
  %vm997 = vcmask 1048320
  %s998 = scalar_lea.vmem %s1, 328
  %999 = vst.msk [vmem:[%s998] sm:$0xff] %vm997, %v996
  %s1000 = scalar_lea.vmem %s0, 1415
  %v1001 = vld [vmem:[%s1000] ss:$8 sm:$0xf]
  %s1002 = scalar_lea.vmem %s0, 1415
  %v1003 = vld [vmem:[%s1002] ss:$8 sm:$0xf0]
  %vm1004 = vcmask 1047556
  %v1005 = vsel %vm1004, %v1003, %v1001
  %1006 = vrot.lane.b32.xlu0 %v1005, 96
  %v1007 = vpop.permute.xlu0 %1006
  %vm1008 = vcmask 1048320
  %s1009 = scalar_lea.vmem %s1, 360
  %1010 = vst.msk [vmem:[%s1009] sm:$0xff] %vm1008, %v1007
  %s1011 = scalar_lea.vmem %s0, 1543
  %v1012 = vld [vmem:[%s1011] ss:$8 sm:$0xf]
  %s1013 = scalar_lea.vmem %s0, 1543
  %v1014 = vld [vmem:[%s1013] ss:$8 sm:$0xf0]
  %vm1015 = vcmask 1047556
  %v1016 = vsel %vm1015, %v1014, %v1012
  %1017 = vrot.lane.b32.xlu0 %v1016, 96
  %v1018 = vpop.permute.xlu0 %1017
  %vm1019 = vcmask 1048320
  %s1020 = scalar_lea.vmem %s1, 392
  %1021 = vst.msk [vmem:[%s1020] sm:$0xff] %vm1019, %v1018
  %s1022 = scalar_lea.vmem %s0, 1671
  %v1023 = vld [vmem:[%s1022] ss:$8 sm:$0xf]
  %s1024 = scalar_lea.vmem %s0, 1671
  %v1025 = vld [vmem:[%s1024] ss:$8 sm:$0xf0]
  %vm1026 = vcmask 1047556
  %v1027 = vsel %vm1026, %v1025, %v1023
  %1028 = vrot.lane.b32.xlu0 %v1027, 96
  %v1029 = vpop.permute.xlu0 %1028
  %vm1030 = vcmask 1048320
  %s1031 = scalar_lea.vmem %s1, 424
  %1032 = vst.msk [vmem:[%s1031] sm:$0xff] %vm1030, %v1029
  %s1033 = scalar_lea.vmem %s0, 1799
  %v1034 = vld [vmem:[%s1033] ss:$8 sm:$0xf]
  %s1035 = scalar_lea.vmem %s0, 1799
  %v1036 = vld [vmem:[%s1035] ss:$8 sm:$0xf0]
  %vm1037 = vcmask 1047556
  %v1038 = vsel %vm1037, %v1036, %v1034
  %1039 = vrot.lane.b32.xlu0 %v1038, 96
  %v1040 = vpop.permute.xlu0 %1039
  %vm1041 = vcmask 1048320
  %s1042 = scalar_lea.vmem %s1, 456
  %1043 = vst.msk [vmem:[%s1042] sm:$0xff] %vm1041, %v1040
  %s1044 = scalar_lea.vmem %s0, 1927
  %v1045 = vld [vmem:[%s1044] ss:$8 sm:$0xf]
  %s1046 = scalar_lea.vmem %s0, 1927
  %v1047 = vld [vmem:[%s1046] ss:$8 sm:$0xf0]
  %vm1048 = vcmask 1047556
  %v1049 = vsel %vm1048, %v1047, %v1045
  %1050 = vrot.lane.b32.xlu0 %v1049, 96
  %v1051 = vpop.permute.xlu0 %1050
  %vm1052 = vcmask 1048320
  %s1053 = scalar_lea.vmem %s1, 488
  %1054 = vst.msk [vmem:[%s1053] sm:$0xff] %vm1052, %v1051
  %s1055 = scalar_lea.vmem %s0, 67
  %v1056 = vld [vmem:[%s1055] ss:$8 sm:$0xf]
  %s1057 = scalar_lea.vmem %s0, 67
  %v1058 = vld [vmem:[%s1057] ss:$8 sm:$0xf0]
  %vm1059 = vcmask 1047556
  %v1060 = vsel %vm1059, %v1058, %v1056
  %1061 = vrot.lane.b32.xlu0 %v1060, 96
  %v1062 = vpop.permute.xlu0 %1061
  %vm1063 = vcmask 1048320
  %s1064 = scalar_lea.vmem %s1, 16
  %1065 = vst.msk [vmem:[%s1064] sm:$0xff] %vm1063, %v1062
  %s1066 = scalar_lea.vmem %s0, 195
  %v1067 = vld [vmem:[%s1066] ss:$8 sm:$0xf]
  %s1068 = scalar_lea.vmem %s0, 195
  %v1069 = vld [vmem:[%s1068] ss:$8 sm:$0xf0]
  %vm1070 = vcmask 1047556
  %v1071 = vsel %vm1070, %v1069, %v1067
  %1072 = vrot.lane.b32.xlu0 %v1071, 96
  %v1073 = vpop.permute.xlu0 %1072
  %vm1074 = vcmask 1048320
  %s1075 = scalar_lea.vmem %s1, 48
  %1076 = vst.msk [vmem:[%s1075] sm:$0xff] %vm1074, %v1073
  %s1077 = scalar_lea.vmem %s0, 323
  %v1078 = vld [vmem:[%s1077] ss:$8 sm:$0xf]
  %s1079 = scalar_lea.vmem %s0, 323
  %v1080 = vld [vmem:[%s1079] ss:$8 sm:$0xf0]
  %vm1081 = vcmask 1047556
  %v1082 = vsel %vm1081, %v1080, %v1078
  %1083 = vrot.lane.b32.xlu0 %v1082, 96
  %v1084 = vpop.permute.xlu0 %1083
  %vm1085 = vcmask 1048320
  %s1086 = scalar_lea.vmem %s1, 80
  %1087 = vst.msk [vmem:[%s1086] sm:$0xff] %vm1085, %v1084
  %s1088 = scalar_lea.vmem %s0, 451
  %v1089 = vld [vmem:[%s1088] ss:$8 sm:$0xf]
  %s1090 = scalar_lea.vmem %s0, 451
  %v1091 = vld [vmem:[%s1090] ss:$8 sm:$0xf0]
  %vm1092 = vcmask 1047556
  %v1093 = vsel %vm1092, %v1091, %v1089
  %1094 = vrot.lane.b32.xlu0 %v1093, 96
  %v1095 = vpop.permute.xlu0 %1094
  %vm1096 = vcmask 1048320
  %s1097 = scalar_lea.vmem %s1, 112
  %1098 = vst.msk [vmem:[%s1097] sm:$0xff] %vm1096, %v1095
  %s1099 = scalar_lea.vmem %s0, 579
  %v1100 = vld [vmem:[%s1099] ss:$8 sm:$0xf]
  %s1101 = scalar_lea.vmem %s0, 579
  %v1102 = vld [vmem:[%s1101] ss:$8 sm:$0xf0]
  %vm1103 = vcmask 1047556
  %v1104 = vsel %vm1103, %v1102, %v1100
  %1105 = vrot.lane.b32.xlu0 %v1104, 96
  %v1106 = vpop.permute.xlu0 %1105
  %vm1107 = vcmask 1048320
  %s1108 = scalar_lea.vmem %s1, 144
  %1109 = vst.msk [vmem:[%s1108] sm:$0xff] %vm1107, %v1106
  %s1110 = scalar_lea.vmem %s0, 707
  %v1111 = vld [vmem:[%s1110] ss:$8 sm:$0xf]
  %s1112 = scalar_lea.vmem %s0, 707
  %v1113 = vld [vmem:[%s1112] ss:$8 sm:$0xf0]
  %vm1114 = vcmask 1047556
  %v1115 = vsel %vm1114, %v1113, %v1111
  %1116 = vrot.lane.b32.xlu0 %v1115, 96
  %v1117 = vpop.permute.xlu0 %1116
  %vm1118 = vcmask 1048320
  %s1119 = scalar_lea.vmem %s1, 176
  %1120 = vst.msk [vmem:[%s1119] sm:$0xff] %vm1118, %v1117
  %s1121 = scalar_lea.vmem %s0, 835
  %v1122 = vld [vmem:[%s1121] ss:$8 sm:$0xf]
  %s1123 = scalar_lea.vmem %s0, 835
  %v1124 = vld [vmem:[%s1123] ss:$8 sm:$0xf0]
  %vm1125 = vcmask 1047556
  %v1126 = vsel %vm1125, %v1124, %v1122
  %1127 = vrot.lane.b32.xlu0 %v1126, 96
  %v1128 = vpop.permute.xlu0 %1127
  %vm1129 = vcmask 1048320
  %s1130 = scalar_lea.vmem %s1, 208
  %1131 = vst.msk [vmem:[%s1130] sm:$0xff] %vm1129, %v1128
  %s1132 = scalar_lea.vmem %s0, 963
  %v1133 = vld [vmem:[%s1132] ss:$8 sm:$0xf]
  %s1134 = scalar_lea.vmem %s0, 963
  %v1135 = vld [vmem:[%s1134] ss:$8 sm:$0xf0]
  %vm1136 = vcmask 1047556
  %v1137 = vsel %vm1136, %v1135, %v1133
  %1138 = vrot.lane.b32.xlu0 %v1137, 96
  %v1139 = vpop.permute.xlu0 %1138
  %vm1140 = vcmask 1048320
  %s1141 = scalar_lea.vmem %s1, 240
  %1142 = vst.msk [vmem:[%s1141] sm:$0xff] %vm1140, %v1139
  %s1143 = scalar_lea.vmem %s0, 1091
  %v1144 = vld [vmem:[%s1143] ss:$8 sm:$0xf]
  %s1145 = scalar_lea.vmem %s0, 1091
  %v1146 = vld [vmem:[%s1145] ss:$8 sm:$0xf0]
  %vm1147 = vcmask 1047556
  %v1148 = vsel %vm1147, %v1146, %v1144
  %1149 = vrot.lane.b32.xlu0 %v1148, 96
  %v1150 = vpop.permute.xlu0 %1149
  %vm1151 = vcmask 1048320
  %s1152 = scalar_lea.vmem %s1, 272
  %1153 = vst.msk [vmem:[%s1152] sm:$0xff] %vm1151, %v1150
  %s1154 = scalar_lea.vmem %s0, 1219
  %v1155 = vld [vmem:[%s1154] ss:$8 sm:$0xf]
  %s1156 = scalar_lea.vmem %s0, 1219
  %v1157 = vld [vmem:[%s1156] ss:$8 sm:$0xf0]
  %vm1158 = vcmask 1047556
  %v1159 = vsel %vm1158, %v1157, %v1155
  %1160 = vrot.lane.b32.xlu0 %v1159, 96
  %v1161 = vpop.permute.xlu0 %1160
  %vm1162 = vcmask 1048320
  %s1163 = scalar_lea.vmem %s1, 304
  %1164 = vst.msk [vmem:[%s1163] sm:$0xff] %vm1162, %v1161
  %s1165 = scalar_lea.vmem %s0, 1347
  %v1166 = vld [vmem:[%s1165] ss:$8 sm:$0xf]
  %s1167 = scalar_lea.vmem %s0, 1347
  %v1168 = vld [vmem:[%s1167] ss:$8 sm:$0xf0]
  %vm1169 = vcmask 1047556
  %v1170 = vsel %vm1169, %v1168, %v1166
  %1171 = vrot.lane.b32.xlu0 %v1170, 96
  %v1172 = vpop.permute.xlu0 %1171
  %vm1173 = vcmask 1048320
  %s1174 = scalar_lea.vmem %s1, 336
  %1175 = vst.msk [vmem:[%s1174] sm:$0xff] %vm1173, %v1172
  %s1176 = scalar_lea.vmem %s0, 1475
  %v1177 = vld [vmem:[%s1176] ss:$8 sm:$0xf]
  %s1178 = scalar_lea.vmem %s0, 1475
  %v1179 = vld [vmem:[%s1178] ss:$8 sm:$0xf0]
  %vm1180 = vcmask 1047556
  %v1181 = vsel %vm1180, %v1179, %v1177
  %1182 = vrot.lane.b32.xlu0 %v1181, 96
  %v1183 = vpop.permute.xlu0 %1182
  %vm1184 = vcmask 1048320
  %s1185 = scalar_lea.vmem %s1, 368
  %1186 = vst.msk [vmem:[%s1185] sm:$0xff] %vm1184, %v1183
  %s1187 = scalar_lea.vmem %s0, 1603
  %v1188 = vld [vmem:[%s1187] ss:$8 sm:$0xf]
  %s1189 = scalar_lea.vmem %s0, 1603
  %v1190 = vld [vmem:[%s1189] ss:$8 sm:$0xf0]
  %vm1191 = vcmask 1047556
  %v1192 = vsel %vm1191, %v1190, %v1188
  %1193 = vrot.lane.b32.xlu0 %v1192, 96
  %v1194 = vpop.permute.xlu0 %1193
  %vm1195 = vcmask 1048320
  %s1196 = scalar_lea.vmem %s1, 400
  %1197 = vst.msk [vmem:[%s1196] sm:$0xff] %vm1195, %v1194
  %s1198 = scalar_lea.vmem %s0, 1731
  %v1199 = vld [vmem:[%s1198] ss:$8 sm:$0xf]
  %s1200 = scalar_lea.vmem %s0, 1731
  %v1201 = vld [vmem:[%s1200] ss:$8 sm:$0xf0]
  %vm1202 = vcmask 1047556
  %v1203 = vsel %vm1202, %v1201, %v1199
  %1204 = vrot.lane.b32.xlu0 %v1203, 96
  %v1205 = vpop.permute.xlu0 %1204
  %vm1206 = vcmask 1048320
  %s1207 = scalar_lea.vmem %s1, 432
  %1208 = vst.msk [vmem:[%s1207] sm:$0xff] %vm1206, %v1205
  %s1209 = scalar_lea.vmem %s0, 1859
  %v1210 = vld [vmem:[%s1209] ss:$8 sm:$0xf]
  %s1211 = scalar_lea.vmem %s0, 1859
  %v1212 = vld [vmem:[%s1211] ss:$8 sm:$0xf0]
  %vm1213 = vcmask 1047556
  %v1214 = vsel %vm1213, %v1212, %v1210
  %1215 = vrot.lane.b32.xlu0 %v1214, 96
  %v1216 = vpop.permute.xlu0 %1215
  %vm1217 = vcmask 1048320
  %s1218 = scalar_lea.vmem %s1, 464
  %1219 = vst.msk [vmem:[%s1218] sm:$0xff] %vm1217, %v1216
  %s1220 = scalar_lea.vmem %s0, 1987
  %v1221 = vld [vmem:[%s1220] ss:$8 sm:$0xf]
  %s1222 = scalar_lea.vmem %s0, 1987
  %v1223 = vld [vmem:[%s1222] ss:$8 sm:$0xf0]
  %vm1224 = vcmask 1047556
  %v1225 = vsel %vm1224, %v1223, %v1221
  %1226 = vrot.lane.b32.xlu0 %v1225, 96
  %v1227 = vpop.permute.xlu0 %1226
  %vm1228 = vcmask 1048320
  %s1229 = scalar_lea.vmem %s1, 496
  %1230 = vst.msk [vmem:[%s1229] sm:$0xff] %vm1228, %v1227
  %s1231 = scalar_lea.vmem %s0, 71
  %v1232 = vld [vmem:[%s1231] ss:$8 sm:$0xf]
  %s1233 = scalar_lea.vmem %s0, 71
  %v1234 = vld [vmem:[%s1233] ss:$8 sm:$0xf0]
  %vm1235 = vcmask 1047556
  %v1236 = vsel %vm1235, %v1234, %v1232
  %1237 = vrot.lane.b32.xlu0 %v1236, 96
  %v1238 = vpop.permute.xlu0 %1237
  %vm1239 = vcmask 1048320
  %s1240 = scalar_lea.vmem %s1, 24
  %1241 = vst.msk [vmem:[%s1240] sm:$0xff] %vm1239, %v1238
  %s1242 = scalar_lea.vmem %s0, 199
  %v1243 = vld [vmem:[%s1242] ss:$8 sm:$0xf]
  %s1244 = scalar_lea.vmem %s0, 199
  %v1245 = vld [vmem:[%s1244] ss:$8 sm:$0xf0]
  %vm1246 = vcmask 1047556
  %v1247 = vsel %vm1246, %v1245, %v1243
  %1248 = vrot.lane.b32.xlu0 %v1247, 96
  %v1249 = vpop.permute.xlu0 %1248
  %vm1250 = vcmask 1048320
  %s1251 = scalar_lea.vmem %s1, 56
  %1252 = vst.msk [vmem:[%s1251] sm:$0xff] %vm1250, %v1249
  %s1253 = scalar_lea.vmem %s0, 327
  %v1254 = vld [vmem:[%s1253] ss:$8 sm:$0xf]
  %s1255 = scalar_lea.vmem %s0, 327
  %v1256 = vld [vmem:[%s1255] ss:$8 sm:$0xf0]
  %vm1257 = vcmask 1047556
  %v1258 = vsel %vm1257, %v1256, %v1254
  %1259 = vrot.lane.b32.xlu0 %v1258, 96
  %v1260 = vpop.permute.xlu0 %1259
  %vm1261 = vcmask 1048320
  %s1262 = scalar_lea.vmem %s1, 88
  %1263 = vst.msk [vmem:[%s1262] sm:$0xff] %vm1261, %v1260
  %s1264 = scalar_lea.vmem %s0, 455
  %v1265 = vld [vmem:[%s1264] ss:$8 sm:$0xf]
  %s1266 = scalar_lea.vmem %s0, 455
  %v1267 = vld [vmem:[%s1266] ss:$8 sm:$0xf0]
  %vm1268 = vcmask 1047556
  %v1269 = vsel %vm1268, %v1267, %v1265
  %1270 = vrot.lane.b32.xlu0 %v1269, 96
  %v1271 = vpop.permute.xlu0 %1270
  %vm1272 = vcmask 1048320
  %s1273 = scalar_lea.vmem %s1, 120
  %1274 = vst.msk [vmem:[%s1273] sm:$0xff] %vm1272, %v1271
  %s1275 = scalar_lea.vmem %s0, 583
  %v1276 = vld [vmem:[%s1275] ss:$8 sm:$0xf]
  %s1277 = scalar_lea.vmem %s0, 583
  %v1278 = vld [vmem:[%s1277] ss:$8 sm:$0xf0]
  %vm1279 = vcmask 1047556
  %v1280 = vsel %vm1279, %v1278, %v1276
  %1281 = vrot.lane.b32.xlu0 %v1280, 96
  %v1282 = vpop.permute.xlu0 %1281
  %vm1283 = vcmask 1048320
  %s1284 = scalar_lea.vmem %s1, 152
  %1285 = vst.msk [vmem:[%s1284] sm:$0xff] %vm1283, %v1282
  %s1286 = scalar_lea.vmem %s0, 711
  %v1287 = vld [vmem:[%s1286] ss:$8 sm:$0xf]
  %s1288 = scalar_lea.vmem %s0, 711
  %v1289 = vld [vmem:[%s1288] ss:$8 sm:$0xf0]
  %vm1290 = vcmask 1047556
  %v1291 = vsel %vm1290, %v1289, %v1287
  %1292 = vrot.lane.b32.xlu0 %v1291, 96
  %v1293 = vpop.permute.xlu0 %1292
  %vm1294 = vcmask 1048320
  %s1295 = scalar_lea.vmem %s1, 184
  %1296 = vst.msk [vmem:[%s1295] sm:$0xff] %vm1294, %v1293
  %s1297 = scalar_lea.vmem %s0, 839
  %v1298 = vld [vmem:[%s1297] ss:$8 sm:$0xf]
  %s1299 = scalar_lea.vmem %s0, 839
  %v1300 = vld [vmem:[%s1299] ss:$8 sm:$0xf0]
  %vm1301 = vcmask 1047556
  %v1302 = vsel %vm1301, %v1300, %v1298
  %1303 = vrot.lane.b32.xlu0 %v1302, 96
  %v1304 = vpop.permute.xlu0 %1303
  %vm1305 = vcmask 1048320
  %s1306 = scalar_lea.vmem %s1, 216
  %1307 = vst.msk [vmem:[%s1306] sm:$0xff] %vm1305, %v1304
  %s1308 = scalar_lea.vmem %s0, 967
  %v1309 = vld [vmem:[%s1308] ss:$8 sm:$0xf]
  %s1310 = scalar_lea.vmem %s0, 967
  %v1311 = vld [vmem:[%s1310] ss:$8 sm:$0xf0]
  %vm1312 = vcmask 1047556
  %v1313 = vsel %vm1312, %v1311, %v1309
  %1314 = vrot.lane.b32.xlu0 %v1313, 96
  %v1315 = vpop.permute.xlu0 %1314
  %vm1316 = vcmask 1048320
  %s1317 = scalar_lea.vmem %s1, 248
  %1318 = vst.msk [vmem:[%s1317] sm:$0xff] %vm1316, %v1315
  %s1319 = scalar_lea.vmem %s0, 1095
  %v1320 = vld [vmem:[%s1319] ss:$8 sm:$0xf]
  %s1321 = scalar_lea.vmem %s0, 1095
  %v1322 = vld [vmem:[%s1321] ss:$8 sm:$0xf0]
  %vm1323 = vcmask 1047556
  %v1324 = vsel %vm1323, %v1322, %v1320
  %1325 = vrot.lane.b32.xlu0 %v1324, 96
  %v1326 = vpop.permute.xlu0 %1325
  %vm1327 = vcmask 1048320
  %s1328 = scalar_lea.vmem %s1, 280
  %1329 = vst.msk [vmem:[%s1328] sm:$0xff] %vm1327, %v1326
  %s1330 = scalar_lea.vmem %s0, 1223
  %v1331 = vld [vmem:[%s1330] ss:$8 sm:$0xf]
  %s1332 = scalar_lea.vmem %s0, 1223
  %v1333 = vld [vmem:[%s1332] ss:$8 sm:$0xf0]
  %vm1334 = vcmask 1047556
  %v1335 = vsel %vm1334, %v1333, %v1331
  %1336 = vrot.lane.b32.xlu0 %v1335, 96
  %v1337 = vpop.permute.xlu0 %1336
  %vm1338 = vcmask 1048320
  %s1339 = scalar_lea.vmem %s1, 312
  %1340 = vst.msk [vmem:[%s1339] sm:$0xff] %vm1338, %v1337
  %s1341 = scalar_lea.vmem %s0, 1351
  %v1342 = vld [vmem:[%s1341] ss:$8 sm:$0xf]
  %s1343 = scalar_lea.vmem %s0, 1351
  %v1344 = vld [vmem:[%s1343] ss:$8 sm:$0xf0]
  %vm1345 = vcmask 1047556
  %v1346 = vsel %vm1345, %v1344, %v1342
  %1347 = vrot.lane.b32.xlu0 %v1346, 96
  %v1348 = vpop.permute.xlu0 %1347
  %vm1349 = vcmask 1048320
  %s1350 = scalar_lea.vmem %s1, 344
  %1351 = vst.msk [vmem:[%s1350] sm:$0xff] %vm1349, %v1348
  %s1352 = scalar_lea.vmem %s0, 1479
  %v1353 = vld [vmem:[%s1352] ss:$8 sm:$0xf]
  %s1354 = scalar_lea.vmem %s0, 1479
  %v1355 = vld [vmem:[%s1354] ss:$8 sm:$0xf0]
  %vm1356 = vcmask 1047556
  %v1357 = vsel %vm1356, %v1355, %v1353
  %1358 = vrot.lane.b32.xlu0 %v1357, 96
  %v1359 = vpop.permute.xlu0 %1358
  %vm1360 = vcmask 1048320
  %s1361 = scalar_lea.vmem %s1, 376
  %1362 = vst.msk [vmem:[%s1361] sm:$0xff] %vm1360, %v1359
  %s1363 = scalar_lea.vmem %s0, 1607
  %v1364 = vld [vmem:[%s1363] ss:$8 sm:$0xf]
  %s1365 = scalar_lea.vmem %s0, 1607
  %v1366 = vld [vmem:[%s1365] ss:$8 sm:$0xf0]
  %vm1367 = vcmask 1047556
  %v1368 = vsel %vm1367, %v1366, %v1364
  %1369 = vrot.lane.b32.xlu0 %v1368, 96
  %v1370 = vpop.permute.xlu0 %1369
  %vm1371 = vcmask 1048320
  %s1372 = scalar_lea.vmem %s1, 408
  %1373 = vst.msk [vmem:[%s1372] sm:$0xff] %vm1371, %v1370
  %s1374 = scalar_lea.vmem %s0, 1735
  %v1375 = vld [vmem:[%s1374] ss:$8 sm:$0xf]
  %s1376 = scalar_lea.vmem %s0, 1735
  %v1377 = vld [vmem:[%s1376] ss:$8 sm:$0xf0]
  %vm1378 = vcmask 1047556
  %v1379 = vsel %vm1378, %v1377, %v1375
  %1380 = vrot.lane.b32.xlu0 %v1379, 96
  %v1381 = vpop.permute.xlu0 %1380
  %vm1382 = vcmask 1048320
  %s1383 = scalar_lea.vmem %s1, 440
  %1384 = vst.msk [vmem:[%s1383] sm:$0xff] %vm1382, %v1381
  %s1385 = scalar_lea.vmem %s0, 1863
  %v1386 = vld [vmem:[%s1385] ss:$8 sm:$0xf]
  %s1387 = scalar_lea.vmem %s0, 1863
  %v1388 = vld [vmem:[%s1387] ss:$8 sm:$0xf0]
  %vm1389 = vcmask 1047556
  %v1390 = vsel %vm1389, %v1388, %v1386
  %1391 = vrot.lane.b32.xlu0 %v1390, 96
  %v1392 = vpop.permute.xlu0 %1391
  %vm1393 = vcmask 1048320
  %s1394 = scalar_lea.vmem %s1, 472
  %1395 = vst.msk [vmem:[%s1394] sm:$0xff] %vm1393, %v1392
  %s1396 = scalar_lea.vmem %s0, 1991
  %v1397 = vld [vmem:[%s1396] ss:$8 sm:$0xf]
  %s1398 = scalar_lea.vmem %s0, 1991
  %v1399 = vld [vmem:[%s1398] ss:$8 sm:$0xf0]
  %vm1400 = vcmask 1047556
  %v1401 = vsel %vm1400, %v1399, %v1397
  %1402 = vrot.lane.b32.xlu0 %v1401, 96
  %v1403 = vpop.permute.xlu0 %1402
  %vm1404 = vcmask 1048320
  %s1405 = scalar_lea.vmem %s1, 504
  %1406 = vst.msk [vmem:[%s1405] sm:$0xff] %vm1404, %v1403
  %s1407 = scalar_lea.vmem %s0, 2
  %v1408 = vld [vmem:[%s1407] ss:$8 sm:$0xf]
  %s1409 = scalar_lea.vmem %s0, 2
  %v1410 = vld [vmem:[%s1409] ss:$8 sm:$0xf0]
  %vm1411 = vcmask 1047556
  %v1412 = vsel %vm1411, %v1410, %v1408
  %1413 = vrot.lane.b32.xlu0 %v1412, 64
  %v1414 = vpop.permute.xlu0 %1413
  %vm1415 = vcmask 785920
  %1416 = vst.msk [vmem:[%s1] sm:$0xff] %vm1415, %v1414
  %s1417 = scalar_lea.vmem %s0, 130
  %v1418 = vld [vmem:[%s1417] ss:$8 sm:$0xf]
  %s1419 = scalar_lea.vmem %s0, 130
  %v1420 = vld [vmem:[%s1419] ss:$8 sm:$0xf0]
  %vm1421 = vcmask 1047556
  %v1422 = vsel %vm1421, %v1420, %v1418
  %1423 = vrot.lane.b32.xlu0 %v1422, 64
  %v1424 = vpop.permute.xlu0 %1423
  %vm1425 = vcmask 785920
  %s1426 = scalar_lea.vmem %s1, 32
  %1427 = vst.msk [vmem:[%s1426] sm:$0xff] %vm1425, %v1424
  %s1428 = scalar_lea.vmem %s0, 258
  %v1429 = vld [vmem:[%s1428] ss:$8 sm:$0xf]
  %s1430 = scalar_lea.vmem %s0, 258
  %v1431 = vld [vmem:[%s1430] ss:$8 sm:$0xf0]
  %vm1432 = vcmask 1047556
  %v1433 = vsel %vm1432, %v1431, %v1429
  %1434 = vrot.lane.b32.xlu0 %v1433, 64
  %v1435 = vpop.permute.xlu0 %1434
  %vm1436 = vcmask 785920
  %s1437 = scalar_lea.vmem %s1, 64
  %1438 = vst.msk [vmem:[%s1437] sm:$0xff] %vm1436, %v1435
  %s1439 = scalar_lea.vmem %s0, 386
  %v1440 = vld [vmem:[%s1439] ss:$8 sm:$0xf]
  %s1441 = scalar_lea.vmem %s0, 386
  %v1442 = vld [vmem:[%s1441] ss:$8 sm:$0xf0]
  %vm1443 = vcmask 1047556
  %v1444 = vsel %vm1443, %v1442, %v1440
  %1445 = vrot.lane.b32.xlu0 %v1444, 64
  %v1446 = vpop.permute.xlu0 %1445
  %vm1447 = vcmask 785920
  %s1448 = scalar_lea.vmem %s1, 96
  %1449 = vst.msk [vmem:[%s1448] sm:$0xff] %vm1447, %v1446
  %s1450 = scalar_lea.vmem %s0, 514
  %v1451 = vld [vmem:[%s1450] ss:$8 sm:$0xf]
  %s1452 = scalar_lea.vmem %s0, 514
  %v1453 = vld [vmem:[%s1452] ss:$8 sm:$0xf0]
  %vm1454 = vcmask 1047556
  %v1455 = vsel %vm1454, %v1453, %v1451
  %1456 = vrot.lane.b32.xlu0 %v1455, 64
  %v1457 = vpop.permute.xlu0 %1456
  %vm1458 = vcmask 785920
  %s1459 = scalar_lea.vmem %s1, 128
  %1460 = vst.msk [vmem:[%s1459] sm:$0xff] %vm1458, %v1457
  %s1461 = scalar_lea.vmem %s0, 642
  %v1462 = vld [vmem:[%s1461] ss:$8 sm:$0xf]
  %s1463 = scalar_lea.vmem %s0, 642
  %v1464 = vld [vmem:[%s1463] ss:$8 sm:$0xf0]
  %vm1465 = vcmask 1047556
  %v1466 = vsel %vm1465, %v1464, %v1462
  %1467 = vrot.lane.b32.xlu0 %v1466, 64
  %v1468 = vpop.permute.xlu0 %1467
  %vm1469 = vcmask 785920
  %s1470 = scalar_lea.vmem %s1, 160
  %1471 = vst.msk [vmem:[%s1470] sm:$0xff] %vm1469, %v1468
  %s1472 = scalar_lea.vmem %s0, 770
  %v1473 = vld [vmem:[%s1472] ss:$8 sm:$0xf]
  %s1474 = scalar_lea.vmem %s0, 770
  %v1475 = vld [vmem:[%s1474] ss:$8 sm:$0xf0]
  %vm1476 = vcmask 1047556
  %v1477 = vsel %vm1476, %v1475, %v1473
  %1478 = vrot.lane.b32.xlu0 %v1477, 64
  %v1479 = vpop.permute.xlu0 %1478
  %vm1480 = vcmask 785920
  %s1481 = scalar_lea.vmem %s1, 192
  %1482 = vst.msk [vmem:[%s1481] sm:$0xff] %vm1480, %v1479
  %s1483 = scalar_lea.vmem %s0, 898
  %v1484 = vld [vmem:[%s1483] ss:$8 sm:$0xf]
  %s1485 = scalar_lea.vmem %s0, 898
  %v1486 = vld [vmem:[%s1485] ss:$8 sm:$0xf0]
  %vm1487 = vcmask 1047556
  %v1488 = vsel %vm1487, %v1486, %v1484
  %1489 = vrot.lane.b32.xlu0 %v1488, 64
  %v1490 = vpop.permute.xlu0 %1489
  %vm1491 = vcmask 785920
  %s1492 = scalar_lea.vmem %s1, 224
  %1493 = vst.msk [vmem:[%s1492] sm:$0xff] %vm1491, %v1490
  %s1494 = scalar_lea.vmem %s0, 1026
  %v1495 = vld [vmem:[%s1494] ss:$8 sm:$0xf]
  %s1496 = scalar_lea.vmem %s0, 1026
  %v1497 = vld [vmem:[%s1496] ss:$8 sm:$0xf0]
  %vm1498 = vcmask 1047556
  %v1499 = vsel %vm1498, %v1497, %v1495
  %1500 = vrot.lane.b32.xlu0 %v1499, 64
  %v1501 = vpop.permute.xlu0 %1500
  %vm1502 = vcmask 785920
  %s1503 = scalar_lea.vmem %s1, 256
  %1504 = vst.msk [vmem:[%s1503] sm:$0xff] %vm1502, %v1501
  %s1505 = scalar_lea.vmem %s0, 1154
  %v1506 = vld [vmem:[%s1505] ss:$8 sm:$0xf]
  %s1507 = scalar_lea.vmem %s0, 1154
  %v1508 = vld [vmem:[%s1507] ss:$8 sm:$0xf0]
  %vm1509 = vcmask 1047556
  %v1510 = vsel %vm1509, %v1508, %v1506
  %1511 = vrot.lane.b32.xlu0 %v1510, 64
  %v1512 = vpop.permute.xlu0 %1511
  %vm1513 = vcmask 785920
  %s1514 = scalar_lea.vmem %s1, 288
  %1515 = vst.msk [vmem:[%s1514] sm:$0xff] %vm1513, %v1512
  %s1516 = scalar_lea.vmem %s0, 1282
  %v1517 = vld [vmem:[%s1516] ss:$8 sm:$0xf]
  %s1518 = scalar_lea.vmem %s0, 1282
  %v1519 = vld [vmem:[%s1518] ss:$8 sm:$0xf0]
  %vm1520 = vcmask 1047556
  %v1521 = vsel %vm1520, %v1519, %v1517
  %1522 = vrot.lane.b32.xlu0 %v1521, 64
  %v1523 = vpop.permute.xlu0 %1522
  %vm1524 = vcmask 785920
  %s1525 = scalar_lea.vmem %s1, 320
  %1526 = vst.msk [vmem:[%s1525] sm:$0xff] %vm1524, %v1523
  %s1527 = scalar_lea.vmem %s0, 1410
  %v1528 = vld [vmem:[%s1527] ss:$8 sm:$0xf]
  %s1529 = scalar_lea.vmem %s0, 1410
  %v1530 = vld [vmem:[%s1529] ss:$8 sm:$0xf0]
  %vm1531 = vcmask 1047556
  %v1532 = vsel %vm1531, %v1530, %v1528
  %1533 = vrot.lane.b32.xlu0 %v1532, 64
  %v1534 = vpop.permute.xlu0 %1533
  %vm1535 = vcmask 785920
  %s1536 = scalar_lea.vmem %s1, 352
  %1537 = vst.msk [vmem:[%s1536] sm:$0xff] %vm1535, %v1534
  %s1538 = scalar_lea.vmem %s0, 1538
  %v1539 = vld [vmem:[%s1538] ss:$8 sm:$0xf]
  %s1540 = scalar_lea.vmem %s0, 1538
  %v1541 = vld [vmem:[%s1540] ss:$8 sm:$0xf0]
  %vm1542 = vcmask 1047556
  %v1543 = vsel %vm1542, %v1541, %v1539
  %1544 = vrot.lane.b32.xlu0 %v1543, 64
  %v1545 = vpop.permute.xlu0 %1544
  %vm1546 = vcmask 785920
  %s1547 = scalar_lea.vmem %s1, 384
  %1548 = vst.msk [vmem:[%s1547] sm:$0xff] %vm1546, %v1545
  %s1549 = scalar_lea.vmem %s0, 1666
  %v1550 = vld [vmem:[%s1549] ss:$8 sm:$0xf]
  %s1551 = scalar_lea.vmem %s0, 1666
  %v1552 = vld [vmem:[%s1551] ss:$8 sm:$0xf0]
  %vm1553 = vcmask 1047556
  %v1554 = vsel %vm1553, %v1552, %v1550
  %1555 = vrot.lane.b32.xlu0 %v1554, 64
  %v1556 = vpop.permute.xlu0 %1555
  %vm1557 = vcmask 785920
  %s1558 = scalar_lea.vmem %s1, 416
  %1559 = vst.msk [vmem:[%s1558] sm:$0xff] %vm1557, %v1556
  %s1560 = scalar_lea.vmem %s0, 1794
  %v1561 = vld [vmem:[%s1560] ss:$8 sm:$0xf]
  %s1562 = scalar_lea.vmem %s0, 1794
  %v1563 = vld [vmem:[%s1562] ss:$8 sm:$0xf0]
  %vm1564 = vcmask 1047556
  %v1565 = vsel %vm1564, %v1563, %v1561
  %1566 = vrot.lane.b32.xlu0 %v1565, 64
  %v1567 = vpop.permute.xlu0 %1566
  %vm1568 = vcmask 785920
  %s1569 = scalar_lea.vmem %s1, 448
  %1570 = vst.msk [vmem:[%s1569] sm:$0xff] %vm1568, %v1567
  %s1571 = scalar_lea.vmem %s0, 1922
  %v1572 = vld [vmem:[%s1571] ss:$8 sm:$0xf]
  %s1573 = scalar_lea.vmem %s0, 1922
  %v1574 = vld [vmem:[%s1573] ss:$8 sm:$0xf0]
  %vm1575 = vcmask 1047556
  %v1576 = vsel %vm1575, %v1574, %v1572
  %1577 = vrot.lane.b32.xlu0 %v1576, 64
  %v1578 = vpop.permute.xlu0 %1577
  %vm1579 = vcmask 785920
  %s1580 = scalar_lea.vmem %s1, 480
  %1581 = vst.msk [vmem:[%s1580] sm:$0xff] %vm1579, %v1578
  %s1582 = scalar_lea.vmem %s0, 6
  %v1583 = vld [vmem:[%s1582] ss:$8 sm:$0xf]
  %s1584 = scalar_lea.vmem %s0, 6
  %v1585 = vld [vmem:[%s1584] ss:$8 sm:$0xf0]
  %vm1586 = vcmask 1047556
  %v1587 = vsel %vm1586, %v1585, %v1583
  %1588 = vrot.lane.b32.xlu0 %v1587, 64
  %v1589 = vpop.permute.xlu0 %1588
  %vm1590 = vcmask 785920
  %s1591 = scalar_lea.vmem %s1, 8
  %1592 = vst.msk [vmem:[%s1591] sm:$0xff] %vm1590, %v1589
  %s1593 = scalar_lea.vmem %s0, 134
  %v1594 = vld [vmem:[%s1593] ss:$8 sm:$0xf]
  %s1595 = scalar_lea.vmem %s0, 134
  %v1596 = vld [vmem:[%s1595] ss:$8 sm:$0xf0]
  %vm1597 = vcmask 1047556
  %v1598 = vsel %vm1597, %v1596, %v1594
  %1599 = vrot.lane.b32.xlu0 %v1598, 64
  %v1600 = vpop.permute.xlu0 %1599
  %vm1601 = vcmask 785920
  %s1602 = scalar_lea.vmem %s1, 40
  %1603 = vst.msk [vmem:[%s1602] sm:$0xff] %vm1601, %v1600
  %s1604 = scalar_lea.vmem %s0, 262
  %v1605 = vld [vmem:[%s1604] ss:$8 sm:$0xf]
  %s1606 = scalar_lea.vmem %s0, 262
  %v1607 = vld [vmem:[%s1606] ss:$8 sm:$0xf0]
  %vm1608 = vcmask 1047556
  %v1609 = vsel %vm1608, %v1607, %v1605
  %1610 = vrot.lane.b32.xlu0 %v1609, 64
  %v1611 = vpop.permute.xlu0 %1610
  %vm1612 = vcmask 785920
  %s1613 = scalar_lea.vmem %s1, 72
  %1614 = vst.msk [vmem:[%s1613] sm:$0xff] %vm1612, %v1611
  %s1615 = scalar_lea.vmem %s0, 390
  %v1616 = vld [vmem:[%s1615] ss:$8 sm:$0xf]
  %s1617 = scalar_lea.vmem %s0, 390
  %v1618 = vld [vmem:[%s1617] ss:$8 sm:$0xf0]
  %vm1619 = vcmask 1047556
  %v1620 = vsel %vm1619, %v1618, %v1616
  %1621 = vrot.lane.b32.xlu0 %v1620, 64
  %v1622 = vpop.permute.xlu0 %1621
  %vm1623 = vcmask 785920
  %s1624 = scalar_lea.vmem %s1, 104
  %1625 = vst.msk [vmem:[%s1624] sm:$0xff] %vm1623, %v1622
  %s1626 = scalar_lea.vmem %s0, 518
  %v1627 = vld [vmem:[%s1626] ss:$8 sm:$0xf]
  %s1628 = scalar_lea.vmem %s0, 518
  %v1629 = vld [vmem:[%s1628] ss:$8 sm:$0xf0]
  %vm1630 = vcmask 1047556
  %v1631 = vsel %vm1630, %v1629, %v1627
  %1632 = vrot.lane.b32.xlu0 %v1631, 64
  %v1633 = vpop.permute.xlu0 %1632
  %vm1634 = vcmask 785920
  %s1635 = scalar_lea.vmem %s1, 136
  %1636 = vst.msk [vmem:[%s1635] sm:$0xff] %vm1634, %v1633
  %s1637 = scalar_lea.vmem %s0, 646
  %v1638 = vld [vmem:[%s1637] ss:$8 sm:$0xf]
  %s1639 = scalar_lea.vmem %s0, 646
  %v1640 = vld [vmem:[%s1639] ss:$8 sm:$0xf0]
  %vm1641 = vcmask 1047556
  %v1642 = vsel %vm1641, %v1640, %v1638
  %1643 = vrot.lane.b32.xlu0 %v1642, 64
  %v1644 = vpop.permute.xlu0 %1643
  %vm1645 = vcmask 785920
  %s1646 = scalar_lea.vmem %s1, 168
  %1647 = vst.msk [vmem:[%s1646] sm:$0xff] %vm1645, %v1644
  %s1648 = scalar_lea.vmem %s0, 774
  %v1649 = vld [vmem:[%s1648] ss:$8 sm:$0xf]
  %s1650 = scalar_lea.vmem %s0, 774
  %v1651 = vld [vmem:[%s1650] ss:$8 sm:$0xf0]
  %vm1652 = vcmask 1047556
  %v1653 = vsel %vm1652, %v1651, %v1649
  %1654 = vrot.lane.b32.xlu0 %v1653, 64
  %v1655 = vpop.permute.xlu0 %1654
  %vm1656 = vcmask 785920
  %s1657 = scalar_lea.vmem %s1, 200
  %1658 = vst.msk [vmem:[%s1657] sm:$0xff] %vm1656, %v1655
  %s1659 = scalar_lea.vmem %s0, 902
  %v1660 = vld [vmem:[%s1659] ss:$8 sm:$0xf]
  %s1661 = scalar_lea.vmem %s0, 902
  %v1662 = vld [vmem:[%s1661] ss:$8 sm:$0xf0]
  %vm1663 = vcmask 1047556
  %v1664 = vsel %vm1663, %v1662, %v1660
  %1665 = vrot.lane.b32.xlu0 %v1664, 64
  %v1666 = vpop.permute.xlu0 %1665
  %vm1667 = vcmask 785920
  %s1668 = scalar_lea.vmem %s1, 232
  %1669 = vst.msk [vmem:[%s1668] sm:$0xff] %vm1667, %v1666
  %s1670 = scalar_lea.vmem %s0, 1030
  %v1671 = vld [vmem:[%s1670] ss:$8 sm:$0xf]
  %s1672 = scalar_lea.vmem %s0, 1030
  %v1673 = vld [vmem:[%s1672] ss:$8 sm:$0xf0]
  %vm1674 = vcmask 1047556
  %v1675 = vsel %vm1674, %v1673, %v1671
  %1676 = vrot.lane.b32.xlu0 %v1675, 64
  %v1677 = vpop.permute.xlu0 %1676
  %vm1678 = vcmask 785920
  %s1679 = scalar_lea.vmem %s1, 264
  %1680 = vst.msk [vmem:[%s1679] sm:$0xff] %vm1678, %v1677
  %s1681 = scalar_lea.vmem %s0, 1158
  %v1682 = vld [vmem:[%s1681] ss:$8 sm:$0xf]
  %s1683 = scalar_lea.vmem %s0, 1158
  %v1684 = vld [vmem:[%s1683] ss:$8 sm:$0xf0]
  %vm1685 = vcmask 1047556
  %v1686 = vsel %vm1685, %v1684, %v1682
  %1687 = vrot.lane.b32.xlu0 %v1686, 64
  %v1688 = vpop.permute.xlu0 %1687
  %vm1689 = vcmask 785920
  %s1690 = scalar_lea.vmem %s1, 296
  %1691 = vst.msk [vmem:[%s1690] sm:$0xff] %vm1689, %v1688
  %s1692 = scalar_lea.vmem %s0, 1286
  %v1693 = vld [vmem:[%s1692] ss:$8 sm:$0xf]
  %s1694 = scalar_lea.vmem %s0, 1286
  %v1695 = vld [vmem:[%s1694] ss:$8 sm:$0xf0]
  %vm1696 = vcmask 1047556
  %v1697 = vsel %vm1696, %v1695, %v1693
  %1698 = vrot.lane.b32.xlu0 %v1697, 64
  %v1699 = vpop.permute.xlu0 %1698
  %vm1700 = vcmask 785920
  %s1701 = scalar_lea.vmem %s1, 328
  %1702 = vst.msk [vmem:[%s1701] sm:$0xff] %vm1700, %v1699
  %s1703 = scalar_lea.vmem %s0, 1414
  %v1704 = vld [vmem:[%s1703] ss:$8 sm:$0xf]
  %s1705 = scalar_lea.vmem %s0, 1414
  %v1706 = vld [vmem:[%s1705] ss:$8 sm:$0xf0]
  %vm1707 = vcmask 1047556
  %v1708 = vsel %vm1707, %v1706, %v1704
  %1709 = vrot.lane.b32.xlu0 %v1708, 64
  %v1710 = vpop.permute.xlu0 %1709
  %vm1711 = vcmask 785920
  %s1712 = scalar_lea.vmem %s1, 360
  %1713 = vst.msk [vmem:[%s1712] sm:$0xff] %vm1711, %v1710
  %s1714 = scalar_lea.vmem %s0, 1542
  %v1715 = vld [vmem:[%s1714] ss:$8 sm:$0xf]
  %s1716 = scalar_lea.vmem %s0, 1542
  %v1717 = vld [vmem:[%s1716] ss:$8 sm:$0xf0]
  %vm1718 = vcmask 1047556
  %v1719 = vsel %vm1718, %v1717, %v1715
  %1720 = vrot.lane.b32.xlu0 %v1719, 64
  %v1721 = vpop.permute.xlu0 %1720
  %vm1722 = vcmask 785920
  %s1723 = scalar_lea.vmem %s1, 392
  %1724 = vst.msk [vmem:[%s1723] sm:$0xff] %vm1722, %v1721
  %s1725 = scalar_lea.vmem %s0, 1670
  %v1726 = vld [vmem:[%s1725] ss:$8 sm:$0xf]
  %s1727 = scalar_lea.vmem %s0, 1670
  %v1728 = vld [vmem:[%s1727] ss:$8 sm:$0xf0]
  %vm1729 = vcmask 1047556
  %v1730 = vsel %vm1729, %v1728, %v1726
  %1731 = vrot.lane.b32.xlu0 %v1730, 64
  %v1732 = vpop.permute.xlu0 %1731
  %vm1733 = vcmask 785920
  %s1734 = scalar_lea.vmem %s1, 424
  %1735 = vst.msk [vmem:[%s1734] sm:$0xff] %vm1733, %v1732
  %s1736 = scalar_lea.vmem %s0, 1798
  %v1737 = vld [vmem:[%s1736] ss:$8 sm:$0xf]
  %s1738 = scalar_lea.vmem %s0, 1798
  %v1739 = vld [vmem:[%s1738] ss:$8 sm:$0xf0]
  %vm1740 = vcmask 1047556
  %v1741 = vsel %vm1740, %v1739, %v1737
  %1742 = vrot.lane.b32.xlu0 %v1741, 64
  %v1743 = vpop.permute.xlu0 %1742
  %vm1744 = vcmask 785920
  %s1745 = scalar_lea.vmem %s1, 456
  %1746 = vst.msk [vmem:[%s1745] sm:$0xff] %vm1744, %v1743
  %s1747 = scalar_lea.vmem %s0, 1926
  %v1748 = vld [vmem:[%s1747] ss:$8 sm:$0xf]
  %s1749 = scalar_lea.vmem %s0, 1926
  %v1750 = vld [vmem:[%s1749] ss:$8 sm:$0xf0]
  %vm1751 = vcmask 1047556
  %v1752 = vsel %vm1751, %v1750, %v1748
  %1753 = vrot.lane.b32.xlu0 %v1752, 64
  %v1754 = vpop.permute.xlu0 %1753
  %vm1755 = vcmask 785920
  %s1756 = scalar_lea.vmem %s1, 488
  %1757 = vst.msk [vmem:[%s1756] sm:$0xff] %vm1755, %v1754
  %s1758 = scalar_lea.vmem %s0, 66
  %v1759 = vld [vmem:[%s1758] ss:$8 sm:$0xf]
  %s1760 = scalar_lea.vmem %s0, 66
  %v1761 = vld [vmem:[%s1760] ss:$8 sm:$0xf0]
  %vm1762 = vcmask 1047556
  %v1763 = vsel %vm1762, %v1761, %v1759
  %1764 = vrot.lane.b32.xlu0 %v1763, 64
  %v1765 = vpop.permute.xlu0 %1764
  %vm1766 = vcmask 785920
  %s1767 = scalar_lea.vmem %s1, 16
  %1768 = vst.msk [vmem:[%s1767] sm:$0xff] %vm1766, %v1765
  %s1769 = scalar_lea.vmem %s0, 194
  %v1770 = vld [vmem:[%s1769] ss:$8 sm:$0xf]
  %s1771 = scalar_lea.vmem %s0, 194
  %v1772 = vld [vmem:[%s1771] ss:$8 sm:$0xf0]
  %vm1773 = vcmask 1047556
  %v1774 = vsel %vm1773, %v1772, %v1770
  %1775 = vrot.lane.b32.xlu0 %v1774, 64
  %v1776 = vpop.permute.xlu0 %1775
  %vm1777 = vcmask 785920
  %s1778 = scalar_lea.vmem %s1, 48
  %1779 = vst.msk [vmem:[%s1778] sm:$0xff] %vm1777, %v1776
  %s1780 = scalar_lea.vmem %s0, 322
  %v1781 = vld [vmem:[%s1780] ss:$8 sm:$0xf]
  %s1782 = scalar_lea.vmem %s0, 322
  %v1783 = vld [vmem:[%s1782] ss:$8 sm:$0xf0]
  %vm1784 = vcmask 1047556
  %v1785 = vsel %vm1784, %v1783, %v1781
  %1786 = vrot.lane.b32.xlu0 %v1785, 64
  %v1787 = vpop.permute.xlu0 %1786
  %vm1788 = vcmask 785920
  %s1789 = scalar_lea.vmem %s1, 80
  %1790 = vst.msk [vmem:[%s1789] sm:$0xff] %vm1788, %v1787
  %s1791 = scalar_lea.vmem %s0, 450
  %v1792 = vld [vmem:[%s1791] ss:$8 sm:$0xf]
  %s1793 = scalar_lea.vmem %s0, 450
  %v1794 = vld [vmem:[%s1793] ss:$8 sm:$0xf0]
  %vm1795 = vcmask 1047556
  %v1796 = vsel %vm1795, %v1794, %v1792
  %1797 = vrot.lane.b32.xlu0 %v1796, 64
  %v1798 = vpop.permute.xlu0 %1797
  %vm1799 = vcmask 785920
  %s1800 = scalar_lea.vmem %s1, 112
  %1801 = vst.msk [vmem:[%s1800] sm:$0xff] %vm1799, %v1798
  %s1802 = scalar_lea.vmem %s0, 578
  %v1803 = vld [vmem:[%s1802] ss:$8 sm:$0xf]
  %s1804 = scalar_lea.vmem %s0, 578
  %v1805 = vld [vmem:[%s1804] ss:$8 sm:$0xf0]
  %vm1806 = vcmask 1047556
  %v1807 = vsel %vm1806, %v1805, %v1803
  %1808 = vrot.lane.b32.xlu0 %v1807, 64
  %v1809 = vpop.permute.xlu0 %1808
  %vm1810 = vcmask 785920
  %s1811 = scalar_lea.vmem %s1, 144
  %1812 = vst.msk [vmem:[%s1811] sm:$0xff] %vm1810, %v1809
  %s1813 = scalar_lea.vmem %s0, 706
  %v1814 = vld [vmem:[%s1813] ss:$8 sm:$0xf]
  %s1815 = scalar_lea.vmem %s0, 706
  %v1816 = vld [vmem:[%s1815] ss:$8 sm:$0xf0]
  %vm1817 = vcmask 1047556
  %v1818 = vsel %vm1817, %v1816, %v1814
  %1819 = vrot.lane.b32.xlu0 %v1818, 64
  %v1820 = vpop.permute.xlu0 %1819
  %vm1821 = vcmask 785920
  %s1822 = scalar_lea.vmem %s1, 176
  %1823 = vst.msk [vmem:[%s1822] sm:$0xff] %vm1821, %v1820
  %s1824 = scalar_lea.vmem %s0, 834
  %v1825 = vld [vmem:[%s1824] ss:$8 sm:$0xf]
  %s1826 = scalar_lea.vmem %s0, 834
  %v1827 = vld [vmem:[%s1826] ss:$8 sm:$0xf0]
  %vm1828 = vcmask 1047556
  %v1829 = vsel %vm1828, %v1827, %v1825
  %1830 = vrot.lane.b32.xlu0 %v1829, 64
  %v1831 = vpop.permute.xlu0 %1830
  %vm1832 = vcmask 785920
  %s1833 = scalar_lea.vmem %s1, 208
  %1834 = vst.msk [vmem:[%s1833] sm:$0xff] %vm1832, %v1831
  %s1835 = scalar_lea.vmem %s0, 962
  %v1836 = vld [vmem:[%s1835] ss:$8 sm:$0xf]
  %s1837 = scalar_lea.vmem %s0, 962
  %v1838 = vld [vmem:[%s1837] ss:$8 sm:$0xf0]
  %vm1839 = vcmask 1047556
  %v1840 = vsel %vm1839, %v1838, %v1836
  %1841 = vrot.lane.b32.xlu0 %v1840, 64
  %v1842 = vpop.permute.xlu0 %1841
  %vm1843 = vcmask 785920
  %s1844 = scalar_lea.vmem %s1, 240
  %1845 = vst.msk [vmem:[%s1844] sm:$0xff] %vm1843, %v1842
  %s1846 = scalar_lea.vmem %s0, 1090
  %v1847 = vld [vmem:[%s1846] ss:$8 sm:$0xf]
  %s1848 = scalar_lea.vmem %s0, 1090
  %v1849 = vld [vmem:[%s1848] ss:$8 sm:$0xf0]
  %vm1850 = vcmask 1047556
  %v1851 = vsel %vm1850, %v1849, %v1847
  %1852 = vrot.lane.b32.xlu0 %v1851, 64
  %v1853 = vpop.permute.xlu0 %1852
  %vm1854 = vcmask 785920
  %s1855 = scalar_lea.vmem %s1, 272
  %1856 = vst.msk [vmem:[%s1855] sm:$0xff] %vm1854, %v1853
  %s1857 = scalar_lea.vmem %s0, 1218
  %v1858 = vld [vmem:[%s1857] ss:$8 sm:$0xf]
  %s1859 = scalar_lea.vmem %s0, 1218
  %v1860 = vld [vmem:[%s1859] ss:$8 sm:$0xf0]
  %vm1861 = vcmask 1047556
  %v1862 = vsel %vm1861, %v1860, %v1858
  %1863 = vrot.lane.b32.xlu0 %v1862, 64
  %v1864 = vpop.permute.xlu0 %1863
  %vm1865 = vcmask 785920
  %s1866 = scalar_lea.vmem %s1, 304
  %1867 = vst.msk [vmem:[%s1866] sm:$0xff] %vm1865, %v1864
  %s1868 = scalar_lea.vmem %s0, 1346
  %v1869 = vld [vmem:[%s1868] ss:$8 sm:$0xf]
  %s1870 = scalar_lea.vmem %s0, 1346
  %v1871 = vld [vmem:[%s1870] ss:$8 sm:$0xf0]
  %vm1872 = vcmask 1047556
  %v1873 = vsel %vm1872, %v1871, %v1869
  %1874 = vrot.lane.b32.xlu0 %v1873, 64
  %v1875 = vpop.permute.xlu0 %1874
  %vm1876 = vcmask 785920
  %s1877 = scalar_lea.vmem %s1, 336
  %1878 = vst.msk [vmem:[%s1877] sm:$0xff] %vm1876, %v1875
  %s1879 = scalar_lea.vmem %s0, 1474
  %v1880 = vld [vmem:[%s1879] ss:$8 sm:$0xf]
  %s1881 = scalar_lea.vmem %s0, 1474
  %v1882 = vld [vmem:[%s1881] ss:$8 sm:$0xf0]
  %vm1883 = vcmask 1047556
  %v1884 = vsel %vm1883, %v1882, %v1880
  %1885 = vrot.lane.b32.xlu0 %v1884, 64
  %v1886 = vpop.permute.xlu0 %1885
  %vm1887 = vcmask 785920
  %s1888 = scalar_lea.vmem %s1, 368
  %1889 = vst.msk [vmem:[%s1888] sm:$0xff] %vm1887, %v1886
  %s1890 = scalar_lea.vmem %s0, 1602
  %v1891 = vld [vmem:[%s1890] ss:$8 sm:$0xf]
  %s1892 = scalar_lea.vmem %s0, 1602
  %v1893 = vld [vmem:[%s1892] ss:$8 sm:$0xf0]
  %vm1894 = vcmask 1047556
  %v1895 = vsel %vm1894, %v1893, %v1891
  %1896 = vrot.lane.b32.xlu0 %v1895, 64
  %v1897 = vpop.permute.xlu0 %1896
  %vm1898 = vcmask 785920
  %s1899 = scalar_lea.vmem %s1, 400
  %1900 = vst.msk [vmem:[%s1899] sm:$0xff] %vm1898, %v1897
  %s1901 = scalar_lea.vmem %s0, 1730
  %v1902 = vld [vmem:[%s1901] ss:$8 sm:$0xf]
  %s1903 = scalar_lea.vmem %s0, 1730
  %v1904 = vld [vmem:[%s1903] ss:$8 sm:$0xf0]
  %vm1905 = vcmask 1047556
  %v1906 = vsel %vm1905, %v1904, %v1902
  %1907 = vrot.lane.b32.xlu0 %v1906, 64
  %v1908 = vpop.permute.xlu0 %1907
  %vm1909 = vcmask 785920
  %s1910 = scalar_lea.vmem %s1, 432
  %1911 = vst.msk [vmem:[%s1910] sm:$0xff] %vm1909, %v1908
  %s1912 = scalar_lea.vmem %s0, 1858
  %v1913 = vld [vmem:[%s1912] ss:$8 sm:$0xf]
  %s1914 = scalar_lea.vmem %s0, 1858
  %v1915 = vld [vmem:[%s1914] ss:$8 sm:$0xf0]
  %vm1916 = vcmask 1047556
  %v1917 = vsel %vm1916, %v1915, %v1913
  %1918 = vrot.lane.b32.xlu0 %v1917, 64
  %v1919 = vpop.permute.xlu0 %1918
  %vm1920 = vcmask 785920
  %s1921 = scalar_lea.vmem %s1, 464
  %1922 = vst.msk [vmem:[%s1921] sm:$0xff] %vm1920, %v1919
  %s1923 = scalar_lea.vmem %s0, 1986
  %v1924 = vld [vmem:[%s1923] ss:$8 sm:$0xf]
  %s1925 = scalar_lea.vmem %s0, 1986
  %v1926 = vld [vmem:[%s1925] ss:$8 sm:$0xf0]
  %vm1927 = vcmask 1047556
  %v1928 = vsel %vm1927, %v1926, %v1924
  %1929 = vrot.lane.b32.xlu0 %v1928, 64
  %v1930 = vpop.permute.xlu0 %1929
  %vm1931 = vcmask 785920
  %s1932 = scalar_lea.vmem %s1, 496
  %1933 = vst.msk [vmem:[%s1932] sm:$0xff] %vm1931, %v1930
  %s1934 = scalar_lea.vmem %s0, 70
  %v1935 = vld [vmem:[%s1934] ss:$8 sm:$0xf]
  %s1936 = scalar_lea.vmem %s0, 70
  %v1937 = vld [vmem:[%s1936] ss:$8 sm:$0xf0]
  %vm1938 = vcmask 1047556
  %v1939 = vsel %vm1938, %v1937, %v1935
  %1940 = vrot.lane.b32.xlu0 %v1939, 64
  %v1941 = vpop.permute.xlu0 %1940
  %vm1942 = vcmask 785920
  %s1943 = scalar_lea.vmem %s1, 24
  %1944 = vst.msk [vmem:[%s1943] sm:$0xff] %vm1942, %v1941
  %s1945 = scalar_lea.vmem %s0, 198
  %v1946 = vld [vmem:[%s1945] ss:$8 sm:$0xf]
  %s1947 = scalar_lea.vmem %s0, 198
  %v1948 = vld [vmem:[%s1947] ss:$8 sm:$0xf0]
  %vm1949 = vcmask 1047556
  %v1950 = vsel %vm1949, %v1948, %v1946
  %1951 = vrot.lane.b32.xlu0 %v1950, 64
  %v1952 = vpop.permute.xlu0 %1951
  %vm1953 = vcmask 785920
  %s1954 = scalar_lea.vmem %s1, 56
  %1955 = vst.msk [vmem:[%s1954] sm:$0xff] %vm1953, %v1952
  %s1956 = scalar_lea.vmem %s0, 326
  %v1957 = vld [vmem:[%s1956] ss:$8 sm:$0xf]
  %s1958 = scalar_lea.vmem %s0, 326
  %v1959 = vld [vmem:[%s1958] ss:$8 sm:$0xf0]
  %vm1960 = vcmask 1047556
  %v1961 = vsel %vm1960, %v1959, %v1957
  %1962 = vrot.lane.b32.xlu0 %v1961, 64
  %v1963 = vpop.permute.xlu0 %1962
  %vm1964 = vcmask 785920
  %s1965 = scalar_lea.vmem %s1, 88
  %1966 = vst.msk [vmem:[%s1965] sm:$0xff] %vm1964, %v1963
  %s1967 = scalar_lea.vmem %s0, 454
  %v1968 = vld [vmem:[%s1967] ss:$8 sm:$0xf]
  %s1969 = scalar_lea.vmem %s0, 454
  %v1970 = vld [vmem:[%s1969] ss:$8 sm:$0xf0]
  %vm1971 = vcmask 1047556
  %v1972 = vsel %vm1971, %v1970, %v1968
  %1973 = vrot.lane.b32.xlu0 %v1972, 64
  %v1974 = vpop.permute.xlu0 %1973
  %vm1975 = vcmask 785920
  %s1976 = scalar_lea.vmem %s1, 120
  %1977 = vst.msk [vmem:[%s1976] sm:$0xff] %vm1975, %v1974
  %s1978 = scalar_lea.vmem %s0, 582
  %v1979 = vld [vmem:[%s1978] ss:$8 sm:$0xf]
  %s1980 = scalar_lea.vmem %s0, 582
  %v1981 = vld [vmem:[%s1980] ss:$8 sm:$0xf0]
  %vm1982 = vcmask 1047556
  %v1983 = vsel %vm1982, %v1981, %v1979
  %1984 = vrot.lane.b32.xlu0 %v1983, 64
  %v1985 = vpop.permute.xlu0 %1984
  %vm1986 = vcmask 785920
  %s1987 = scalar_lea.vmem %s1, 152
  %1988 = vst.msk [vmem:[%s1987] sm:$0xff] %vm1986, %v1985
  %s1989 = scalar_lea.vmem %s0, 710
  %v1990 = vld [vmem:[%s1989] ss:$8 sm:$0xf]
  %s1991 = scalar_lea.vmem %s0, 710
  %v1992 = vld [vmem:[%s1991] ss:$8 sm:$0xf0]
  %vm1993 = vcmask 1047556
  %v1994 = vsel %vm1993, %v1992, %v1990
  %1995 = vrot.lane.b32.xlu0 %v1994, 64
  %v1996 = vpop.permute.xlu0 %1995
  %vm1997 = vcmask 785920
  %s1998 = scalar_lea.vmem %s1, 184
  %1999 = vst.msk [vmem:[%s1998] sm:$0xff] %vm1997, %v1996
  %s2000 = scalar_lea.vmem %s0, 838
  %v2001 = vld [vmem:[%s2000] ss:$8 sm:$0xf]
  %s2002 = scalar_lea.vmem %s0, 838
  %v2003 = vld [vmem:[%s2002] ss:$8 sm:$0xf0]
  %vm2004 = vcmask 1047556
  %v2005 = vsel %vm2004, %v2003, %v2001
  %2006 = vrot.lane.b32.xlu0 %v2005, 64
  %v2007 = vpop.permute.xlu0 %2006
  %vm2008 = vcmask 785920
  %s2009 = scalar_lea.vmem %s1, 216
  %2010 = vst.msk [vmem:[%s2009] sm:$0xff] %vm2008, %v2007
  %s2011 = scalar_lea.vmem %s0, 966
  %v2012 = vld [vmem:[%s2011] ss:$8 sm:$0xf]
  %s2013 = scalar_lea.vmem %s0, 966
  %v2014 = vld [vmem:[%s2013] ss:$8 sm:$0xf0]
  %vm2015 = vcmask 1047556
  %v2016 = vsel %vm2015, %v2014, %v2012
  %2017 = vrot.lane.b32.xlu0 %v2016, 64
  %v2018 = vpop.permute.xlu0 %2017
  %vm2019 = vcmask 785920
  %s2020 = scalar_lea.vmem %s1, 248
  %2021 = vst.msk [vmem:[%s2020] sm:$0xff] %vm2019, %v2018
  %s2022 = scalar_lea.vmem %s0, 1094
  %v2023 = vld [vmem:[%s2022] ss:$8 sm:$0xf]
  %s2024 = scalar_lea.vmem %s0, 1094
  %v2025 = vld [vmem:[%s2024] ss:$8 sm:$0xf0]
  %vm2026 = vcmask 1047556
  %v2027 = vsel %vm2026, %v2025, %v2023
  %2028 = vrot.lane.b32.xlu0 %v2027, 64
  %v2029 = vpop.permute.xlu0 %2028
  %vm2030 = vcmask 785920
  %s2031 = scalar_lea.vmem %s1, 280
  %2032 = vst.msk [vmem:[%s2031] sm:$0xff] %vm2030, %v2029
  %s2033 = scalar_lea.vmem %s0, 1222
  %v2034 = vld [vmem:[%s2033] ss:$8 sm:$0xf]
  %s2035 = scalar_lea.vmem %s0, 1222
  %v2036 = vld [vmem:[%s2035] ss:$8 sm:$0xf0]
  %vm2037 = vcmask 1047556
  %v2038 = vsel %vm2037, %v2036, %v2034
  %2039 = vrot.lane.b32.xlu0 %v2038, 64
  %v2040 = vpop.permute.xlu0 %2039
  %vm2041 = vcmask 785920
  %s2042 = scalar_lea.vmem %s1, 312
  %2043 = vst.msk [vmem:[%s2042] sm:$0xff] %vm2041, %v2040
  %s2044 = scalar_lea.vmem %s0, 1350
  %v2045 = vld [vmem:[%s2044] ss:$8 sm:$0xf]
  %s2046 = scalar_lea.vmem %s0, 1350
  %v2047 = vld [vmem:[%s2046] ss:$8 sm:$0xf0]
  %vm2048 = vcmask 1047556
  %v2049 = vsel %vm2048, %v2047, %v2045
  %2050 = vrot.lane.b32.xlu0 %v2049, 64
  %v2051 = vpop.permute.xlu0 %2050
  %vm2052 = vcmask 785920
  %s2053 = scalar_lea.vmem %s1, 344
  %2054 = vst.msk [vmem:[%s2053] sm:$0xff] %vm2052, %v2051
  %s2055 = scalar_lea.vmem %s0, 1478
  %v2056 = vld [vmem:[%s2055] ss:$8 sm:$0xf]
  %s2057 = scalar_lea.vmem %s0, 1478
  %v2058 = vld [vmem:[%s2057] ss:$8 sm:$0xf0]
  %vm2059 = vcmask 1047556
  %v2060 = vsel %vm2059, %v2058, %v2056
  %2061 = vrot.lane.b32.xlu0 %v2060, 64
  %v2062 = vpop.permute.xlu0 %2061
  %vm2063 = vcmask 785920
  %s2064 = scalar_lea.vmem %s1, 376
  %2065 = vst.msk [vmem:[%s2064] sm:$0xff] %vm2063, %v2062
  %s2066 = scalar_lea.vmem %s0, 1606
  %v2067 = vld [vmem:[%s2066] ss:$8 sm:$0xf]
  %s2068 = scalar_lea.vmem %s0, 1606
  %v2069 = vld [vmem:[%s2068] ss:$8 sm:$0xf0]
  %vm2070 = vcmask 1047556
  %v2071 = vsel %vm2070, %v2069, %v2067
  %2072 = vrot.lane.b32.xlu0 %v2071, 64
  %v2073 = vpop.permute.xlu0 %2072
  %vm2074 = vcmask 785920
  %s2075 = scalar_lea.vmem %s1, 408
  %2076 = vst.msk [vmem:[%s2075] sm:$0xff] %vm2074, %v2073
  %s2077 = scalar_lea.vmem %s0, 1734
  %v2078 = vld [vmem:[%s2077] ss:$8 sm:$0xf]
  %s2079 = scalar_lea.vmem %s0, 1734
  %v2080 = vld [vmem:[%s2079] ss:$8 sm:$0xf0]
  %vm2081 = vcmask 1047556
  %v2082 = vsel %vm2081, %v2080, %v2078
  %2083 = vrot.lane.b32.xlu0 %v2082, 64
  %v2084 = vpop.permute.xlu0 %2083
  %vm2085 = vcmask 785920
  %s2086 = scalar_lea.vmem %s1, 440
  %2087 = vst.msk [vmem:[%s2086] sm:$0xff] %vm2085, %v2084
  %s2088 = scalar_lea.vmem %s0, 1862
  %v2089 = vld [vmem:[%s2088] ss:$8 sm:$0xf]
  %s2090 = scalar_lea.vmem %s0, 1862
  %v2091 = vld [vmem:[%s2090] ss:$8 sm:$0xf0]
  %vm2092 = vcmask 1047556
  %v2093 = vsel %vm2092, %v2091, %v2089
  %2094 = vrot.lane.b32.xlu0 %v2093, 64
  %v2095 = vpop.permute.xlu0 %2094
  %vm2096 = vcmask 785920
  %s2097 = scalar_lea.vmem %s1, 472
  %2098 = vst.msk [vmem:[%s2097] sm:$0xff] %vm2096, %v2095
  %s2099 = scalar_lea.vmem %s0, 1990
  %v2100 = vld [vmem:[%s2099] ss:$8 sm:$0xf]
  %s2101 = scalar_lea.vmem %s0, 1990
  %v2102 = vld [vmem:[%s2101] ss:$8 sm:$0xf0]
  %vm2103 = vcmask 1047556
  %v2104 = vsel %vm2103, %v2102, %v2100
  %2105 = vrot.lane.b32.xlu0 %v2104, 64
  %v2106 = vpop.permute.xlu0 %2105
  %vm2107 = vcmask 785920
  %s2108 = scalar_lea.vmem %s1, 504
  %2109 = vst.msk [vmem:[%s2108] sm:$0xff] %vm2107, %v2106
  %s2110 = scalar_lea.vmem %s0, 1
  %v2111 = vld [vmem:[%s2110] ss:$8 sm:$0xf]
  %s2112 = scalar_lea.vmem %s0, 1
  %v2113 = vld [vmem:[%s2112] ss:$8 sm:$0xf0]
  %vm2114 = vcmask 1047556
  %v2115 = vsel %vm2114, %v2113, %v2111
  %2116 = vrot.lane.b32.xlu0 %v2115, 32
  %v2117 = vpop.permute.xlu0 %2116
  %vm2118 = vcmask 523520
  %2119 = vst.msk [vmem:[%s1] sm:$0xff] %vm2118, %v2117
  %s2120 = scalar_lea.vmem %s0, 129
  %v2121 = vld [vmem:[%s2120] ss:$8 sm:$0xf]
  %s2122 = scalar_lea.vmem %s0, 129
  %v2123 = vld [vmem:[%s2122] ss:$8 sm:$0xf0]
  %vm2124 = vcmask 1047556
  %v2125 = vsel %vm2124, %v2123, %v2121
  %2126 = vrot.lane.b32.xlu0 %v2125, 32
  %v2127 = vpop.permute.xlu0 %2126
  %vm2128 = vcmask 523520
  %s2129 = scalar_lea.vmem %s1, 32
  %2130 = vst.msk [vmem:[%s2129] sm:$0xff] %vm2128, %v2127
  %s2131 = scalar_lea.vmem %s0, 257
  %v2132 = vld [vmem:[%s2131] ss:$8 sm:$0xf]
  %s2133 = scalar_lea.vmem %s0, 257
  %v2134 = vld [vmem:[%s2133] ss:$8 sm:$0xf0]
  %vm2135 = vcmask 1047556
  %v2136 = vsel %vm2135, %v2134, %v2132
  %2137 = vrot.lane.b32.xlu0 %v2136, 32
  %v2138 = vpop.permute.xlu0 %2137
  %vm2139 = vcmask 523520
  %s2140 = scalar_lea.vmem %s1, 64
  %2141 = vst.msk [vmem:[%s2140] sm:$0xff] %vm2139, %v2138
  %s2142 = scalar_lea.vmem %s0, 385
  %v2143 = vld [vmem:[%s2142] ss:$8 sm:$0xf]
  %s2144 = scalar_lea.vmem %s0, 385
  %v2145 = vld [vmem:[%s2144] ss:$8 sm:$0xf0]
  %vm2146 = vcmask 1047556
  %v2147 = vsel %vm2146, %v2145, %v2143
  %2148 = vrot.lane.b32.xlu0 %v2147, 32
  %v2149 = vpop.permute.xlu0 %2148
  %vm2150 = vcmask 523520
  %s2151 = scalar_lea.vmem %s1, 96
  %2152 = vst.msk [vmem:[%s2151] sm:$0xff] %vm2150, %v2149
  %s2153 = scalar_lea.vmem %s0, 513
  %v2154 = vld [vmem:[%s2153] ss:$8 sm:$0xf]
  %s2155 = scalar_lea.vmem %s0, 513
  %v2156 = vld [vmem:[%s2155] ss:$8 sm:$0xf0]
  %vm2157 = vcmask 1047556
  %v2158 = vsel %vm2157, %v2156, %v2154
  %2159 = vrot.lane.b32.xlu0 %v2158, 32
  %v2160 = vpop.permute.xlu0 %2159
  %vm2161 = vcmask 523520
  %s2162 = scalar_lea.vmem %s1, 128
  %2163 = vst.msk [vmem:[%s2162] sm:$0xff] %vm2161, %v2160
  %s2164 = scalar_lea.vmem %s0, 641
  %v2165 = vld [vmem:[%s2164] ss:$8 sm:$0xf]
  %s2166 = scalar_lea.vmem %s0, 641
  %v2167 = vld [vmem:[%s2166] ss:$8 sm:$0xf0]
  %vm2168 = vcmask 1047556
  %v2169 = vsel %vm2168, %v2167, %v2165
  %2170 = vrot.lane.b32.xlu0 %v2169, 32
  %v2171 = vpop.permute.xlu0 %2170
  %vm2172 = vcmask 523520
  %s2173 = scalar_lea.vmem %s1, 160
  %2174 = vst.msk [vmem:[%s2173] sm:$0xff] %vm2172, %v2171
  %s2175 = scalar_lea.vmem %s0, 769
  %v2176 = vld [vmem:[%s2175] ss:$8 sm:$0xf]
  %s2177 = scalar_lea.vmem %s0, 769
  %v2178 = vld [vmem:[%s2177] ss:$8 sm:$0xf0]
  %vm2179 = vcmask 1047556
  %v2180 = vsel %vm2179, %v2178, %v2176
  %2181 = vrot.lane.b32.xlu0 %v2180, 32
  %v2182 = vpop.permute.xlu0 %2181
  %vm2183 = vcmask 523520
  %s2184 = scalar_lea.vmem %s1, 192
  %2185 = vst.msk [vmem:[%s2184] sm:$0xff] %vm2183, %v2182
  %s2186 = scalar_lea.vmem %s0, 897
  %v2187 = vld [vmem:[%s2186] ss:$8 sm:$0xf]
  %s2188 = scalar_lea.vmem %s0, 897
  %v2189 = vld [vmem:[%s2188] ss:$8 sm:$0xf0]
  %vm2190 = vcmask 1047556
  %v2191 = vsel %vm2190, %v2189, %v2187
  %2192 = vrot.lane.b32.xlu0 %v2191, 32
  %v2193 = vpop.permute.xlu0 %2192
  %vm2194 = vcmask 523520
  %s2195 = scalar_lea.vmem %s1, 224
  %2196 = vst.msk [vmem:[%s2195] sm:$0xff] %vm2194, %v2193
  %s2197 = scalar_lea.vmem %s0, 1025
  %v2198 = vld [vmem:[%s2197] ss:$8 sm:$0xf]
  %s2199 = scalar_lea.vmem %s0, 1025
  %v2200 = vld [vmem:[%s2199] ss:$8 sm:$0xf0]
  %vm2201 = vcmask 1047556
  %v2202 = vsel %vm2201, %v2200, %v2198
  %2203 = vrot.lane.b32.xlu0 %v2202, 32
  %v2204 = vpop.permute.xlu0 %2203
  %vm2205 = vcmask 523520
  %s2206 = scalar_lea.vmem %s1, 256
  %2207 = vst.msk [vmem:[%s2206] sm:$0xff] %vm2205, %v2204
  %s2208 = scalar_lea.vmem %s0, 1153
  %v2209 = vld [vmem:[%s2208] ss:$8 sm:$0xf]
  %s2210 = scalar_lea.vmem %s0, 1153
  %v2211 = vld [vmem:[%s2210] ss:$8 sm:$0xf0]
  %vm2212 = vcmask 1047556
  %v2213 = vsel %vm2212, %v2211, %v2209
  %2214 = vrot.lane.b32.xlu0 %v2213, 32
  %v2215 = vpop.permute.xlu0 %2214
  %vm2216 = vcmask 523520
  %s2217 = scalar_lea.vmem %s1, 288
  %2218 = vst.msk [vmem:[%s2217] sm:$0xff] %vm2216, %v2215
  %s2219 = scalar_lea.vmem %s0, 1281
  %v2220 = vld [vmem:[%s2219] ss:$8 sm:$0xf]
  %s2221 = scalar_lea.vmem %s0, 1281
  %v2222 = vld [vmem:[%s2221] ss:$8 sm:$0xf0]
  %vm2223 = vcmask 1047556
  %v2224 = vsel %vm2223, %v2222, %v2220
  %2225 = vrot.lane.b32.xlu0 %v2224, 32
  %v2226 = vpop.permute.xlu0 %2225
  %vm2227 = vcmask 523520
  %s2228 = scalar_lea.vmem %s1, 320
  %2229 = vst.msk [vmem:[%s2228] sm:$0xff] %vm2227, %v2226
  %s2230 = scalar_lea.vmem %s0, 1409
  %v2231 = vld [vmem:[%s2230] ss:$8 sm:$0xf]
  %s2232 = scalar_lea.vmem %s0, 1409
  %v2233 = vld [vmem:[%s2232] ss:$8 sm:$0xf0]
  %vm2234 = vcmask 1047556
  %v2235 = vsel %vm2234, %v2233, %v2231
  %2236 = vrot.lane.b32.xlu0 %v2235, 32
  %v2237 = vpop.permute.xlu0 %2236
  %vm2238 = vcmask 523520
  %s2239 = scalar_lea.vmem %s1, 352
  %2240 = vst.msk [vmem:[%s2239] sm:$0xff] %vm2238, %v2237
  %s2241 = scalar_lea.vmem %s0, 1537
  %v2242 = vld [vmem:[%s2241] ss:$8 sm:$0xf]
  %s2243 = scalar_lea.vmem %s0, 1537
  %v2244 = vld [vmem:[%s2243] ss:$8 sm:$0xf0]
  %vm2245 = vcmask 1047556
  %v2246 = vsel %vm2245, %v2244, %v2242
  %2247 = vrot.lane.b32.xlu0 %v2246, 32
  %v2248 = vpop.permute.xlu0 %2247
  %vm2249 = vcmask 523520
  %s2250 = scalar_lea.vmem %s1, 384
  %2251 = vst.msk [vmem:[%s2250] sm:$0xff] %vm2249, %v2248
  %s2252 = scalar_lea.vmem %s0, 1665
  %v2253 = vld [vmem:[%s2252] ss:$8 sm:$0xf]
  %s2254 = scalar_lea.vmem %s0, 1665
  %v2255 = vld [vmem:[%s2254] ss:$8 sm:$0xf0]
  %vm2256 = vcmask 1047556
  %v2257 = vsel %vm2256, %v2255, %v2253
  %2258 = vrot.lane.b32.xlu0 %v2257, 32
  %v2259 = vpop.permute.xlu0 %2258
  %vm2260 = vcmask 523520
  %s2261 = scalar_lea.vmem %s1, 416
  %2262 = vst.msk [vmem:[%s2261] sm:$0xff] %vm2260, %v2259
  %s2263 = scalar_lea.vmem %s0, 1793
  %v2264 = vld [vmem:[%s2263] ss:$8 sm:$0xf]
  %s2265 = scalar_lea.vmem %s0, 1793
  %v2266 = vld [vmem:[%s2265] ss:$8 sm:$0xf0]
  %vm2267 = vcmask 1047556
  %v2268 = vsel %vm2267, %v2266, %v2264
  %2269 = vrot.lane.b32.xlu0 %v2268, 32
  %v2270 = vpop.permute.xlu0 %2269
  %vm2271 = vcmask 523520
  %s2272 = scalar_lea.vmem %s1, 448
  %2273 = vst.msk [vmem:[%s2272] sm:$0xff] %vm2271, %v2270
  %s2274 = scalar_lea.vmem %s0, 1921
  %v2275 = vld [vmem:[%s2274] ss:$8 sm:$0xf]
  %s2276 = scalar_lea.vmem %s0, 1921
  %v2277 = vld [vmem:[%s2276] ss:$8 sm:$0xf0]
  %vm2278 = vcmask 1047556
  %v2279 = vsel %vm2278, %v2277, %v2275
  %2280 = vrot.lane.b32.xlu0 %v2279, 32
  %v2281 = vpop.permute.xlu0 %2280
  %vm2282 = vcmask 523520
  %s2283 = scalar_lea.vmem %s1, 480
  %2284 = vst.msk [vmem:[%s2283] sm:$0xff] %vm2282, %v2281
  %s2285 = scalar_lea.vmem %s0, 5
  %v2286 = vld [vmem:[%s2285] ss:$8 sm:$0xf]
  %s2287 = scalar_lea.vmem %s0, 5
  %v2288 = vld [vmem:[%s2287] ss:$8 sm:$0xf0]
  %vm2289 = vcmask 1047556
  %v2290 = vsel %vm2289, %v2288, %v2286
  %2291 = vrot.lane.b32.xlu0 %v2290, 32
  %v2292 = vpop.permute.xlu0 %2291
  %vm2293 = vcmask 523520
  %s2294 = scalar_lea.vmem %s1, 8
  %2295 = vst.msk [vmem:[%s2294] sm:$0xff] %vm2293, %v2292
  %s2296 = scalar_lea.vmem %s0, 133
  %v2297 = vld [vmem:[%s2296] ss:$8 sm:$0xf]
  %s2298 = scalar_lea.vmem %s0, 133
  %v2299 = vld [vmem:[%s2298] ss:$8 sm:$0xf0]
  %vm2300 = vcmask 1047556
  %v2301 = vsel %vm2300, %v2299, %v2297
  %2302 = vrot.lane.b32.xlu0 %v2301, 32
  %v2303 = vpop.permute.xlu0 %2302
  %vm2304 = vcmask 523520
  %s2305 = scalar_lea.vmem %s1, 40
  %2306 = vst.msk [vmem:[%s2305] sm:$0xff] %vm2304, %v2303
  %s2307 = scalar_lea.vmem %s0, 261
  %v2308 = vld [vmem:[%s2307] ss:$8 sm:$0xf]
  %s2309 = scalar_lea.vmem %s0, 261
  %v2310 = vld [vmem:[%s2309] ss:$8 sm:$0xf0]
  %vm2311 = vcmask 1047556
  %v2312 = vsel %vm2311, %v2310, %v2308
  %2313 = vrot.lane.b32.xlu0 %v2312, 32
  %v2314 = vpop.permute.xlu0 %2313
  %vm2315 = vcmask 523520
  %s2316 = scalar_lea.vmem %s1, 72
  %2317 = vst.msk [vmem:[%s2316] sm:$0xff] %vm2315, %v2314
  %s2318 = scalar_lea.vmem %s0, 389
  %v2319 = vld [vmem:[%s2318] ss:$8 sm:$0xf]
  %s2320 = scalar_lea.vmem %s0, 389
  %v2321 = vld [vmem:[%s2320] ss:$8 sm:$0xf0]
  %vm2322 = vcmask 1047556
  %v2323 = vsel %vm2322, %v2321, %v2319
  %2324 = vrot.lane.b32.xlu0 %v2323, 32
  %v2325 = vpop.permute.xlu0 %2324
  %vm2326 = vcmask 523520
  %s2327 = scalar_lea.vmem %s1, 104
  %2328 = vst.msk [vmem:[%s2327] sm:$0xff] %vm2326, %v2325
  %s2329 = scalar_lea.vmem %s0, 517
  %v2330 = vld [vmem:[%s2329] ss:$8 sm:$0xf]
  %s2331 = scalar_lea.vmem %s0, 517
  %v2332 = vld [vmem:[%s2331] ss:$8 sm:$0xf0]
  %vm2333 = vcmask 1047556
  %v2334 = vsel %vm2333, %v2332, %v2330
  %2335 = vrot.lane.b32.xlu0 %v2334, 32
  %v2336 = vpop.permute.xlu0 %2335
  %vm2337 = vcmask 523520
  %s2338 = scalar_lea.vmem %s1, 136
  %2339 = vst.msk [vmem:[%s2338] sm:$0xff] %vm2337, %v2336
  %s2340 = scalar_lea.vmem %s0, 645
  %v2341 = vld [vmem:[%s2340] ss:$8 sm:$0xf]
  %s2342 = scalar_lea.vmem %s0, 645
  %v2343 = vld [vmem:[%s2342] ss:$8 sm:$0xf0]
  %vm2344 = vcmask 1047556
  %v2345 = vsel %vm2344, %v2343, %v2341
  %2346 = vrot.lane.b32.xlu0 %v2345, 32
  %v2347 = vpop.permute.xlu0 %2346
  %vm2348 = vcmask 523520
  %s2349 = scalar_lea.vmem %s1, 168
  %2350 = vst.msk [vmem:[%s2349] sm:$0xff] %vm2348, %v2347
  %s2351 = scalar_lea.vmem %s0, 773
  %v2352 = vld [vmem:[%s2351] ss:$8 sm:$0xf]
  %s2353 = scalar_lea.vmem %s0, 773
  %v2354 = vld [vmem:[%s2353] ss:$8 sm:$0xf0]
  %vm2355 = vcmask 1047556
  %v2356 = vsel %vm2355, %v2354, %v2352
  %2357 = vrot.lane.b32.xlu0 %v2356, 32
  %v2358 = vpop.permute.xlu0 %2357
  %vm2359 = vcmask 523520
  %s2360 = scalar_lea.vmem %s1, 200
  %2361 = vst.msk [vmem:[%s2360] sm:$0xff] %vm2359, %v2358
  %s2362 = scalar_lea.vmem %s0, 901
  %v2363 = vld [vmem:[%s2362] ss:$8 sm:$0xf]
  %s2364 = scalar_lea.vmem %s0, 901
  %v2365 = vld [vmem:[%s2364] ss:$8 sm:$0xf0]
  %vm2366 = vcmask 1047556
  %v2367 = vsel %vm2366, %v2365, %v2363
  %2368 = vrot.lane.b32.xlu0 %v2367, 32
  %v2369 = vpop.permute.xlu0 %2368
  %vm2370 = vcmask 523520
  %s2371 = scalar_lea.vmem %s1, 232
  %2372 = vst.msk [vmem:[%s2371] sm:$0xff] %vm2370, %v2369
  %s2373 = scalar_lea.vmem %s0, 1029
  %v2374 = vld [vmem:[%s2373] ss:$8 sm:$0xf]
  %s2375 = scalar_lea.vmem %s0, 1029
  %v2376 = vld [vmem:[%s2375] ss:$8 sm:$0xf0]
  %vm2377 = vcmask 1047556
  %v2378 = vsel %vm2377, %v2376, %v2374
  %2379 = vrot.lane.b32.xlu0 %v2378, 32
  %v2380 = vpop.permute.xlu0 %2379
  %vm2381 = vcmask 523520
  %s2382 = scalar_lea.vmem %s1, 264
  %2383 = vst.msk [vmem:[%s2382] sm:$0xff] %vm2381, %v2380
  %s2384 = scalar_lea.vmem %s0, 1157
  %v2385 = vld [vmem:[%s2384] ss:$8 sm:$0xf]
  %s2386 = scalar_lea.vmem %s0, 1157
  %v2387 = vld [vmem:[%s2386] ss:$8 sm:$0xf0]
  %vm2388 = vcmask 1047556
  %v2389 = vsel %vm2388, %v2387, %v2385
  %2390 = vrot.lane.b32.xlu0 %v2389, 32
  %v2391 = vpop.permute.xlu0 %2390
  %vm2392 = vcmask 523520
  %s2393 = scalar_lea.vmem %s1, 296
  %2394 = vst.msk [vmem:[%s2393] sm:$0xff] %vm2392, %v2391
  %s2395 = scalar_lea.vmem %s0, 1285
  %v2396 = vld [vmem:[%s2395] ss:$8 sm:$0xf]
  %s2397 = scalar_lea.vmem %s0, 1285
  %v2398 = vld [vmem:[%s2397] ss:$8 sm:$0xf0]
  %vm2399 = vcmask 1047556
  %v2400 = vsel %vm2399, %v2398, %v2396
  %2401 = vrot.lane.b32.xlu0 %v2400, 32
  %v2402 = vpop.permute.xlu0 %2401
  %vm2403 = vcmask 523520
  %s2404 = scalar_lea.vmem %s1, 328
  %2405 = vst.msk [vmem:[%s2404] sm:$0xff] %vm2403, %v2402
  %s2406 = scalar_lea.vmem %s0, 1413
  %v2407 = vld [vmem:[%s2406] ss:$8 sm:$0xf]
  %s2408 = scalar_lea.vmem %s0, 1413
  %v2409 = vld [vmem:[%s2408] ss:$8 sm:$0xf0]
  %vm2410 = vcmask 1047556
  %v2411 = vsel %vm2410, %v2409, %v2407
  %2412 = vrot.lane.b32.xlu0 %v2411, 32
  %v2413 = vpop.permute.xlu0 %2412
  %vm2414 = vcmask 523520
  %s2415 = scalar_lea.vmem %s1, 360
  %2416 = vst.msk [vmem:[%s2415] sm:$0xff] %vm2414, %v2413
  %s2417 = scalar_lea.vmem %s0, 1541
  %v2418 = vld [vmem:[%s2417] ss:$8 sm:$0xf]
  %s2419 = scalar_lea.vmem %s0, 1541
  %v2420 = vld [vmem:[%s2419] ss:$8 sm:$0xf0]
  %vm2421 = vcmask 1047556
  %v2422 = vsel %vm2421, %v2420, %v2418
  %2423 = vrot.lane.b32.xlu0 %v2422, 32
  %v2424 = vpop.permute.xlu0 %2423
  %vm2425 = vcmask 523520
  %s2426 = scalar_lea.vmem %s1, 392
  %2427 = vst.msk [vmem:[%s2426] sm:$0xff] %vm2425, %v2424
  %s2428 = scalar_lea.vmem %s0, 1669
  %v2429 = vld [vmem:[%s2428] ss:$8 sm:$0xf]
  %s2430 = scalar_lea.vmem %s0, 1669
  %v2431 = vld [vmem:[%s2430] ss:$8 sm:$0xf0]
  %vm2432 = vcmask 1047556
  %v2433 = vsel %vm2432, %v2431, %v2429
  %2434 = vrot.lane.b32.xlu0 %v2433, 32
  %v2435 = vpop.permute.xlu0 %2434
  %vm2436 = vcmask 523520
  %s2437 = scalar_lea.vmem %s1, 424
  %2438 = vst.msk [vmem:[%s2437] sm:$0xff] %vm2436, %v2435
  %s2439 = scalar_lea.vmem %s0, 1797
  %v2440 = vld [vmem:[%s2439] ss:$8 sm:$0xf]
  %s2441 = scalar_lea.vmem %s0, 1797
  %v2442 = vld [vmem:[%s2441] ss:$8 sm:$0xf0]
  %vm2443 = vcmask 1047556
  %v2444 = vsel %vm2443, %v2442, %v2440
  %2445 = vrot.lane.b32.xlu0 %v2444, 32
  %v2446 = vpop.permute.xlu0 %2445
  %vm2447 = vcmask 523520
  %s2448 = scalar_lea.vmem %s1, 456
  %2449 = vst.msk [vmem:[%s2448] sm:$0xff] %vm2447, %v2446
  %s2450 = scalar_lea.vmem %s0, 1925
  %v2451 = vld [vmem:[%s2450] ss:$8 sm:$0xf]
  %s2452 = scalar_lea.vmem %s0, 1925
  %v2453 = vld [vmem:[%s2452] ss:$8 sm:$0xf0]
  %vm2454 = vcmask 1047556
  %v2455 = vsel %vm2454, %v2453, %v2451
  %2456 = vrot.lane.b32.xlu0 %v2455, 32
  %v2457 = vpop.permute.xlu0 %2456
  %vm2458 = vcmask 523520
  %s2459 = scalar_lea.vmem %s1, 488
  %2460 = vst.msk [vmem:[%s2459] sm:$0xff] %vm2458, %v2457
  %s2461 = scalar_lea.vmem %s0, 65
  %v2462 = vld [vmem:[%s2461] ss:$8 sm:$0xf]
  %s2463 = scalar_lea.vmem %s0, 65
  %v2464 = vld [vmem:[%s2463] ss:$8 sm:$0xf0]
  %vm2465 = vcmask 1047556
  %v2466 = vsel %vm2465, %v2464, %v2462
  %2467 = vrot.lane.b32.xlu0 %v2466, 32
  %v2468 = vpop.permute.xlu0 %2467
  %vm2469 = vcmask 523520
  %s2470 = scalar_lea.vmem %s1, 16
  %2471 = vst.msk [vmem:[%s2470] sm:$0xff] %vm2469, %v2468
  %s2472 = scalar_lea.vmem %s0, 193
  %v2473 = vld [vmem:[%s2472] ss:$8 sm:$0xf]
  %s2474 = scalar_lea.vmem %s0, 193
  %v2475 = vld [vmem:[%s2474] ss:$8 sm:$0xf0]
  %vm2476 = vcmask 1047556
  %v2477 = vsel %vm2476, %v2475, %v2473
  %2478 = vrot.lane.b32.xlu0 %v2477, 32
  %v2479 = vpop.permute.xlu0 %2478
  %vm2480 = vcmask 523520
  %s2481 = scalar_lea.vmem %s1, 48
  %2482 = vst.msk [vmem:[%s2481] sm:$0xff] %vm2480, %v2479
  %s2483 = scalar_lea.vmem %s0, 321
  %v2484 = vld [vmem:[%s2483] ss:$8 sm:$0xf]
  %s2485 = scalar_lea.vmem %s0, 321
  %v2486 = vld [vmem:[%s2485] ss:$8 sm:$0xf0]
  %vm2487 = vcmask 1047556
  %v2488 = vsel %vm2487, %v2486, %v2484
  %2489 = vrot.lane.b32.xlu0 %v2488, 32
  %v2490 = vpop.permute.xlu0 %2489
  %vm2491 = vcmask 523520
  %s2492 = scalar_lea.vmem %s1, 80
  %2493 = vst.msk [vmem:[%s2492] sm:$0xff] %vm2491, %v2490
  %s2494 = scalar_lea.vmem %s0, 449
  %v2495 = vld [vmem:[%s2494] ss:$8 sm:$0xf]
  %s2496 = scalar_lea.vmem %s0, 449
  %v2497 = vld [vmem:[%s2496] ss:$8 sm:$0xf0]
  %vm2498 = vcmask 1047556
  %v2499 = vsel %vm2498, %v2497, %v2495
  %2500 = vrot.lane.b32.xlu0 %v2499, 32
  %v2501 = vpop.permute.xlu0 %2500
  %vm2502 = vcmask 523520
  %s2503 = scalar_lea.vmem %s1, 112
  %2504 = vst.msk [vmem:[%s2503] sm:$0xff] %vm2502, %v2501
  %s2505 = scalar_lea.vmem %s0, 577
  %v2506 = vld [vmem:[%s2505] ss:$8 sm:$0xf]
  %s2507 = scalar_lea.vmem %s0, 577
  %v2508 = vld [vmem:[%s2507] ss:$8 sm:$0xf0]
  %vm2509 = vcmask 1047556
  %v2510 = vsel %vm2509, %v2508, %v2506
  %2511 = vrot.lane.b32.xlu0 %v2510, 32
  %v2512 = vpop.permute.xlu0 %2511
  %vm2513 = vcmask 523520
  %s2514 = scalar_lea.vmem %s1, 144
  %2515 = vst.msk [vmem:[%s2514] sm:$0xff] %vm2513, %v2512
  %s2516 = scalar_lea.vmem %s0, 705
  %v2517 = vld [vmem:[%s2516] ss:$8 sm:$0xf]
  %s2518 = scalar_lea.vmem %s0, 705
  %v2519 = vld [vmem:[%s2518] ss:$8 sm:$0xf0]
  %vm2520 = vcmask 1047556
  %v2521 = vsel %vm2520, %v2519, %v2517
  %2522 = vrot.lane.b32.xlu0 %v2521, 32
  %v2523 = vpop.permute.xlu0 %2522
  %vm2524 = vcmask 523520
  %s2525 = scalar_lea.vmem %s1, 176
  %2526 = vst.msk [vmem:[%s2525] sm:$0xff] %vm2524, %v2523
  %s2527 = scalar_lea.vmem %s0, 833
  %v2528 = vld [vmem:[%s2527] ss:$8 sm:$0xf]
  %s2529 = scalar_lea.vmem %s0, 833
  %v2530 = vld [vmem:[%s2529] ss:$8 sm:$0xf0]
  %vm2531 = vcmask 1047556
  %v2532 = vsel %vm2531, %v2530, %v2528
  %2533 = vrot.lane.b32.xlu0 %v2532, 32
  %v2534 = vpop.permute.xlu0 %2533
  %vm2535 = vcmask 523520
  %s2536 = scalar_lea.vmem %s1, 208
  %2537 = vst.msk [vmem:[%s2536] sm:$0xff] %vm2535, %v2534
  %s2538 = scalar_lea.vmem %s0, 961
  %v2539 = vld [vmem:[%s2538] ss:$8 sm:$0xf]
  %s2540 = scalar_lea.vmem %s0, 961
  %v2541 = vld [vmem:[%s2540] ss:$8 sm:$0xf0]
  %vm2542 = vcmask 1047556
  %v2543 = vsel %vm2542, %v2541, %v2539
  %2544 = vrot.lane.b32.xlu0 %v2543, 32
  %v2545 = vpop.permute.xlu0 %2544
  %vm2546 = vcmask 523520
  %s2547 = scalar_lea.vmem %s1, 240
  %2548 = vst.msk [vmem:[%s2547] sm:$0xff] %vm2546, %v2545
  %s2549 = scalar_lea.vmem %s0, 1089
  %v2550 = vld [vmem:[%s2549] ss:$8 sm:$0xf]
  %s2551 = scalar_lea.vmem %s0, 1089
  %v2552 = vld [vmem:[%s2551] ss:$8 sm:$0xf0]
  %vm2553 = vcmask 1047556
  %v2554 = vsel %vm2553, %v2552, %v2550
  %2555 = vrot.lane.b32.xlu0 %v2554, 32
  %v2556 = vpop.permute.xlu0 %2555
  %vm2557 = vcmask 523520
  %s2558 = scalar_lea.vmem %s1, 272
  %2559 = vst.msk [vmem:[%s2558] sm:$0xff] %vm2557, %v2556
  %s2560 = scalar_lea.vmem %s0, 1217
  %v2561 = vld [vmem:[%s2560] ss:$8 sm:$0xf]
  %s2562 = scalar_lea.vmem %s0, 1217
  %v2563 = vld [vmem:[%s2562] ss:$8 sm:$0xf0]
  %vm2564 = vcmask 1047556
  %v2565 = vsel %vm2564, %v2563, %v2561
  %2566 = vrot.lane.b32.xlu0 %v2565, 32
  %v2567 = vpop.permute.xlu0 %2566
  %vm2568 = vcmask 523520
  %s2569 = scalar_lea.vmem %s1, 304
  %2570 = vst.msk [vmem:[%s2569] sm:$0xff] %vm2568, %v2567
  %s2571 = scalar_lea.vmem %s0, 1345
  %v2572 = vld [vmem:[%s2571] ss:$8 sm:$0xf]
  %s2573 = scalar_lea.vmem %s0, 1345
  %v2574 = vld [vmem:[%s2573] ss:$8 sm:$0xf0]
  %vm2575 = vcmask 1047556
  %v2576 = vsel %vm2575, %v2574, %v2572
  %2577 = vrot.lane.b32.xlu0 %v2576, 32
  %v2578 = vpop.permute.xlu0 %2577
  %vm2579 = vcmask 523520
  %s2580 = scalar_lea.vmem %s1, 336
  %2581 = vst.msk [vmem:[%s2580] sm:$0xff] %vm2579, %v2578
  %s2582 = scalar_lea.vmem %s0, 1473
  %v2583 = vld [vmem:[%s2582] ss:$8 sm:$0xf]
  %s2584 = scalar_lea.vmem %s0, 1473
  %v2585 = vld [vmem:[%s2584] ss:$8 sm:$0xf0]
  %vm2586 = vcmask 1047556
  %v2587 = vsel %vm2586, %v2585, %v2583
  %2588 = vrot.lane.b32.xlu0 %v2587, 32
  %v2589 = vpop.permute.xlu0 %2588
  %vm2590 = vcmask 523520
  %s2591 = scalar_lea.vmem %s1, 368
  %2592 = vst.msk [vmem:[%s2591] sm:$0xff] %vm2590, %v2589
  %s2593 = scalar_lea.vmem %s0, 1601
  %v2594 = vld [vmem:[%s2593] ss:$8 sm:$0xf]
  %s2595 = scalar_lea.vmem %s0, 1601
  %v2596 = vld [vmem:[%s2595] ss:$8 sm:$0xf0]
  %vm2597 = vcmask 1047556
  %v2598 = vsel %vm2597, %v2596, %v2594
  %2599 = vrot.lane.b32.xlu0 %v2598, 32
  %v2600 = vpop.permute.xlu0 %2599
  %vm2601 = vcmask 523520
  %s2602 = scalar_lea.vmem %s1, 400
  %2603 = vst.msk [vmem:[%s2602] sm:$0xff] %vm2601, %v2600
  %s2604 = scalar_lea.vmem %s0, 1729
  %v2605 = vld [vmem:[%s2604] ss:$8 sm:$0xf]
  %s2606 = scalar_lea.vmem %s0, 1729
  %v2607 = vld [vmem:[%s2606] ss:$8 sm:$0xf0]
  %vm2608 = vcmask 1047556
  %v2609 = vsel %vm2608, %v2607, %v2605
  %2610 = vrot.lane.b32.xlu0 %v2609, 32
  %v2611 = vpop.permute.xlu0 %2610
  %vm2612 = vcmask 523520
  %s2613 = scalar_lea.vmem %s1, 432
  %2614 = vst.msk [vmem:[%s2613] sm:$0xff] %vm2612, %v2611
  %s2615 = scalar_lea.vmem %s0, 1857
  %v2616 = vld [vmem:[%s2615] ss:$8 sm:$0xf]
  %s2617 = scalar_lea.vmem %s0, 1857
  %v2618 = vld [vmem:[%s2617] ss:$8 sm:$0xf0]
  %vm2619 = vcmask 1047556
  %v2620 = vsel %vm2619, %v2618, %v2616
  %2621 = vrot.lane.b32.xlu0 %v2620, 32
  %v2622 = vpop.permute.xlu0 %2621
  %vm2623 = vcmask 523520
  %s2624 = scalar_lea.vmem %s1, 464
  %2625 = vst.msk [vmem:[%s2624] sm:$0xff] %vm2623, %v2622
  %s2626 = scalar_lea.vmem %s0, 1985
  %v2627 = vld [vmem:[%s2626] ss:$8 sm:$0xf]
  %s2628 = scalar_lea.vmem %s0, 1985
  %v2629 = vld [vmem:[%s2628] ss:$8 sm:$0xf0]
  %vm2630 = vcmask 1047556
  %v2631 = vsel %vm2630, %v2629, %v2627
  %2632 = vrot.lane.b32.xlu0 %v2631, 32
  %v2633 = vpop.permute.xlu0 %2632
  %vm2634 = vcmask 523520
  %s2635 = scalar_lea.vmem %s1, 496
  %2636 = vst.msk [vmem:[%s2635] sm:$0xff] %vm2634, %v2633
  %s2637 = scalar_lea.vmem %s0, 69
  %v2638 = vld [vmem:[%s2637] ss:$8 sm:$0xf]
  %s2639 = scalar_lea.vmem %s0, 69
  %v2640 = vld [vmem:[%s2639] ss:$8 sm:$0xf0]
  %vm2641 = vcmask 1047556
  %v2642 = vsel %vm2641, %v2640, %v2638
  %2643 = vrot.lane.b32.xlu0 %v2642, 32
  %v2644 = vpop.permute.xlu0 %2643
  %vm2645 = vcmask 523520
  %s2646 = scalar_lea.vmem %s1, 24
  %2647 = vst.msk [vmem:[%s2646] sm:$0xff] %vm2645, %v2644
  %s2648 = scalar_lea.vmem %s0, 197
  %v2649 = vld [vmem:[%s2648] ss:$8 sm:$0xf]
  %s2650 = scalar_lea.vmem %s0, 197
  %v2651 = vld [vmem:[%s2650] ss:$8 sm:$0xf0]
  %vm2652 = vcmask 1047556
  %v2653 = vsel %vm2652, %v2651, %v2649
  %2654 = vrot.lane.b32.xlu0 %v2653, 32
  %v2655 = vpop.permute.xlu0 %2654
  %vm2656 = vcmask 523520
  %s2657 = scalar_lea.vmem %s1, 56
  %2658 = vst.msk [vmem:[%s2657] sm:$0xff] %vm2656, %v2655
  %s2659 = scalar_lea.vmem %s0, 325
  %v2660 = vld [vmem:[%s2659] ss:$8 sm:$0xf]
  %s2661 = scalar_lea.vmem %s0, 325
  %v2662 = vld [vmem:[%s2661] ss:$8 sm:$0xf0]
  %vm2663 = vcmask 1047556
  %v2664 = vsel %vm2663, %v2662, %v2660
  %2665 = vrot.lane.b32.xlu0 %v2664, 32
  %v2666 = vpop.permute.xlu0 %2665
  %vm2667 = vcmask 523520
  %s2668 = scalar_lea.vmem %s1, 88
  %2669 = vst.msk [vmem:[%s2668] sm:$0xff] %vm2667, %v2666
  %s2670 = scalar_lea.vmem %s0, 453
  %v2671 = vld [vmem:[%s2670] ss:$8 sm:$0xf]
  %s2672 = scalar_lea.vmem %s0, 453
  %v2673 = vld [vmem:[%s2672] ss:$8 sm:$0xf0]
  %vm2674 = vcmask 1047556
  %v2675 = vsel %vm2674, %v2673, %v2671
  %2676 = vrot.lane.b32.xlu0 %v2675, 32
  %v2677 = vpop.permute.xlu0 %2676
  %vm2678 = vcmask 523520
  %s2679 = scalar_lea.vmem %s1, 120
  %2680 = vst.msk [vmem:[%s2679] sm:$0xff] %vm2678, %v2677
  %s2681 = scalar_lea.vmem %s0, 581
  %v2682 = vld [vmem:[%s2681] ss:$8 sm:$0xf]
  %s2683 = scalar_lea.vmem %s0, 581
  %v2684 = vld [vmem:[%s2683] ss:$8 sm:$0xf0]
  %vm2685 = vcmask 1047556
  %v2686 = vsel %vm2685, %v2684, %v2682
  %2687 = vrot.lane.b32.xlu0 %v2686, 32
  %v2688 = vpop.permute.xlu0 %2687
  %vm2689 = vcmask 523520
  %s2690 = scalar_lea.vmem %s1, 152
  %2691 = vst.msk [vmem:[%s2690] sm:$0xff] %vm2689, %v2688
  %s2692 = scalar_lea.vmem %s0, 709
  %v2693 = vld [vmem:[%s2692] ss:$8 sm:$0xf]
  %s2694 = scalar_lea.vmem %s0, 709
  %v2695 = vld [vmem:[%s2694] ss:$8 sm:$0xf0]
  %vm2696 = vcmask 1047556
  %v2697 = vsel %vm2696, %v2695, %v2693
  %2698 = vrot.lane.b32.xlu0 %v2697, 32
  %v2699 = vpop.permute.xlu0 %2698
  %vm2700 = vcmask 523520
  %s2701 = scalar_lea.vmem %s1, 184
  %2702 = vst.msk [vmem:[%s2701] sm:$0xff] %vm2700, %v2699
  %s2703 = scalar_lea.vmem %s0, 837
  %v2704 = vld [vmem:[%s2703] ss:$8 sm:$0xf]
  %s2705 = scalar_lea.vmem %s0, 837
  %v2706 = vld [vmem:[%s2705] ss:$8 sm:$0xf0]
  %vm2707 = vcmask 1047556
  %v2708 = vsel %vm2707, %v2706, %v2704
  %2709 = vrot.lane.b32.xlu0 %v2708, 32
  %v2710 = vpop.permute.xlu0 %2709
  %vm2711 = vcmask 523520
  %s2712 = scalar_lea.vmem %s1, 216
  %2713 = vst.msk [vmem:[%s2712] sm:$0xff] %vm2711, %v2710
  %s2714 = scalar_lea.vmem %s0, 965
  %v2715 = vld [vmem:[%s2714] ss:$8 sm:$0xf]
  %s2716 = scalar_lea.vmem %s0, 965
  %v2717 = vld [vmem:[%s2716] ss:$8 sm:$0xf0]
  %vm2718 = vcmask 1047556
  %v2719 = vsel %vm2718, %v2717, %v2715
  %2720 = vrot.lane.b32.xlu0 %v2719, 32
  %v2721 = vpop.permute.xlu0 %2720
  %vm2722 = vcmask 523520
  %s2723 = scalar_lea.vmem %s1, 248
  %2724 = vst.msk [vmem:[%s2723] sm:$0xff] %vm2722, %v2721
  %s2725 = scalar_lea.vmem %s0, 1093
  %v2726 = vld [vmem:[%s2725] ss:$8 sm:$0xf]
  %s2727 = scalar_lea.vmem %s0, 1093
  %v2728 = vld [vmem:[%s2727] ss:$8 sm:$0xf0]
  %vm2729 = vcmask 1047556
  %v2730 = vsel %vm2729, %v2728, %v2726
  %2731 = vrot.lane.b32.xlu0 %v2730, 32
  %v2732 = vpop.permute.xlu0 %2731
  %vm2733 = vcmask 523520
  %s2734 = scalar_lea.vmem %s1, 280
  %2735 = vst.msk [vmem:[%s2734] sm:$0xff] %vm2733, %v2732
  %s2736 = scalar_lea.vmem %s0, 1221
  %v2737 = vld [vmem:[%s2736] ss:$8 sm:$0xf]
  %s2738 = scalar_lea.vmem %s0, 1221
  %v2739 = vld [vmem:[%s2738] ss:$8 sm:$0xf0]
  %vm2740 = vcmask 1047556
  %v2741 = vsel %vm2740, %v2739, %v2737
  %2742 = vrot.lane.b32.xlu0 %v2741, 32
  %v2743 = vpop.permute.xlu0 %2742
  %vm2744 = vcmask 523520
  %s2745 = scalar_lea.vmem %s1, 312
  %2746 = vst.msk [vmem:[%s2745] sm:$0xff] %vm2744, %v2743
  %s2747 = scalar_lea.vmem %s0, 1349
  %v2748 = vld [vmem:[%s2747] ss:$8 sm:$0xf]
  %s2749 = scalar_lea.vmem %s0, 1349
  %v2750 = vld [vmem:[%s2749] ss:$8 sm:$0xf0]
  %vm2751 = vcmask 1047556
  %v2752 = vsel %vm2751, %v2750, %v2748
  %2753 = vrot.lane.b32.xlu0 %v2752, 32
  %v2754 = vpop.permute.xlu0 %2753
  %vm2755 = vcmask 523520
  %s2756 = scalar_lea.vmem %s1, 344
  %2757 = vst.msk [vmem:[%s2756] sm:$0xff] %vm2755, %v2754
  %s2758 = scalar_lea.vmem %s0, 1477
  %v2759 = vld [vmem:[%s2758] ss:$8 sm:$0xf]
  %s2760 = scalar_lea.vmem %s0, 1477
  %v2761 = vld [vmem:[%s2760] ss:$8 sm:$0xf0]
  %vm2762 = vcmask 1047556
  %v2763 = vsel %vm2762, %v2761, %v2759
  %2764 = vrot.lane.b32.xlu0 %v2763, 32
  %v2765 = vpop.permute.xlu0 %2764
  %vm2766 = vcmask 523520
  %s2767 = scalar_lea.vmem %s1, 376
  %2768 = vst.msk [vmem:[%s2767] sm:$0xff] %vm2766, %v2765
  %s2769 = scalar_lea.vmem %s0, 1605
  %v2770 = vld [vmem:[%s2769] ss:$8 sm:$0xf]
  %s2771 = scalar_lea.vmem %s0, 1605
  %v2772 = vld [vmem:[%s2771] ss:$8 sm:$0xf0]
  %vm2773 = vcmask 1047556
  %v2774 = vsel %vm2773, %v2772, %v2770
  %2775 = vrot.lane.b32.xlu0 %v2774, 32
  %v2776 = vpop.permute.xlu0 %2775
  %vm2777 = vcmask 523520
  %s2778 = scalar_lea.vmem %s1, 408
  %2779 = vst.msk [vmem:[%s2778] sm:$0xff] %vm2777, %v2776
  %s2780 = scalar_lea.vmem %s0, 1733
  %v2781 = vld [vmem:[%s2780] ss:$8 sm:$0xf]
  %s2782 = scalar_lea.vmem %s0, 1733
  %v2783 = vld [vmem:[%s2782] ss:$8 sm:$0xf0]
  %vm2784 = vcmask 1047556
  %v2785 = vsel %vm2784, %v2783, %v2781
  %2786 = vrot.lane.b32.xlu0 %v2785, 32
  %v2787 = vpop.permute.xlu0 %2786
  %vm2788 = vcmask 523520
  %s2789 = scalar_lea.vmem %s1, 440
  %2790 = vst.msk [vmem:[%s2789] sm:$0xff] %vm2788, %v2787
  %s2791 = scalar_lea.vmem %s0, 1861
  %v2792 = vld [vmem:[%s2791] ss:$8 sm:$0xf]
  %s2793 = scalar_lea.vmem %s0, 1861
  %v2794 = vld [vmem:[%s2793] ss:$8 sm:$0xf0]
  %vm2795 = vcmask 1047556
  %v2796 = vsel %vm2795, %v2794, %v2792
  %2797 = vrot.lane.b32.xlu0 %v2796, 32
  %v2798 = vpop.permute.xlu0 %2797
  %vm2799 = vcmask 523520
  %s2800 = scalar_lea.vmem %s1, 472
  %2801 = vst.msk [vmem:[%s2800] sm:$0xff] %vm2799, %v2798
  %s2802 = scalar_lea.vmem %s0, 1989
  %v2803 = vld [vmem:[%s2802] ss:$8 sm:$0xf]
  %s2804 = scalar_lea.vmem %s0, 1989
  %v2805 = vld [vmem:[%s2804] ss:$8 sm:$0xf0]
  %vm2806 = vcmask 1047556
  %v2807 = vsel %vm2806, %v2805, %v2803
  %2808 = vrot.lane.b32.xlu0 %v2807, 32
  %v2809 = vpop.permute.xlu0 %2808
  %vm2810 = vcmask 523520
  %s2811 = scalar_lea.vmem %s1, 504
  %2812 = vst.msk [vmem:[%s2811] sm:$0xff] %vm2810, %v2809

// kernel: tile.33
$region0: #{tile.33}
  #allocation0 [shape = 's32[1]{0}', space=sflag, size = 0x4, scoped, tag = 'scoped memory for tile.33']
  %s0 = inlined_call_operand.vmem [shape: f32[32], index: 0, kind: input, shape index: {}]
  %s1 = inlined_call_operand.vmem [shape: f32[8,32], index: 1, kind: output, shape index: {}]
  // Predicated region
  $region2: #{tile.33} parent=0 // pred_check
    _
  $region3: #{tile.33} parent=0 // pred_check_branch
    %3 = sbr.rel (0) target = $region5
  $region4: #{tile.33} parent=0 // pred_region
    _
  $region5: #{tile.33} parent=0 // pred_fallthru
    _
  %v4 = vld [vmem:[%s0] ss:$0 sm:$0xff]
  %5 = vst [vmem:[%s1] sm:$0xff] %v4

// kernel: tile.34
$region0: #{tile.34}
  %s0 = inlined_call_operand.vmem [shape: f32[8,32], index: 0, kind: input, shape index: {}]
  %s1 = inlined_call_operand.vmem [shape: f32[1,256], index: 1, kind: output, shape index: {}]
  $region1: #{tile.34} parent=0
    #allocation0 [shape = 'u8[8192]{0}', space=vmem, size = 0x2000, scoped, tag = 'scoped mem for output reshape']
    %s2 = smov 3
    %v3 = vld [vmem:[%s0] ss:$4 sm:%s2]
    %vm4 = vcmask 261120
    %5 = vst.msk [vmem:[#allocation0] ss:$8 sm:$0x3] %vm4, %v3
    %s6 = scalar_lea.vmem %s0, 3
    %s7 = smov 3
    %v8 = vld [vmem:[%s6] ss:$4 sm:%s7]
    %9 = vrot.lane.b32.xlu0 %v8, 96
    %v10 = vpop.permute.xlu0 %9
    %vm11 = vcmask 1048320
    %12 = vst.msk [vmem:[#allocation0] ss:$8 sm:$0x3] %vm11, %v10
    %s13 = scalar_lea.vmem %s0, 2
    %s14 = smov 3
    %v15 = vld [vmem:[%s13] ss:$4 sm:%s14]
    %16 = vrot.lane.b32.xlu0 %v15, 64
    %v17 = vpop.permute.xlu0 %16
    %vm18 = vcmask 785920
    %19 = vst.msk [vmem:[#allocation0] ss:$8 sm:$0x3] %vm18, %v17
    %s20 = scalar_lea.vmem %s0, 1
    %s21 = smov 3
    %v22 = vld [vmem:[%s20] ss:$4 sm:%s21]
    %23 = vrot.lane.b32.xlu0 %v22, 32
    %v24 = vpop.permute.xlu0 %23
    %vm25 = vcmask 523520
    %26 = vst.msk [vmem:[#allocation0] ss:$8 sm:$0x3] %vm25, %v24
    %s28 = sshll.u32 1, 1
    %s29 = ssub.s32 %s28, 1
    %v31 = vld [vmem:[#allocation0] sm:%s29]
    %s32 = sshll.u32 1, 1
    %s33 = ssub.s32 %s32, 1
    %34 = vst [vmem:[%s1] sm:%s33] %v31
    %s35 = scalar_lea.vmem [#allocation0], 8
    %v36 = vld [vmem:[%s35] sm:%s29]
    %s37 = sshll.u32 1, 1
    %s38 = ssub.s32 %s37, 1
    %s39 = scalar_lea.vmem %s1, 1
    %40 = vst [vmem:[%s39] sm:%s38] %v36

// kernel: residual_block.1
$region0: #{residual_block.1}
  #allocation0 [shape = 'u32[]', space=smem, size = 0x4, offset = 0x4, fixed_abs, tag = 'smem constant byte address 0x4 - core index']
  #allocation1 [shape = 'u32[144,128]{1,0:T(1,128)}', space=vmem, size = 0x12000, scoped, tag = 'internal scratch']
  #allocation2 [shape = 'f32[2,10,256]{2,1,0:T(8,128)}', space=vmem, size = 0x8000, scoped, tag = 'scratch operand']
  %s0 = inlined_call_operand.vmem [shape: f32[2,8,256], index: 0, kind: input, shape index: {}]
  %s1 = inlined_call_operand.vmem [shape: bf16[3,256,256], index: 1, kind: input, shape index: {}]
  %s2 = inlined_call_operand.vmem [shape: bf16[3,256,256], index: 2, kind: input, shape index: {}]
  %s3 = inlined_call_operand.vmem [shape: f32[1,256], index: 3, kind: input, shape index: {}]
  %s4 = inlined_call_operand.vmem [shape: f32[1,256], index: 4, kind: input, shape index: {}]
  %s5 = inlined_call_operand.vmem [shape: f32[1,256], index: 5, kind: input, shape index: {}]
  %s6 = inlined_call_operand.vmem [shape: f32[1,256], index: 6, kind: input, shape index: {}]
  %s7 = inlined_call_operand.vmem [shape: f32[256,256], index: 7, kind: input, shape index: {}]
  %s8 = inlined_call_operand.vmem [shape: f32[2,8,256], index: 8, kind: output, shape index: {}]
  %s9 = sld [smem:[#allocation0]]
  $region42: #{residual_block.1} parent=0
    _
  %s11 = ssub.s32 1, %s9
  %s12 = scalar_select 0, %s11, %s9
  // Predicated region
  $region2: #{residual_block.1} parent=0 // pred_check
    _
  $region3: #{residual_block.1} parent=0 // pred_check_branch
    %14 = sbr.rel (0) target = $region5
  $region4: #{residual_block.1} parent=0 // pred_region
    _
  $region5: #{residual_block.1} parent=0 // pred_fallthru
    _
  // Predicated region
  $region6: #{residual_block.1} parent=0 // pred_check
    _
  $region7: #{residual_block.1} parent=0 // pred_check_branch
    %16 = sbr.rel (0) target = $region9
  $region8: #{residual_block.1} parent=0 // pred_region
    _
  $region9: #{residual_block.1} parent=0 // pred_fallthru
    _
  // Predicated region
  $region10: #{residual_block.1} parent=0 // pred_check
    _
  $region11: #{residual_block.1} parent=0 // pred_check_branch
    %18 = sbr.rel (0) target = $region13
  $region12: #{residual_block.1} parent=0 // pred_region
    _
  $region13: #{residual_block.1} parent=0 // pred_fallthru
    _
  // Predicated region
  $region14: #{residual_block.1} parent=0 // pred_check
    _
  $region15: #{residual_block.1} parent=0 // pred_check_branch
    %20 = sbr.rel (0) target = $region17
  $region16: #{residual_block.1} parent=0 // pred_region
    _
  $region17: #{residual_block.1} parent=0 // pred_fallthru
    _
  // Predicated region
  $region18: #{residual_block.1} parent=0 // pred_check
    _
  $region19: #{residual_block.1} parent=0 // pred_check_branch
    %22 = sbr.rel (0) target = $region21
  $region20: #{residual_block.1} parent=0 // pred_region
    _
  $region21: #{residual_block.1} parent=0 // pred_fallthru
    _
  // Predicated region
  $region22: #{residual_block.1} parent=0 // pred_check
    _
  $region23: #{residual_block.1} parent=0 // pred_check_branch
    %24 = sbr.rel (0) target = $region25
  $region24: #{residual_block.1} parent=0 // pred_region
    _
  $region25: #{residual_block.1} parent=0 // pred_fallthru
    _
  // Predicated region
  $region26: #{residual_block.1} parent=0 // pred_check
    _
  $region27: #{residual_block.1} parent=0 // pred_check_branch
    %26 = sbr.rel (0) target = $region29
  $region28: #{residual_block.1} parent=0 // pred_region
    _
  $region29: #{residual_block.1} parent=0 // pred_fallthru
    _
  // Predicated region
  $region30: #{residual_block.1} parent=0 // pred_check
    _
  $region31: #{residual_block.1} parent=0 // pred_check_branch
    %28 = sbr.rel (0) target = $region33
  $region32: #{residual_block.1} parent=0 // pred_region
    _
  $region33: #{residual_block.1} parent=0 // pred_fallthru
    _
  %v29 = vlaneseq
  %vm30 = vcmp.ge.s32.totalorder %v29, 0
  %vm31 = vcmp.lt.s32.totalorder %v29, 256
  %vm32 = vmand %vm30, %vm31
  %33 = vst.msk [vmem:[#allocation2] ss:$8 sm:$0x3] %vm32, 0.0
  %34 = vst.msk [vmem:[#allocation2] ss:$8 sm:$0x0] %vm32, 0.0
  %s35 = scalar_lea.vmem [#allocation2], 32
  %36 = vst.msk [vmem:[%s35] ss:$8 sm:$0x3] %vm32, 0.0
  %37 = vst.msk [vmem:[%s35] ss:$8 sm:$0x0] %vm32, 0.0
  %s38 = scalar_lea.vmem [#allocation2], 17
  %39 = vst.msk [vmem:[%s38] ss:$8 sm:$0x3] %vm32, 0.0
  %40 = vst.msk [vmem:[%s38] ss:$8 sm:$0x0] %vm32, 0.0
  %s41 = scalar_lea.vmem [#allocation2], 49
  %42 = vst.msk [vmem:[%s41] ss:$8 sm:$0x3] %vm32, 0.0
  %43 = vst.msk [vmem:[%s41] ss:$8 sm:$0x0] %vm32, 0.0
  %v44 = vld [vmem:[%s0] sm:$0xff]
  %v45 = vld [vmem:[%s0 + $0x8] sm:$0xff]
  %v46 = vld [vmem:[%s0 + $0x10] sm:$0xff]
  %v47 = vld [vmem:[%s0 + $0x18] sm:$0xff]
  %v52 = vrot.slane %v44, 7
  %v53 = vrot.slane %v45, 7
  %v54 = vrot.slane %v46, 7
  %v55 = vrot.slane %v47, 7
  %60 = vst [vmem:[#allocation2] sm:$0xfe] %v52
  %61 = vst [vmem:[#allocation2 + $0x8] sm:$0xfe] %v53
  %62 = vst [vmem:[#allocation2 + $0x10] sm:$0x1] %v52
  %63 = vst [vmem:[#allocation2 + $0x18] sm:$0x1] %v53
  %64 = vst [vmem:[#allocation2 + $0x20] sm:$0xfe] %v54
  %65 = vst [vmem:[#allocation2 + $0x28] sm:$0xfe] %v55
  %66 = vst [vmem:[#allocation2 + $0x30] sm:$0x1] %v54
  %67 = vst [vmem:[#allocation2 + $0x38] sm:$0x1] %v55
  %v68 = vld [vmem:[#allocation2] sm:$0xff]
  %v69 = vld [vmem:[#allocation2 + $0x8] sm:$0xff]
  %v70 = vld [vmem:[#allocation2 + $0x20] sm:$0xff]
  %v71 = vld [vmem:[#allocation2 + $0x28] sm:$0xff]
  %v72 = vpack.c.bf16 %v70, %v68
  %v73 = vpack.c.bf16 %v71, %v69
  %v74 = vld [vmem:[%s1] sm:$0xff]
  %v75 = vld [vmem:[%s1 + $0x8] sm:$0xff]
  %v76 = vld [vmem:[%s1 + $0x10] sm:$0xff]
  %v77 = vld [vmem:[%s1 + $0x18] sm:$0xff]
  %v78 = vld [vmem:[%s1 + $0x20] sm:$0xff]
  %v79 = vld [vmem:[%s1 + $0x28] sm:$0xff]
  %v80 = vld [vmem:[%s1 + $0x30] sm:$0xff]
  %v81 = vld [vmem:[%s1 + $0x38] sm:$0xff]
  %v82 = vld [vmem:[%s1 + $0x40] sm:$0xff]
  %v83 = vld [vmem:[%s1 + $0x48] sm:$0xff]
  %v84 = vld [vmem:[%s1 + $0x50] sm:$0xff]
  %v85 = vld [vmem:[%s1 + $0x58] sm:$0xff]
  %v86 = vld [vmem:[%s1 + $0x60] sm:$0xff]
  %v87 = vld [vmem:[%s1 + $0x68] sm:$0xff]
  %v88 = vld [vmem:[%s1 + $0x70] sm:$0xff]
  %v89 = vld [vmem:[%s1 + $0x78] sm:$0xff]
  %v90 = vld [vmem:[%s1 + $0x80] sm:$0xff]
  %v91 = vld [vmem:[%s1 + $0x88] sm:$0xff]
  %v92 = vld [vmem:[%s1 + $0x90] sm:$0xff]
  %v93 = vld [vmem:[%s1 + $0x98] sm:$0xff]
  %v94 = vld [vmem:[%s1 + $0xa0] sm:$0xff]
  %v95 = vld [vmem:[%s1 + $0xa8] sm:$0xff]
  %v96 = vld [vmem:[%s1 + $0xb0] sm:$0xff]
  %v97 = vld [vmem:[%s1 + $0xb8] sm:$0xff]
  %v98 = vld [vmem:[%s1 + $0xc0] sm:$0xff]
  %v99 = vld [vmem:[%s1 + $0xc8] sm:$0xff]
  %v100 = vld [vmem:[%s1 + $0xd0] sm:$0xff]
  %v101 = vld [vmem:[%s1 + $0xd8] sm:$0xff]
  %v102 = vld [vmem:[%s1 + $0xe0] sm:$0xff]
  %v103 = vld [vmem:[%s1 + $0xe8] sm:$0xff]
  %v104 = vld [vmem:[%s1 + $0xf0] sm:$0xff]
  %v105 = vld [vmem:[%s1 + $0xf8] sm:$0xff]
  %v106 = vld [vmem:[#allocation2] sm:$0xfe]
  %v107 = vld [vmem:[#allocation2 + $0x8] sm:$0xfe]
  %v108 = vld [vmem:[#allocation2 + $0x10] sm:$0x1]
  %v109 = vld [vmem:[#allocation2 + $0x18] sm:$0x1]
  %v110 = vld [vmem:[#allocation2 + $0x20] sm:$0xfe]
  %v111 = vld [vmem:[#allocation2 + $0x28] sm:$0xfe]
  %v112 = vld [vmem:[#allocation2 + $0x30] sm:$0x1]
  %v113 = vld [vmem:[#allocation2 + $0x38] sm:$0x1]
  %vm122 = vcmask 1046528
  %v123 = vrot.slane %v106, 1
  %v124 = vrot.slane %v108, 1
  %v125 = vsel %vm122, %v123, %v124
  %v126 = vrot.slane %v107, 1
  %v127 = vrot.slane %v109, 1
  %v128 = vsel %vm122, %v126, %v127
  %v129 = vrot.slane %v110, 1
  %v130 = vrot.slane %v112, 1
  %v131 = vsel %vm122, %v129, %v130
  %v132 = vrot.slane %v111, 1
  %v133 = vrot.slane %v113, 1
  %v134 = vsel %vm122, %v132, %v133
  %v139 = vpack.c.bf16 %v131, %v125
  %v140 = vpack.c.bf16 %v134, %v128
  %s141 = scalar_lea.vmem %s1, 256
  %v142 = vld [vmem:[%s141] sm:$0xff]
  %v143 = vld [vmem:[%s141 + $0x8] sm:$0xff]
  %v144 = vld [vmem:[%s141 + $0x10] sm:$0xff]
  %v145 = vld [vmem:[%s141 + $0x18] sm:$0xff]
  %v146 = vld [vmem:[%s141 + $0x20] sm:$0xff]
  %v147 = vld [vmem:[%s141 + $0x28] sm:$0xff]
  %v148 = vld [vmem:[%s141 + $0x30] sm:$0xff]
  %v149 = vld [vmem:[%s141 + $0x38] sm:$0xff]
  %v150 = vld [vmem:[%s141 + $0x40] sm:$0xff]
  %v151 = vld [vmem:[%s141 + $0x48] sm:$0xff]
  %v152 = vld [vmem:[%s141 + $0x50] sm:$0xff]
  %v153 = vld [vmem:[%s141 + $0x58] sm:$0xff]
  %v154 = vld [vmem:[%s141 + $0x60] sm:$0xff]
  %v155 = vld [vmem:[%s141 + $0x68] sm:$0xff]
  %v156 = vld [vmem:[%s141 + $0x70] sm:$0xff]
  %v157 = vld [vmem:[%s141 + $0x78] sm:$0xff]
  %v158 = vld [vmem:[%s141 + $0x80] sm:$0xff]
  %v159 = vld [vmem:[%s141 + $0x88] sm:$0xff]
  %v160 = vld [vmem:[%s141 + $0x90] sm:$0xff]
  %v161 = vld [vmem:[%s141 + $0x98] sm:$0xff]
  %v162 = vld [vmem:[%s141 + $0xa0] sm:$0xff]
  %v163 = vld [vmem:[%s141 + $0xa8] sm:$0xff]
  %v164 = vld [vmem:[%s141 + $0xb0] sm:$0xff]
  %v165 = vld [vmem:[%s141 + $0xb8] sm:$0xff]
  %v166 = vld [vmem:[%s141 + $0xc0] sm:$0xff]
  %v167 = vld [vmem:[%s141 + $0xc8] sm:$0xff]
  %v168 = vld [vmem:[%s141 + $0xd0] sm:$0xff]
  %v169 = vld [vmem:[%s141 + $0xd8] sm:$0xff]
  %v170 = vld [vmem:[%s141 + $0xe0] sm:$0xff]
  %v171 = vld [vmem:[%s141 + $0xe8] sm:$0xff]
  %v172 = vld [vmem:[%s141 + $0xf0] sm:$0xff]
  %v173 = vld [vmem:[%s141 + $0xf8] sm:$0xff]
  %v206 = vunpack.c.l.b16 %v142
  %v207 = vunpack.c.h.b16 %v142
  %v208 = vunpack.c.l.b16 %v143
  %v209 = vunpack.c.h.b16 %v143
  %v210 = vunpack.c.l.b16 %v144
  %v211 = vunpack.c.h.b16 %v144
  %v212 = vunpack.c.l.b16 %v145
  %v213 = vunpack.c.h.b16 %v145
  %v214 = vunpack.c.l.b16 %v146
  %v215 = vunpack.c.h.b16 %v146
  %v216 = vunpack.c.l.b16 %v147
  %v217 = vunpack.c.h.b16 %v147
  %v218 = vunpack.c.l.b16 %v148
  %v219 = vunpack.c.h.b16 %v148
  %v220 = vunpack.c.l.b16 %v149
  %v221 = vunpack.c.h.b16 %v149
  %v222 = vunpack.c.l.b16 %v150
  %v223 = vunpack.c.h.b16 %v150
  %v224 = vunpack.c.l.b16 %v151
  %v225 = vunpack.c.h.b16 %v151
  %v226 = vunpack.c.l.b16 %v152
  %v227 = vunpack.c.h.b16 %v152
  %v228 = vunpack.c.l.b16 %v153
  %v229 = vunpack.c.h.b16 %v153
  %v230 = vunpack.c.l.b16 %v154
  %v231 = vunpack.c.h.b16 %v154
  %v232 = vunpack.c.l.b16 %v155
  %v233 = vunpack.c.h.b16 %v155
  %v234 = vunpack.c.l.b16 %v156
  %v235 = vunpack.c.h.b16 %v156
  %v236 = vunpack.c.l.b16 %v157
  %v237 = vunpack.c.h.b16 %v157
  %v238 = vunpack.c.l.b16 %v158
  %v239 = vunpack.c.h.b16 %v158
  %v240 = vunpack.c.l.b16 %v159
  %v241 = vunpack.c.h.b16 %v159
  %v242 = vunpack.c.l.b16 %v160
  %v243 = vunpack.c.h.b16 %v160
  %v244 = vunpack.c.l.b16 %v161
  %v245 = vunpack.c.h.b16 %v161
  %v246 = vunpack.c.l.b16 %v162
  %v247 = vunpack.c.h.b16 %v162
  %v248 = vunpack.c.l.b16 %v163
  %v249 = vunpack.c.h.b16 %v163
  %v250 = vunpack.c.l.b16 %v164
  %v251 = vunpack.c.h.b16 %v164
  %v252 = vunpack.c.l.b16 %v165
  %v253 = vunpack.c.h.b16 %v165
  %v254 = vunpack.c.l.b16 %v166
  %v255 = vunpack.c.h.b16 %v166
  %v256 = vunpack.c.l.b16 %v167
  %v257 = vunpack.c.h.b16 %v167
  %v258 = vunpack.c.l.b16 %v168
  %v259 = vunpack.c.h.b16 %v168
  %v260 = vunpack.c.l.b16 %v169
  %v261 = vunpack.c.h.b16 %v169
  %v262 = vunpack.c.l.b16 %v170
  %v263 = vunpack.c.h.b16 %v170
  %v264 = vunpack.c.l.b16 %v171
  %v265 = vunpack.c.h.b16 %v171
  %v266 = vunpack.c.l.b16 %v172
  %v267 = vunpack.c.h.b16 %v172
  %v268 = vunpack.c.l.b16 %v173
  %v269 = vunpack.c.h.b16 %v173
  %v270 = vpack.c.b16 %v208, %v206
  %v271 = vpack.c.b16 %v209, %v207
  %v272 = vpack.c.b16 %v212, %v210
  %v273 = vpack.c.b16 %v213, %v211
  %v274 = vpack.c.b16 %v216, %v214
  %v275 = vpack.c.b16 %v217, %v215
  %v276 = vpack.c.b16 %v220, %v218
  %v277 = vpack.c.b16 %v221, %v219
  %v278 = vpack.c.b16 %v224, %v222
  %v279 = vpack.c.b16 %v225, %v223
  %v280 = vpack.c.b16 %v228, %v226
  %v281 = vpack.c.b16 %v229, %v227
  %v282 = vpack.c.b16 %v232, %v230
  %v283 = vpack.c.b16 %v233, %v231
  %v284 = vpack.c.b16 %v236, %v234
  %v285 = vpack.c.b16 %v237, %v235
  %v286 = vpack.c.b16 %v240, %v238
  %v287 = vpack.c.b16 %v241, %v239
  %v288 = vpack.c.b16 %v244, %v242
  %v289 = vpack.c.b16 %v245, %v243
  %v290 = vpack.c.b16 %v248, %v246
  %v291 = vpack.c.b16 %v249, %v247
  %v292 = vpack.c.b16 %v252, %v250
  %v293 = vpack.c.b16 %v253, %v251
  %v294 = vpack.c.b16 %v256, %v254
  %v295 = vpack.c.b16 %v257, %v255
  %v296 = vpack.c.b16 %v260, %v258
  %v297 = vpack.c.b16 %v261, %v259
  %v298 = vpack.c.b16 %v264, %v262
  %v299 = vpack.c.b16 %v265, %v263
  %v300 = vpack.c.b16 %v268, %v266
  %v301 = vpack.c.b16 %v269, %v267
  %334 = vmatprep.subr.bf16.mxu0 %v285
  %335 = vmatpush1.bf16.msra.mxu0 %v284
  %336 = vmatprep.subr.bf16.mxu0 %v283
  %337 = vmatpush1.bf16.msra.mxu0 %v282
  %338 = vmatprep.subr.bf16.mxu0 %v281
  %339 = vmatpush1.bf16.msra.mxu0 %v280
  %340 = vmatprep.subr.bf16.mxu0 %v279
  %341 = vmatpush1.bf16.msra.mxu0 %v278
  %342 = vmatprep.subr.bf16.mxu0 %v277
  %343 = vmatpush1.bf16.msra.mxu0 %v276
  %344 = vmatprep.subr.bf16.mxu0 %v275
  %345 = vmatpush1.bf16.msra.mxu0 %v274
  %346 = vmatprep.subr.bf16.mxu0 %v273
  %347 = vmatpush1.bf16.msra.mxu0 %v272
  %348 = vmatprep.subr.bf16.mxu0 %v271
  %349 = vmatpush1.bf16.msra.mxu0 %v270
  %350 = vmatprep.subr.bf16.mxu0 %v301
  %351 = vmatpush2.bf16.msra.mxu0 %v300
  %352 = vmatprep.subr.bf16.mxu0 %v299
  %353 = vmatpush2.bf16.msra.mxu0 %v298
  %354 = vmatprep.subr.bf16.mxu0 %v297
  %355 = vmatpush2.bf16.msra.mxu0 %v296
  %356 = vmatprep.subr.bf16.mxu0 %v295
  %357 = vmatpush2.bf16.msra.mxu0 %v294
  %358 = vmatprep.subr.bf16.mxu0 %v293
  %359 = vmatpush2.bf16.msra.mxu0 %v292
  %360 = vmatprep.subr.bf16.mxu0 %v291
  %361 = vmatpush2.bf16.msra.mxu0 %v290
  %362 = vmatprep.subr.bf16.mxu0 %v289
  %363 = vmatpush2.bf16.msra.mxu0 %v288
  %364 = vmatprep.subr.bf16.mxu0 %v287
  %365 = vmatpush2.bf16.msra.mxu0 %v286
  %366 = vmatprep.mubr.bf16.mxu0 %v140
  %367 = vmatmul.mubr.bf16.gmra.mxu0 %v139
  %v368 = vpop.f32.mrf.mxu0
  %v369 = vadd.f32 0.0, %v368
  %v370 = vpop.f32.mrf.mxu0
  %v371 = vadd.f32 0.0, %v370
  %v372 = vpop.f32.mrf.mxu0
  %v373 = vadd.f32 0.0, %v372
  %v374 = vpop.f32.mrf.mxu0
  %v375 = vadd.f32 0.0, %v374
  %376 = vdwg.mxu0
  %v409 = vunpack.c.l.b16 %v74
  %v410 = vunpack.c.h.b16 %v74
  %v411 = vunpack.c.l.b16 %v75
  %v412 = vunpack.c.h.b16 %v75
  %v413 = vunpack.c.l.b16 %v76
  %v414 = vunpack.c.h.b16 %v76
  %v415 = vunpack.c.l.b16 %v77
  %v416 = vunpack.c.h.b16 %v77
  %v417 = vunpack.c.l.b16 %v78
  %v418 = vunpack.c.h.b16 %v78
  %v419 = vunpack.c.l.b16 %v79
  %v420 = vunpack.c.h.b16 %v79
  %v421 = vunpack.c.l.b16 %v80
  %v422 = vunpack.c.h.b16 %v80
  %v423 = vunpack.c.l.b16 %v81
  %v424 = vunpack.c.h.b16 %v81
  %v425 = vunpack.c.l.b16 %v82
  %v426 = vunpack.c.h.b16 %v82
  %v427 = vunpack.c.l.b16 %v83
  %v428 = vunpack.c.h.b16 %v83
  %v429 = vunpack.c.l.b16 %v84
  %v430 = vunpack.c.h.b16 %v84
  %v431 = vunpack.c.l.b16 %v85
  %v432 = vunpack.c.h.b16 %v85
  %v433 = vunpack.c.l.b16 %v86
  %v434 = vunpack.c.h.b16 %v86
  %v435 = vunpack.c.l.b16 %v87
  %v436 = vunpack.c.h.b16 %v87
  %v437 = vunpack.c.l.b16 %v88
  %v438 = vunpack.c.h.b16 %v88
  %v439 = vunpack.c.l.b16 %v89
  %v440 = vunpack.c.h.b16 %v89
  %v441 = vunpack.c.l.b16 %v90
  %v442 = vunpack.c.h.b16 %v90
  %v443 = vunpack.c.l.b16 %v91
  %v444 = vunpack.c.h.b16 %v91
  %v445 = vunpack.c.l.b16 %v92
  %v446 = vunpack.c.h.b16 %v92
  %v447 = vunpack.c.l.b16 %v93
  %v448 = vunpack.c.h.b16 %v93
  %v449 = vunpack.c.l.b16 %v94
  %v450 = vunpack.c.h.b16 %v94
  %v451 = vunpack.c.l.b16 %v95
  %v452 = vunpack.c.h.b16 %v95
  %v453 = vunpack.c.l.b16 %v96
  %v454 = vunpack.c.h.b16 %v96
  %v455 = vunpack.c.l.b16 %v97
  %v456 = vunpack.c.h.b16 %v97
  %v457 = vunpack.c.l.b16 %v98
  %v458 = vunpack.c.h.b16 %v98
  %v459 = vunpack.c.l.b16 %v99
  %v460 = vunpack.c.h.b16 %v99
  %v461 = vunpack.c.l.b16 %v100
  %v462 = vunpack.c.h.b16 %v100
  %v463 = vunpack.c.l.b16 %v101
  %v464 = vunpack.c.h.b16 %v101
  %v465 = vunpack.c.l.b16 %v102
  %v466 = vunpack.c.h.b16 %v102
  %v467 = vunpack.c.l.b16 %v103
  %v468 = vunpack.c.h.b16 %v103
  %v469 = vunpack.c.l.b16 %v104
  %v470 = vunpack.c.h.b16 %v104
  %v471 = vunpack.c.l.b16 %v105
  %v472 = vunpack.c.h.b16 %v105
  %v473 = vpack.c.b16 %v411, %v409
  %v474 = vpack.c.b16 %v412, %v410
  %v475 = vpack.c.b16 %v415, %v413
  %v476 = vpack.c.b16 %v416, %v414
  %v477 = vpack.c.b16 %v419, %v417
  %v478 = vpack.c.b16 %v420, %v418
  %v479 = vpack.c.b16 %v423, %v421
  %v480 = vpack.c.b16 %v424, %v422
  %v481 = vpack.c.b16 %v427, %v425
  %v482 = vpack.c.b16 %v428, %v426
  %v483 = vpack.c.b16 %v431, %v429
  %v484 = vpack.c.b16 %v432, %v430
  %v485 = vpack.c.b16 %v435, %v433
  %v486 = vpack.c.b16 %v436, %v434
  %v487 = vpack.c.b16 %v439, %v437
  %v488 = vpack.c.b16 %v440, %v438
  %v489 = vpack.c.b16 %v443, %v441
  %v490 = vpack.c.b16 %v444, %v442
  %v491 = vpack.c.b16 %v447, %v445
  %v492 = vpack.c.b16 %v448, %v446
  %v493 = vpack.c.b16 %v451, %v449
  %v494 = vpack.c.b16 %v452, %v450
  %v495 = vpack.c.b16 %v455, %v453
  %v496 = vpack.c.b16 %v456, %v454
  %v497 = vpack.c.b16 %v459, %v457
  %v498 = vpack.c.b16 %v460, %v458
  %v499 = vpack.c.b16 %v463, %v461
  %v500 = vpack.c.b16 %v464, %v462
  %v501 = vpack.c.b16 %v467, %v465
  %v502 = vpack.c.b16 %v468, %v466
  %v503 = vpack.c.b16 %v471, %v469
  %v504 = vpack.c.b16 %v472, %v470
  %537 = vmatprep.subr.bf16.mxu0 %v488
  %538 = vmatpush1.bf16.msra.mxu0 %v487
  %539 = vmatprep.subr.bf16.mxu0 %v486
  %540 = vmatpush1.bf16.msra.mxu0 %v485
  %541 = vmatprep.subr.bf16.mxu0 %v484
  %542 = vmatpush1.bf16.msra.mxu0 %v483
  %543 = vmatprep.subr.bf16.mxu0 %v482
  %544 = vmatpush1.bf16.msra.mxu0 %v481
  %545 = vmatprep.subr.bf16.mxu0 %v480
  %546 = vmatpush1.bf16.msra.mxu0 %v479
  %547 = vmatprep.subr.bf16.mxu0 %v478
  %548 = vmatpush1.bf16.msra.mxu0 %v477
  %549 = vmatprep.subr.bf16.mxu0 %v476
  %550 = vmatpush1.bf16.msra.mxu0 %v475
  %551 = vmatprep.subr.bf16.mxu0 %v474
  %552 = vmatpush1.bf16.msra.mxu0 %v473
  %553 = vmatprep.subr.bf16.mxu0 %v504
  %554 = vmatpush2.bf16.msra.mxu0 %v503
  %555 = vmatprep.subr.bf16.mxu0 %v502
  %556 = vmatpush2.bf16.msra.mxu0 %v501
  %557 = vmatprep.subr.bf16.mxu0 %v500
  %558 = vmatpush2.bf16.msra.mxu0 %v499
  %559 = vmatprep.subr.bf16.mxu0 %v498
  %560 = vmatpush2.bf16.msra.mxu0 %v497
  %561 = vmatprep.subr.bf16.mxu0 %v496
  %562 = vmatpush2.bf16.msra.mxu0 %v495
  %563 = vmatprep.subr.bf16.mxu0 %v494
  %564 = vmatpush2.bf16.msra.mxu0 %v493
  %565 = vmatprep.subr.bf16.mxu0 %v492
  %566 = vmatpush2.bf16.msra.mxu0 %v491
  %567 = vmatprep.subr.bf16.mxu0 %v490
  %568 = vmatpush2.bf16.msra.mxu0 %v489
  %569 = vmatprep.mubr.bf16.mxu0 %v73
  %570 = vmatmul.mubr.bf16.gmra.mxu0 %v72
  %v571 = vpop.f32.mrf.mxu0
  %v572 = vadd.f32 %v369, %v571
  %v573 = vpop.f32.mrf.mxu0
  %v574 = vadd.f32 %v371, %v573
  %v575 = vpop.f32.mrf.mxu0
  %v576 = vadd.f32 %v373, %v575
  %v577 = vpop.f32.mrf.mxu0
  %v578 = vadd.f32 %v375, %v577
  %579 = vdwg.mxu0
  %v580 = vld [vmem:[#allocation2] sm:$0xfc]
  %v581 = vld [vmem:[#allocation2 + $0x8] sm:$0xfc]
  %v582 = vld [vmem:[#allocation2 + $0x10] sm:$0x3]
  %v583 = vld [vmem:[#allocation2 + $0x18] sm:$0x3]
  %v584 = vld [vmem:[#allocation2 + $0x20] sm:$0xfc]
  %v585 = vld [vmem:[#allocation2 + $0x28] sm:$0xfc]
  %v586 = vld [vmem:[#allocation2 + $0x30] sm:$0x3]
  %v587 = vld [vmem:[#allocation2 + $0x38] sm:$0x3]
  %vm596 = vcmask 1045504
  %v597 = vrot.slane %v580, 2
  %v598 = vrot.slane %v582, 2
  %v599 = vsel %vm596, %v597, %v598
  %v600 = vrot.slane %v581, 2
  %v601 = vrot.slane %v583, 2
  %v602 = vsel %vm596, %v600, %v601
  %v603 = vrot.slane %v584, 2
  %v604 = vrot.slane %v586, 2
  %v605 = vsel %vm596, %v603, %v604
  %v606 = vrot.slane %v585, 2
  %v607 = vrot.slane %v587, 2
  %v608 = vsel %vm596, %v606, %v607
  %v613 = vpack.c.bf16 %v605, %v599
  %v614 = vpack.c.bf16 %v608, %v602
  %s615 = scalar_lea.vmem %s1, 512
  %v616 = vld [vmem:[%s615] sm:$0xff]
  %v617 = vld [vmem:[%s615 + $0x8] sm:$0xff]
  %v618 = vld [vmem:[%s615 + $0x10] sm:$0xff]
  %v619 = vld [vmem:[%s615 + $0x18] sm:$0xff]
  %v620 = vld [vmem:[%s615 + $0x20] sm:$0xff]
  %v621 = vld [vmem:[%s615 + $0x28] sm:$0xff]
  %v622 = vld [vmem:[%s615 + $0x30] sm:$0xff]
  %v623 = vld [vmem:[%s615 + $0x38] sm:$0xff]
  %v624 = vld [vmem:[%s615 + $0x40] sm:$0xff]
  %v625 = vld [vmem:[%s615 + $0x48] sm:$0xff]
  %v626 = vld [vmem:[%s615 + $0x50] sm:$0xff]
  %v627 = vld [vmem:[%s615 + $0x58] sm:$0xff]
  %v628 = vld [vmem:[%s615 + $0x60] sm:$0xff]
  %v629 = vld [vmem:[%s615 + $0x68] sm:$0xff]
  %v630 = vld [vmem:[%s615 + $0x70] sm:$0xff]
  %v631 = vld [vmem:[%s615 + $0x78] sm:$0xff]
  %v632 = vld [vmem:[%s615 + $0x80] sm:$0xff]
  %v633 = vld [vmem:[%s615 + $0x88] sm:$0xff]
  %v634 = vld [vmem:[%s615 + $0x90] sm:$0xff]
  %v635 = vld [vmem:[%s615 + $0x98] sm:$0xff]
  %v636 = vld [vmem:[%s615 + $0xa0] sm:$0xff]
  %v637 = vld [vmem:[%s615 + $0xa8] sm:$0xff]
  %v638 = vld [vmem:[%s615 + $0xb0] sm:$0xff]
  %v639 = vld [vmem:[%s615 + $0xb8] sm:$0xff]
  %v640 = vld [vmem:[%s615 + $0xc0] sm:$0xff]
  %v641 = vld [vmem:[%s615 + $0xc8] sm:$0xff]
  %v642 = vld [vmem:[%s615 + $0xd0] sm:$0xff]
  %v643 = vld [vmem:[%s615 + $0xd8] sm:$0xff]
  %v644 = vld [vmem:[%s615 + $0xe0] sm:$0xff]
  %v645 = vld [vmem:[%s615 + $0xe8] sm:$0xff]
  %v646 = vld [vmem:[%s615 + $0xf0] sm:$0xff]
  %v647 = vld [vmem:[%s615 + $0xf8] sm:$0xff]
  %v680 = vunpack.c.l.b16 %v616
  %v681 = vunpack.c.h.b16 %v616
  %v682 = vunpack.c.l.b16 %v617
  %v683 = vunpack.c.h.b16 %v617
  %v684 = vunpack.c.l.b16 %v618
  %v685 = vunpack.c.h.b16 %v618
  %v686 = vunpack.c.l.b16 %v619
  %v687 = vunpack.c.h.b16 %v619
  %v688 = vunpack.c.l.b16 %v620
  %v689 = vunpack.c.h.b16 %v620
  %v690 = vunpack.c.l.b16 %v621
  %v691 = vunpack.c.h.b16 %v621
  %v692 = vunpack.c.l.b16 %v622
  %v693 = vunpack.c.h.b16 %v622
  %v694 = vunpack.c.l.b16 %v623
  %v695 = vunpack.c.h.b16 %v623
  %v696 = vunpack.c.l.b16 %v624
  %v697 = vunpack.c.h.b16 %v624
  %v698 = vunpack.c.l.b16 %v625
  %v699 = vunpack.c.h.b16 %v625
  %v700 = vunpack.c.l.b16 %v626
  %v701 = vunpack.c.h.b16 %v626
  %v702 = vunpack.c.l.b16 %v627
  %v703 = vunpack.c.h.b16 %v627
  %v704 = vunpack.c.l.b16 %v628
  %v705 = vunpack.c.h.b16 %v628
  %v706 = vunpack.c.l.b16 %v629
  %v707 = vunpack.c.h.b16 %v629
  %v708 = vunpack.c.l.b16 %v630
  %v709 = vunpack.c.h.b16 %v630
  %v710 = vunpack.c.l.b16 %v631
  %v711 = vunpack.c.h.b16 %v631
  %v712 = vunpack.c.l.b16 %v632
  %v713 = vunpack.c.h.b16 %v632
  %v714 = vunpack.c.l.b16 %v633
  %v715 = vunpack.c.h.b16 %v633
  %v716 = vunpack.c.l.b16 %v634
  %v717 = vunpack.c.h.b16 %v634
  %v718 = vunpack.c.l.b16 %v635
  %v719 = vunpack.c.h.b16 %v635
  %v720 = vunpack.c.l.b16 %v636
  %v721 = vunpack.c.h.b16 %v636
  %v722 = vunpack.c.l.b16 %v637
  %v723 = vunpack.c.h.b16 %v637
  %v724 = vunpack.c.l.b16 %v638
  %v725 = vunpack.c.h.b16 %v638
  %v726 = vunpack.c.l.b16 %v639
  %v727 = vunpack.c.h.b16 %v639
  %v728 = vunpack.c.l.b16 %v640
  %v729 = vunpack.c.h.b16 %v640
  %v730 = vunpack.c.l.b16 %v641
  %v731 = vunpack.c.h.b16 %v641
  %v732 = vunpack.c.l.b16 %v642
  %v733 = vunpack.c.h.b16 %v642
  %v734 = vunpack.c.l.b16 %v643
  %v735 = vunpack.c.h.b16 %v643
  %v736 = vunpack.c.l.b16 %v644
  %v737 = vunpack.c.h.b16 %v644
  %v738 = vunpack.c.l.b16 %v645
  %v739 = vunpack.c.h.b16 %v645
  %v740 = vunpack.c.l.b16 %v646
  %v741 = vunpack.c.h.b16 %v646
  %v742 = vunpack.c.l.b16 %v647
  %v743 = vunpack.c.h.b16 %v647
  %v744 = vpack.c.b16 %v682, %v680
  %v745 = vpack.c.b16 %v683, %v681
  %v746 = vpack.c.b16 %v686, %v684
  %v747 = vpack.c.b16 %v687, %v685
  %v748 = vpack.c.b16 %v690, %v688
  %v749 = vpack.c.b16 %v691, %v689
  %v750 = vpack.c.b16 %v694, %v692
  %v751 = vpack.c.b16 %v695, %v693
  %v752 = vpack.c.b16 %v698, %v696
  %v753 = vpack.c.b16 %v699, %v697
  %v754 = vpack.c.b16 %v702, %v700
  %v755 = vpack.c.b16 %v703, %v701
  %v756 = vpack.c.b16 %v706, %v704
  %v757 = vpack.c.b16 %v707, %v705
  %v758 = vpack.c.b16 %v710, %v708
  %v759 = vpack.c.b16 %v711, %v709
  %v760 = vpack.c.b16 %v714, %v712
  %v761 = vpack.c.b16 %v715, %v713
  %v762 = vpack.c.b16 %v718, %v716
  %v763 = vpack.c.b16 %v719, %v717
  %v764 = vpack.c.b16 %v722, %v720
  %v765 = vpack.c.b16 %v723, %v721
  %v766 = vpack.c.b16 %v726, %v724
  %v767 = vpack.c.b16 %v727, %v725
  %v768 = vpack.c.b16 %v730, %v728
  %v769 = vpack.c.b16 %v731, %v729
  %v770 = vpack.c.b16 %v734, %v732
  %v771 = vpack.c.b16 %v735, %v733
  %v772 = vpack.c.b16 %v738, %v736
  %v773 = vpack.c.b16 %v739, %v737
  %v774 = vpack.c.b16 %v742, %v740
  %v775 = vpack.c.b16 %v743, %v741
  %808 = vmatprep.subr.bf16.mxu0 %v759
  %809 = vmatpush1.bf16.msra.mxu0 %v758
  %810 = vmatprep.subr.bf16.mxu0 %v757
  %811 = vmatpush1.bf16.msra.mxu0 %v756
  %812 = vmatprep.subr.bf16.mxu0 %v755
  %813 = vmatpush1.bf16.msra.mxu0 %v754
  %814 = vmatprep.subr.bf16.mxu0 %v753
  %815 = vmatpush1.bf16.msra.mxu0 %v752
  %816 = vmatprep.subr.bf16.mxu0 %v751
  %817 = vmatpush1.bf16.msra.mxu0 %v750
  %818 = vmatprep.subr.bf16.mxu0 %v749
  %819 = vmatpush1.bf16.msra.mxu0 %v748
  %820 = vmatprep.subr.bf16.mxu0 %v747
  %821 = vmatpush1.bf16.msra.mxu0 %v746
  %822 = vmatprep.subr.bf16.mxu0 %v745
  %823 = vmatpush1.bf16.msra.mxu0 %v744
  %824 = vmatprep.subr.bf16.mxu0 %v775
  %825 = vmatpush2.bf16.msra.mxu0 %v774
  %826 = vmatprep.subr.bf16.mxu0 %v773
  %827 = vmatpush2.bf16.msra.mxu0 %v772
  %828 = vmatprep.subr.bf16.mxu0 %v771
  %829 = vmatpush2.bf16.msra.mxu0 %v770
  %830 = vmatprep.subr.bf16.mxu0 %v769
  %831 = vmatpush2.bf16.msra.mxu0 %v768
  %832 = vmatprep.subr.bf16.mxu0 %v767
  %833 = vmatpush2.bf16.msra.mxu0 %v766
  %834 = vmatprep.subr.bf16.mxu0 %v765
  %835 = vmatpush2.bf16.msra.mxu0 %v764
  %836 = vmatprep.subr.bf16.mxu0 %v763
  %837 = vmatpush2.bf16.msra.mxu0 %v762
  %838 = vmatprep.subr.bf16.mxu0 %v761
  %839 = vmatpush2.bf16.msra.mxu0 %v760
  %840 = vmatprep.mubr.bf16.mxu0 %v614
  %841 = vmatmul.mubr.bf16.gmra.mxu0 %v613
  %v842 = vpop.f32.mrf.mxu0
  %v843 = vadd.f32 0.0, %v842
  %v844 = vpop.f32.mrf.mxu0
  %v845 = vadd.f32 0.0, %v844
  %v846 = vpop.f32.mrf.mxu0
  %v847 = vadd.f32 0.0, %v846
  %v848 = vpop.f32.mrf.mxu0
  %v849 = vadd.f32 0.0, %v848
  %850 = vdwg.mxu0
  %v851 = vadd.f32 %v572, %v843
  %v852 = vadd.f32 %v574, %v845
  %v853 = vadd.f32 %v576, %v847
  %v854 = vadd.f32 %v578, %v849
  %v855 = vld [vmem:[%s3] sm:$0x3]
  %v856 = vld [vmem:[%s4] sm:$0x3]
  %v857 = vadd.f32 %v851, %v853
  %v858 = vrot.slane %v857, 4
  %v859 = vadd.f32 %v857, %v858
  %v860 = vrot.slane %v859, 2
  %v861 = vadd.f32 %v859, %v860
  %v862 = vrot.slane %v861, 1
  %v863 = vadd.f32 %v861, %v862
  %v864 = vadd.f32 %v852, %v854
  %v865 = vrot.slane %v864, 4
  %v866 = vadd.f32 %v864, %v865
  %v867 = vrot.slane %v866, 2
  %v868 = vadd.f32 %v866, %v867
  %v869 = vrot.slane %v868, 1
  %v870 = vadd.f32 %v868, %v869
  %v871 = vld [vmem:[%s7] sm:$0xff]
  %v872 = vld [vmem:[%s7 + $0x8] sm:$0xff]
  %v873 = vld [vmem:[%s7 + $0x10] sm:$0xff]
  %v874 = vld [vmem:[%s7 + $0x18] sm:$0xff]
  %v875 = vld [vmem:[%s7 + $0x20] sm:$0xff]
  %v876 = vld [vmem:[%s7 + $0x28] sm:$0xff]
  %v877 = vld [vmem:[%s7 + $0x30] sm:$0xff]
  %v878 = vld [vmem:[%s7 + $0x38] sm:$0xff]
  %v879 = vld [vmem:[%s7 + $0x40] sm:$0xff]
  %v880 = vld [vmem:[%s7 + $0x48] sm:$0xff]
  %v881 = vld [vmem:[%s7 + $0x50] sm:$0xff]
  %v882 = vld [vmem:[%s7 + $0x58] sm:$0xff]
  %v883 = vld [vmem:[%s7 + $0x60] sm:$0xff]
  %v884 = vld [vmem:[%s7 + $0x68] sm:$0xff]
  %v885 = vld [vmem:[%s7 + $0x70] sm:$0xff]
  %v886 = vld [vmem:[%s7 + $0x78] sm:$0xff]
  %v887 = vld [vmem:[%s7 + $0x80] sm:$0xff]
  %v888 = vld [vmem:[%s7 + $0x88] sm:$0xff]
  %v889 = vld [vmem:[%s7 + $0x90] sm:$0xff]
  %v890 = vld [vmem:[%s7 + $0x98] sm:$0xff]
  %v891 = vld [vmem:[%s7 + $0xa0] sm:$0xff]
  %v892 = vld [vmem:[%s7 + $0xa8] sm:$0xff]
  %v893 = vld [vmem:[%s7 + $0xb0] sm:$0xff]
  %v894 = vld [vmem:[%s7 + $0xb8] sm:$0xff]
  %v895 = vld [vmem:[%s7 + $0xc0] sm:$0xff]
  %v896 = vld [vmem:[%s7 + $0xc8] sm:$0xff]
  %v897 = vld [vmem:[%s7 + $0xd0] sm:$0xff]
  %v898 = vld [vmem:[%s7 + $0xd8] sm:$0xff]
  %v899 = vld [vmem:[%s7 + $0xe0] sm:$0xff]
  %v900 = vld [vmem:[%s7 + $0xe8] sm:$0xff]
  %v901 = vld [vmem:[%s7 + $0xf0] sm:$0xff]
  %v902 = vld [vmem:[%s7 + $0xf8] sm:$0xff]
  %v903 = vld [vmem:[%s7 + $0x100] sm:$0xff]
  %v904 = vld [vmem:[%s7 + $0x108] sm:$0xff]
  %v905 = vld [vmem:[%s7 + $0x110] sm:$0xff]
  %v906 = vld [vmem:[%s7 + $0x118] sm:$0xff]
  %v907 = vld [vmem:[%s7 + $0x120] sm:$0xff]
  %v908 = vld [vmem:[%s7 + $0x128] sm:$0xff]
  %v909 = vld [vmem:[%s7 + $0x130] sm:$0xff]
  %v910 = vld [vmem:[%s7 + $0x138] sm:$0xff]
  %v911 = vld [vmem:[%s7 + $0x140] sm:$0xff]
  %v912 = vld [vmem:[%s7 + $0x148] sm:$0xff]
  %v913 = vld [vmem:[%s7 + $0x150] sm:$0xff]
  %v914 = vld [vmem:[%s7 + $0x158] sm:$0xff]
  %v915 = vld [vmem:[%s7 + $0x160] sm:$0xff]
  %v916 = vld [vmem:[%s7 + $0x168] sm:$0xff]
  %v917 = vld [vmem:[%s7 + $0x170] sm:$0xff]
  %v918 = vld [vmem:[%s7 + $0x178] sm:$0xff]
  %v919 = vld [vmem:[%s7 + $0x180] sm:$0xff]
  %v920 = vld [vmem:[%s7 + $0x188] sm:$0xff]
  %v921 = vld [vmem:[%s7 + $0x190] sm:$0xff]
  %v922 = vld [vmem:[%s7 + $0x198] sm:$0xff]
  %v923 = vld [vmem:[%s7 + $0x1a0] sm:$0xff]
  %v924 = vld [vmem:[%s7 + $0x1a8] sm:$0xff]
  %v925 = vld [vmem:[%s7 + $0x1b0] sm:$0xff]
  %v926 = vld [vmem:[%s7 + $0x1b8] sm:$0xff]
  %v927 = vld [vmem:[%s7 + $0x1c0] sm:$0xff]
  %v928 = vld [vmem:[%s7 + $0x1c8] sm:$0xff]
  %v929 = vld [vmem:[%s7 + $0x1d0] sm:$0xff]
  %v930 = vld [vmem:[%s7 + $0x1d8] sm:$0xff]
  %v931 = vld [vmem:[%s7 + $0x1e0] sm:$0xff]
  %v932 = vld [vmem:[%s7 + $0x1e8] sm:$0xff]
  %v933 = vld [vmem:[%s7 + $0x1f0] sm:$0xff]
  %v934 = vld [vmem:[%s7 + $0x1f8] sm:$0xff]
  %935 = vmatprep.subr.mxu0 %v902
  %936 = vmatpush1.msra.mxu0 %v901
  %937 = vmatprep.subr.mxu0 %v900
  %938 = vmatpush1.msra.mxu0 %v899
  %939 = vmatprep.subr.mxu0 %v898
  %940 = vmatpush1.msra.mxu0 %v897
  %941 = vmatprep.subr.mxu0 %v896
  %942 = vmatpush1.msra.mxu0 %v895
  %943 = vmatprep.subr.mxu0 %v894
  %944 = vmatpush1.msra.mxu0 %v893
  %945 = vmatprep.subr.mxu0 %v892
  %946 = vmatpush1.msra.mxu0 %v891
  %947 = vmatprep.subr.mxu0 %v890
  %948 = vmatpush1.msra.mxu0 %v889
  %949 = vmatprep.subr.mxu0 %v888
  %950 = vmatpush1.msra.mxu0 %v887
  %951 = vmatprep.subr.mxu0 %v886
  %952 = vmatpush1.msra.mxu0 %v885
  %953 = vmatprep.subr.mxu0 %v884
  %954 = vmatpush1.msra.mxu0 %v883
  %955 = vmatprep.subr.mxu0 %v882
  %956 = vmatpush1.msra.mxu0 %v881
  %957 = vmatprep.subr.mxu0 %v880
  %958 = vmatpush1.msra.mxu0 %v879
  %959 = vmatprep.subr.mxu0 %v878
  %960 = vmatpush1.msra.mxu0 %v877
  %961 = vmatprep.subr.mxu0 %v876
  %962 = vmatpush1.msra.mxu0 %v875
  %963 = vmatprep.subr.mxu0 %v874
  %964 = vmatpush1.msra.mxu0 %v873
  %965 = vmatprep.subr.mxu0 %v872
  %966 = vmatpush1.msra.mxu0 %v871
  %967 = vmatprep.subr.mxu0 %v934
  %968 = vmatpush2.msra.mxu0 %v933
  %969 = vmatprep.subr.mxu0 %v932
  %970 = vmatpush2.msra.mxu0 %v931
  %971 = vmatprep.subr.mxu0 %v930
  %972 = vmatpush2.msra.mxu0 %v929
  %973 = vmatprep.subr.mxu0 %v928
  %974 = vmatpush2.msra.mxu0 %v927
  %975 = vmatprep.subr.mxu0 %v926
  %976 = vmatpush2.msra.mxu0 %v925
  %977 = vmatprep.subr.mxu0 %v924
  %978 = vmatpush2.msra.mxu0 %v923
  %979 = vmatprep.subr.mxu0 %v922
  %980 = vmatpush2.msra.mxu0 %v921
  %981 = vmatprep.subr.mxu0 %v920
  %982 = vmatpush2.msra.mxu0 %v919
  %983 = vmatprep.subr.mxu0 %v918
  %984 = vmatpush2.msra.mxu0 %v917
  %985 = vmatprep.subr.mxu0 %v916
  %986 = vmatpush2.msra.mxu0 %v915
  %987 = vmatprep.subr.mxu0 %v914
  %988 = vmatpush2.msra.mxu0 %v913
  %989 = vmatprep.subr.mxu0 %v912
  %990 = vmatpush2.msra.mxu0 %v911
  %991 = vmatprep.subr.mxu0 %v910
  %992 = vmatpush2.msra.mxu0 %v909
  %993 = vmatprep.subr.mxu0 %v908
  %994 = vmatpush2.msra.mxu0 %v907
  %995 = vmatprep.subr.mxu0 %v906
  %996 = vmatpush2.msra.mxu0 %v905
  %997 = vmatprep.subr.mxu0 %v904
  %998 = vmatpush2.msra.mxu0 %v903
  %999 = vmatprep.mubr.f32.mxu0 %v870
  %1000 = vmatmul.mubr.f32.gmra.mxu0 %v863
  %v1001 = vpop.f32.mrf.mxu0
  %v1002 = vadd.f32 0.0, %v1001
  %v1003 = vpop.f32.mrf.mxu0
  %v1004 = vadd.f32 0.0, %v1003
  %1005 = vdwg.mxu0
  %v1006 = vmul.f32 %v851, %v851
  %v1007 = vmul.f32 %v852, %v852
  %v1008 = vmul.f32 %v853, %v853
  %v1009 = vmul.f32 %v854, %v854
  %v1010 = vadd.f32 %v1006, %v1008
  %v1011 = vrot.slane %v1010, 4
  %v1012 = vadd.f32 %v1010, %v1011
  %v1013 = vrot.slane %v1012, 2
  %v1014 = vadd.f32 %v1012, %v1013
  %v1015 = vrot.slane %v1014, 1
  %v1016 = vadd.f32 %v1014, %v1015
  %v1017 = vadd.f32 %v1007, %v1009
  %v1018 = vrot.slane %v1017, 4
  %v1019 = vadd.f32 %v1017, %v1018
  %v1020 = vrot.slane %v1019, 2
  %v1021 = vadd.f32 %v1019, %v1020
  %v1022 = vrot.slane %v1021, 1
  %v1023 = vadd.f32 %v1021, %v1022
  %1024 = vmatprep.subr.mxu0 %v902
  %1025 = vmatpush1.msra.mxu0 %v901
  %1026 = vmatprep.subr.mxu0 %v900
  %1027 = vmatpush1.msra.mxu0 %v899
  %1028 = vmatprep.subr.mxu0 %v898
  %1029 = vmatpush1.msra.mxu0 %v897
  %1030 = vmatprep.subr.mxu0 %v896
  %1031 = vmatpush1.msra.mxu0 %v895
  %1032 = vmatprep.subr.mxu0 %v894
  %1033 = vmatpush1.msra.mxu0 %v893
  %1034 = vmatprep.subr.mxu0 %v892
  %1035 = vmatpush1.msra.mxu0 %v891
  %1036 = vmatprep.subr.mxu0 %v890
  %1037 = vmatpush1.msra.mxu0 %v889
  %1038 = vmatprep.subr.mxu0 %v888
  %1039 = vmatpush1.msra.mxu0 %v887
  %1040 = vmatprep.subr.mxu0 %v886
  %1041 = vmatpush1.msra.mxu0 %v885
  %1042 = vmatprep.subr.mxu0 %v884
  %1043 = vmatpush1.msra.mxu0 %v883
  %1044 = vmatprep.subr.mxu0 %v882
  %1045 = vmatpush1.msra.mxu0 %v881
  %1046 = vmatprep.subr.mxu0 %v880
  %1047 = vmatpush1.msra.mxu0 %v879
  %1048 = vmatprep.subr.mxu0 %v878
  %1049 = vmatpush1.msra.mxu0 %v877
  %1050 = vmatprep.subr.mxu0 %v876
  %1051 = vmatpush1.msra.mxu0 %v875
  %1052 = vmatprep.subr.mxu0 %v874
  %1053 = vmatpush1.msra.mxu0 %v873
  %1054 = vmatprep.subr.mxu0 %v872
  %1055 = vmatpush1.msra.mxu0 %v871
  %1056 = vmatprep.subr.mxu0 %v934
  %1057 = vmatpush2.msra.mxu0 %v933
  %1058 = vmatprep.subr.mxu0 %v932
  %1059 = vmatpush2.msra.mxu0 %v931
  %1060 = vmatprep.subr.mxu0 %v930
  %1061 = vmatpush2.msra.mxu0 %v929
  %1062 = vmatprep.subr.mxu0 %v928
  %1063 = vmatpush2.msra.mxu0 %v927
  %1064 = vmatprep.subr.mxu0 %v926
  %1065 = vmatpush2.msra.mxu0 %v925
  %1066 = vmatprep.subr.mxu0 %v924
  %1067 = vmatpush2.msra.mxu0 %v923
  %1068 = vmatprep.subr.mxu0 %v922
  %1069 = vmatpush2.msra.mxu0 %v921
  %1070 = vmatprep.subr.mxu0 %v920
  %1071 = vmatpush2.msra.mxu0 %v919
  %1072 = vmatprep.subr.mxu0 %v918
  %1073 = vmatpush2.msra.mxu0 %v917
  %1074 = vmatprep.subr.mxu0 %v916
  %1075 = vmatpush2.msra.mxu0 %v915
  %1076 = vmatprep.subr.mxu0 %v914
  %1077 = vmatpush2.msra.mxu0 %v913
  %1078 = vmatprep.subr.mxu0 %v912
  %1079 = vmatpush2.msra.mxu0 %v911
  %1080 = vmatprep.subr.mxu0 %v910
  %1081 = vmatpush2.msra.mxu0 %v909
  %1082 = vmatprep.subr.mxu0 %v908
  %1083 = vmatpush2.msra.mxu0 %v907
  %1084 = vmatprep.subr.mxu0 %v906
  %1085 = vmatpush2.msra.mxu0 %v905
  %1086 = vmatprep.subr.mxu0 %v904
  %1087 = vmatpush2.msra.mxu0 %v903
  %1088 = vmatprep.mubr.f32.mxu0 %v1023
  %1089 = vmatmul.mubr.f32.gmra.mxu0 %v1016
  %v1090 = vpop.f32.mrf.mxu0
  %v1091 = vadd.f32 0.0, %v1090
  %v1092 = vpop.f32.mrf.mxu0
  %v1093 = vadd.f32 0.0, %v1092
  %1094 = vdwg.mxu0
  %v1095 = vmul.f32 %v1002, 0.0078125
  %v1096 = vmul.f32 %v1004, 0.0078125
  %v1097 = vmul.f32 %v1091, 0.0078125
  %v1098 = vmul.f32 %v1093, 0.0078125
  %v1099 = vmul.f32 %v1095, %v1095
  %v1100 = vmul.f32 %v1096, %v1096
  %v1101 = vsub.f32 %v1097, %v1099
  %v1102 = vsub.f32 %v1098, %v1100
  %v1103 = vlaneseq
  %v1104 = vshrl.u32 %v1103, 7
  %v1105 = vsub.s32 0, %v1104
  %v1106 = vrot.slane %v1095, %v1105
  %v1107 = vlaneseq
  %v1108 = vshrl.u32 %v1107, 7
  %v1109 = vsub.s32 0, %v1108
  %v1110 = vrot.slane %v1096, %v1109
  %v1111 = vsub.f32 %v851, %v1106
  %v1112 = vsub.f32 %v852, %v1110
  %v1113 = vsub.f32 %v853, %v1106
  %v1114 = vsub.f32 %v854, %v1110
  %v1115 = vadd.f32 %v1101, 0.0001
  %v1116 = vadd.f32 %v1102, 0.0001
  %v1117 = vrsqrt.pop %v1115
  %v1118 = vrsqrt.pop %v1116
  %v1121 = vcombine.low %v1117, %v1118
  %v1123 = vunpack.c.l.s4 1966171168
  %v1124 = vunpack.c.0.s8 %v1123
  %v1125 = vlaneseq
  %v1126 = vshrl.u32 %v1125, 7
  %v1127 = vsub.s32 %v1124, %v1126
  %v1128 = vrot.slane %v1121, %v1127
  %v1130 = vunpack.c.l.s4 1966171168
  %v1131 = vunpack.c.0.s8 %v1130
  %v1132 = vlaneseq
  %v1133 = vshrl.u32 %v1132, 7
  %v1134 = vsub.s32 %v1131, %v1133
  %v1135 = vrot.slane %v1128, %v1134
  %v1137 = vmul.f32 %v855, %v1135
  %v1139 = vlaneseq
  %v1140 = vshrl.u32 %v1139, 7
  %v1141 = vsub.s32 0, %v1140
  %v1142 = vrot.slane %v1137, %v1141
  %v1143 = vlaneseq
  %v1144 = vshrl.u32 %v1143, 7
  %v1145 = vsub.s32 1, %v1144
  %v1146 = vrot.slane %v1137, %v1145
  %v1149 = vmul.f32 %v1111, %v1142
  %v1150 = vmul.f32 %v1112, %v1146
  %v1151 = vmul.f32 %v1113, %v1142
  %v1152 = vmul.f32 %v1114, %v1146
  %v1154 = vlaneseq
  %v1155 = vshrl.u32 %v1154, 7
  %v1156 = vsub.s32 0, %v1155
  %v1157 = vrot.slane %v856, %v1156
  %v1158 = vlaneseq
  %v1159 = vshrl.u32 %v1158, 7
  %v1160 = vsub.s32 1, %v1159
  %v1161 = vrot.slane %v856, %v1160
  %v1164 = vadd.f32 %v1149, %v1157
  %v1165 = vadd.f32 %v1150, %v1161
  %v1166 = vadd.f32 %v1151, %v1157
  %v1167 = vadd.f32 %v1152, %v1161
  %vm1168 = vcmp.ge.f32.partialorder %v1164, 0.0
  %vm1169 = vcmp.ge.f32.partialorder %v1165, 0.0
  %vm1170 = vcmp.ge.f32.partialorder %v1166, 0.0
  %vm1171 = vcmp.ge.f32.partialorder %v1167, 0.0
  %v1172 = vmul.f32 %v1164, 0.02
  %v1173 = vmul.f32 %v1165, 0.02
  %v1174 = vmul.f32 %v1166, 0.02
  %v1175 = vmul.f32 %v1167, 0.02
  %v1176 = vsel %vm1168, %v1164, %v1172
  %v1177 = vsel %vm1169, %v1165, %v1173
  %v1178 = vsel %vm1170, %v1166, %v1174
  %v1179 = vsel %vm1171, %v1167, %v1175
  %v1184 = vrot.slane %v1176, 7
  %v1185 = vrot.slane %v1177, 7
  %v1186 = vrot.slane %v1178, 7
  %v1187 = vrot.slane %v1179, 7
  %1192 = vst [vmem:[#allocation2] sm:$0xfe] %v1184
  %1193 = vst [vmem:[#allocation2 + $0x8] sm:$0xfe] %v1185
  %1194 = vst [vmem:[#allocation2 + $0x10] sm:$0x1] %v1184
  %1195 = vst [vmem:[#allocation2 + $0x18] sm:$0x1] %v1185
  %1196 = vst [vmem:[#allocation2 + $0x20] sm:$0xfe] %v1186
  %1197 = vst [vmem:[#allocation2 + $0x28] sm:$0xfe] %v1187
  %1198 = vst [vmem:[#allocation2 + $0x30] sm:$0x1] %v1186
  %1199 = vst [vmem:[#allocation2 + $0x38] sm:$0x1] %v1187
  %v1200 = vld [vmem:[#allocation2] sm:$0xff]
  %v1201 = vld [vmem:[#allocation2 + $0x8] sm:$0xff]
  %v1202 = vld [vmem:[#allocation2 + $0x20] sm:$0xff]
  %v1203 = vld [vmem:[#allocation2 + $0x28] sm:$0xff]
  %v1204 = vpack.c.bf16 %v1202, %v1200
  %v1205 = vpack.c.bf16 %v1203, %v1201
  %v1206 = vld [vmem:[%s2] sm:$0xff]
  %v1207 = vld [vmem:[%s2 + $0x8] sm:$0xff]
  %v1208 = vld [vmem:[%s2 + $0x10] sm:$0xff]
  %v1209 = vld [vmem:[%s2 + $0x18] sm:$0xff]
  %v1210 = vld [vmem:[%s2 + $0x20] sm:$0xff]
  %v1211 = vld [vmem:[%s2 + $0x28] sm:$0xff]
  %v1212 = vld [vmem:[%s2 + $0x30] sm:$0xff]
  %v1213 = vld [vmem:[%s2 + $0x38] sm:$0xff]
  %v1214 = vld [vmem:[%s2 + $0x40] sm:$0xff]
  %v1215 = vld [vmem:[%s2 + $0x48] sm:$0xff]
  %v1216 = vld [vmem:[%s2 + $0x50] sm:$0xff]
  %v1217 = vld [vmem:[%s2 + $0x58] sm:$0xff]
  %v1218 = vld [vmem:[%s2 + $0x60] sm:$0xff]
  %v1219 = vld [vmem:[%s2 + $0x68] sm:$0xff]
  %v1220 = vld [vmem:[%s2 + $0x70] sm:$0xff]
  %v1221 = vld [vmem:[%s2 + $0x78] sm:$0xff]
  %v1222 = vld [vmem:[%s2 + $0x80] sm:$0xff]
  %v1223 = vld [vmem:[%s2 + $0x88] sm:$0xff]
  %v1224 = vld [vmem:[%s2 + $0x90] sm:$0xff]
  %v1225 = vld [vmem:[%s2 + $0x98] sm:$0xff]
  %v1226 = vld [vmem:[%s2 + $0xa0] sm:$0xff]
  %v1227 = vld [vmem:[%s2 + $0xa8] sm:$0xff]
  %v1228 = vld [vmem:[%s2 + $0xb0] sm:$0xff]
  %v1229 = vld [vmem:[%s2 + $0xb8] sm:$0xff]
  %v1230 = vld [vmem:[%s2 + $0xc0] sm:$0xff]
  %v1231 = vld [vmem:[%s2 + $0xc8] sm:$0xff]
  %v1232 = vld [vmem:[%s2 + $0xd0] sm:$0xff]
  %v1233 = vld [vmem:[%s2 + $0xd8] sm:$0xff]
  %v1234 = vld [vmem:[%s2 + $0xe0] sm:$0xff]
  %v1235 = vld [vmem:[%s2 + $0xe8] sm:$0xff]
  %v1236 = vld [vmem:[%s2 + $0xf0] sm:$0xff]
  %v1237 = vld [vmem:[%s2 + $0xf8] sm:$0xff]
  %v1238 = vld [vmem:[#allocation2] sm:$0xfe]
  %v1239 = vld [vmem:[#allocation2 + $0x8] sm:$0xfe]
  %v1240 = vld [vmem:[#allocation2 + $0x10] sm:$0x1]
  %v1241 = vld [vmem:[#allocation2 + $0x18] sm:$0x1]
  %v1242 = vld [vmem:[#allocation2 + $0x20] sm:$0xfe]
  %v1243 = vld [vmem:[#allocation2 + $0x28] sm:$0xfe]
  %v1244 = vld [vmem:[#allocation2 + $0x30] sm:$0x1]
  %v1245 = vld [vmem:[#allocation2 + $0x38] sm:$0x1]
  %v1254 = vrot.slane %v1238, 1
  %v1255 = vrot.slane %v1240, 1
  %v1256 = vsel %vm122, %v1254, %v1255
  %v1257 = vrot.slane %v1239, 1
  %v1258 = vrot.slane %v1241, 1
  %v1259 = vsel %vm122, %v1257, %v1258
  %v1260 = vrot.slane %v1242, 1
  %v1261 = vrot.slane %v1244, 1
  %v1262 = vsel %vm122, %v1260, %v1261
  %v1263 = vrot.slane %v1243, 1
  %v1264 = vrot.slane %v1245, 1
  %v1265 = vsel %vm122, %v1263, %v1264
  %v1270 = vpack.c.bf16 %v1262, %v1256
  %v1271 = vpack.c.bf16 %v1265, %v1259
  %s1272 = scalar_lea.vmem %s2, 256
  %v1273 = vld [vmem:[%s1272] sm:$0xff]
  %v1274 = vld [vmem:[%s1272 + $0x8] sm:$0xff]
  %v1275 = vld [vmem:[%s1272 + $0x10] sm:$0xff]
  %v1276 = vld [vmem:[%s1272 + $0x18] sm:$0xff]
  %v1277 = vld [vmem:[%s1272 + $0x20] sm:$0xff]
  %v1278 = vld [vmem:[%s1272 + $0x28] sm:$0xff]
  %v1279 = vld [vmem:[%s1272 + $0x30] sm:$0xff]
  %v1280 = vld [vmem:[%s1272 + $0x38] sm:$0xff]
  %v1281 = vld [vmem:[%s1272 + $0x40] sm:$0xff]
  %v1282 = vld [vmem:[%s1272 + $0x48] sm:$0xff]
  %v1283 = vld [vmem:[%s1272 + $0x50] sm:$0xff]
  %v1284 = vld [vmem:[%s1272 + $0x58] sm:$0xff]
  %v1285 = vld [vmem:[%s1272 + $0x60] sm:$0xff]
  %v1286 = vld [vmem:[%s1272 + $0x68] sm:$0xff]
  %v1287 = vld [vmem:[%s1272 + $0x70] sm:$0xff]
  %v1288 = vld [vmem:[%s1272 + $0x78] sm:$0xff]
  %v1289 = vld [vmem:[%s1272 + $0x80] sm:$0xff]
  %v1290 = vld [vmem:[%s1272 + $0x88] sm:$0xff]
  %v1291 = vld [vmem:[%s1272 + $0x90] sm:$0xff]
  %v1292 = vld [vmem:[%s1272 + $0x98] sm:$0xff]
  %v1293 = vld [vmem:[%s1272 + $0xa0] sm:$0xff]
  %v1294 = vld [vmem:[%s1272 + $0xa8] sm:$0xff]
  %v1295 = vld [vmem:[%s1272 + $0xb0] sm:$0xff]
  %v1296 = vld [vmem:[%s1272 + $0xb8] sm:$0xff]
  %v1297 = vld [vmem:[%s1272 + $0xc0] sm:$0xff]
  %v1298 = vld [vmem:[%s1272 + $0xc8] sm:$0xff]
  %v1299 = vld [vmem:[%s1272 + $0xd0] sm:$0xff]
  %v1300 = vld [vmem:[%s1272 + $0xd8] sm:$0xff]
  %v1301 = vld [vmem:[%s1272 + $0xe0] sm:$0xff]
  %v1302 = vld [vmem:[%s1272 + $0xe8] sm:$0xff]
  %v1303 = vld [vmem:[%s1272 + $0xf0] sm:$0xff]
  %v1304 = vld [vmem:[%s1272 + $0xf8] sm:$0xff]
  %v1337 = vunpack.c.l.b16 %v1273
  %v1338 = vunpack.c.h.b16 %v1273
  %v1339 = vunpack.c.l.b16 %v1274
  %v1340 = vunpack.c.h.b16 %v1274
  %v1341 = vunpack.c.l.b16 %v1275
  %v1342 = vunpack.c.h.b16 %v1275
  %v1343 = vunpack.c.l.b16 %v1276
  %v1344 = vunpack.c.h.b16 %v1276
  %v1345 = vunpack.c.l.b16 %v1277
  %v1346 = vunpack.c.h.b16 %v1277
  %v1347 = vunpack.c.l.b16 %v1278
  %v1348 = vunpack.c.h.b16 %v1278
  %v1349 = vunpack.c.l.b16 %v1279
  %v1350 = vunpack.c.h.b16 %v1279
  %v1351 = vunpack.c.l.b16 %v1280
  %v1352 = vunpack.c.h.b16 %v1280
  %v1353 = vunpack.c.l.b16 %v1281
  %v1354 = vunpack.c.h.b16 %v1281
  %v1355 = vunpack.c.l.b16 %v1282
  %v1356 = vunpack.c.h.b16 %v1282
  %v1357 = vunpack.c.l.b16 %v1283
  %v1358 = vunpack.c.h.b16 %v1283
  %v1359 = vunpack.c.l.b16 %v1284
  %v1360 = vunpack.c.h.b16 %v1284
  %v1361 = vunpack.c.l.b16 %v1285
  %v1362 = vunpack.c.h.b16 %v1285
  %v1363 = vunpack.c.l.b16 %v1286
  %v1364 = vunpack.c.h.b16 %v1286
  %v1365 = vunpack.c.l.b16 %v1287
  %v1366 = vunpack.c.h.b16 %v1287
  %v1367 = vunpack.c.l.b16 %v1288
  %v1368 = vunpack.c.h.b16 %v1288
  %v1369 = vunpack.c.l.b16 %v1289
  %v1370 = vunpack.c.h.b16 %v1289
  %v1371 = vunpack.c.l.b16 %v1290
  %v1372 = vunpack.c.h.b16 %v1290
  %v1373 = vunpack.c.l.b16 %v1291
  %v1374 = vunpack.c.h.b16 %v1291
  %v1375 = vunpack.c.l.b16 %v1292
  %v1376 = vunpack.c.h.b16 %v1292
  %v1377 = vunpack.c.l.b16 %v1293
  %v1378 = vunpack.c.h.b16 %v1293
  %v1379 = vunpack.c.l.b16 %v1294
  %v1380 = vunpack.c.h.b16 %v1294
  %v1381 = vunpack.c.l.b16 %v1295
  %v1382 = vunpack.c.h.b16 %v1295
  %v1383 = vunpack.c.l.b16 %v1296
  %v1384 = vunpack.c.h.b16 %v1296
  %v1385 = vunpack.c.l.b16 %v1297
  %v1386 = vunpack.c.h.b16 %v1297
  %v1387 = vunpack.c.l.b16 %v1298
  %v1388 = vunpack.c.h.b16 %v1298
  %v1389 = vunpack.c.l.b16 %v1299
  %v1390 = vunpack.c.h.b16 %v1299
  %v1391 = vunpack.c.l.b16 %v1300
  %v1392 = vunpack.c.h.b16 %v1300
  %v1393 = vunpack.c.l.b16 %v1301
  %v1394 = vunpack.c.h.b16 %v1301
  %v1395 = vunpack.c.l.b16 %v1302
  %v1396 = vunpack.c.h.b16 %v1302
  %v1397 = vunpack.c.l.b16 %v1303
  %v1398 = vunpack.c.h.b16 %v1303
  %v1399 = vunpack.c.l.b16 %v1304
  %v1400 = vunpack.c.h.b16 %v1304
  %v1401 = vpack.c.b16 %v1339, %v1337
  %v1402 = vpack.c.b16 %v1340, %v1338
  %v1403 = vpack.c.b16 %v1343, %v1341
  %v1404 = vpack.c.b16 %v1344, %v1342
  %v1405 = vpack.c.b16 %v1347, %v1345
  %v1406 = vpack.c.b16 %v1348, %v1346
  %v1407 = vpack.c.b16 %v1351, %v1349
  %v1408 = vpack.c.b16 %v1352, %v1350
  %v1409 = vpack.c.b16 %v1355, %v1353
  %v1410 = vpack.c.b16 %v1356, %v1354
  %v1411 = vpack.c.b16 %v1359, %v1357
  %v1412 = vpack.c.b16 %v1360, %v1358
  %v1413 = vpack.c.b16 %v1363, %v1361
  %v1414 = vpack.c.b16 %v1364, %v1362
  %v1415 = vpack.c.b16 %v1367, %v1365
  %v1416 = vpack.c.b16 %v1368, %v1366
  %v1417 = vpack.c.b16 %v1371, %v1369
  %v1418 = vpack.c.b16 %v1372, %v1370
  %v1419 = vpack.c.b16 %v1375, %v1373
  %v1420 = vpack.c.b16 %v1376, %v1374
  %v1421 = vpack.c.b16 %v1379, %v1377
  %v1422 = vpack.c.b16 %v1380, %v1378
  %v1423 = vpack.c.b16 %v1383, %v1381
  %v1424 = vpack.c.b16 %v1384, %v1382
  %v1425 = vpack.c.b16 %v1387, %v1385
  %v1426 = vpack.c.b16 %v1388, %v1386
  %v1427 = vpack.c.b16 %v1391, %v1389
  %v1428 = vpack.c.b16 %v1392, %v1390
  %v1429 = vpack.c.b16 %v1395, %v1393
  %v1430 = vpack.c.b16 %v1396, %v1394
  %v1431 = vpack.c.b16 %v1399, %v1397
  %v1432 = vpack.c.b16 %v1400, %v1398
  %1465 = vmatprep.subr.bf16.mxu0 %v1416
  %1466 = vmatpush1.bf16.msra.mxu0 %v1415
  %1467 = vmatprep.subr.bf16.mxu0 %v1414
  %1468 = vmatpush1.bf16.msra.mxu0 %v1413
  %1469 = vmatprep.subr.bf16.mxu0 %v1412
  %1470 = vmatpush1.bf16.msra.mxu0 %v1411
  %1471 = vmatprep.subr.bf16.mxu0 %v1410
  %1472 = vmatpush1.bf16.msra.mxu0 %v1409
  %1473 = vmatprep.subr.bf16.mxu0 %v1408
  %1474 = vmatpush1.bf16.msra.mxu0 %v1407
  %1475 = vmatprep.subr.bf16.mxu0 %v1406
  %1476 = vmatpush1.bf16.msra.mxu0 %v1405
  %1477 = vmatprep.subr.bf16.mxu0 %v1404
  %1478 = vmatpush1.bf16.msra.mxu0 %v1403
  %1479 = vmatprep.subr.bf16.mxu0 %v1402
  %1480 = vmatpush1.bf16.msra.mxu0 %v1401
  %1481 = vmatprep.subr.bf16.mxu0 %v1432
  %1482 = vmatpush2.bf16.msra.mxu0 %v1431
  %1483 = vmatprep.subr.bf16.mxu0 %v1430
  %1484 = vmatpush2.bf16.msra.mxu0 %v1429
  %1485 = vmatprep.subr.bf16.mxu0 %v1428
  %1486 = vmatpush2.bf16.msra.mxu0 %v1427
  %1487 = vmatprep.subr.bf16.mxu0 %v1426
  %1488 = vmatpush2.bf16.msra.mxu0 %v1425
  %1489 = vmatprep.subr.bf16.mxu0 %v1424
  %1490 = vmatpush2.bf16.msra.mxu0 %v1423
  %1491 = vmatprep.subr.bf16.mxu0 %v1422
  %1492 = vmatpush2.bf16.msra.mxu0 %v1421
  %1493 = vmatprep.subr.bf16.mxu0 %v1420
  %1494 = vmatpush2.bf16.msra.mxu0 %v1419
  %1495 = vmatprep.subr.bf16.mxu0 %v1418
  %1496 = vmatpush2.bf16.msra.mxu0 %v1417
  %1497 = vmatprep.mubr.bf16.mxu0 %v1271
  %1498 = vmatmul.mubr.bf16.gmra.mxu0 %v1270
  %v1499 = vpop.f32.mrf.mxu0
  %v1500 = vadd.f32 0.0, %v1499
  %v1501 = vpop.f32.mrf.mxu0
  %v1502 = vadd.f32 0.0, %v1501
  %v1503 = vpop.f32.mrf.mxu0
  %v1504 = vadd.f32 0.0, %v1503
  %v1505 = vpop.f32.mrf.mxu0
  %v1506 = vadd.f32 0.0, %v1505
  %1507 = vdwg.mxu0
  %v1540 = vunpack.c.l.b16 %v1206
  %v1541 = vunpack.c.h.b16 %v1206
  %v1542 = vunpack.c.l.b16 %v1207
  %v1543 = vunpack.c.h.b16 %v1207
  %v1544 = vunpack.c.l.b16 %v1208
  %v1545 = vunpack.c.h.b16 %v1208
  %v1546 = vunpack.c.l.b16 %v1209
  %v1547 = vunpack.c.h.b16 %v1209
  %v1548 = vunpack.c.l.b16 %v1210
  %v1549 = vunpack.c.h.b16 %v1210
  %v1550 = vunpack.c.l.b16 %v1211
  %v1551 = vunpack.c.h.b16 %v1211
  %v1552 = vunpack.c.l.b16 %v1212
  %v1553 = vunpack.c.h.b16 %v1212
  %v1554 = vunpack.c.l.b16 %v1213
  %v1555 = vunpack.c.h.b16 %v1213
  %v1556 = vunpack.c.l.b16 %v1214
  %v1557 = vunpack.c.h.b16 %v1214
  %v1558 = vunpack.c.l.b16 %v1215
  %v1559 = vunpack.c.h.b16 %v1215
  %v1560 = vunpack.c.l.b16 %v1216
  %v1561 = vunpack.c.h.b16 %v1216
  %v1562 = vunpack.c.l.b16 %v1217
  %v1563 = vunpack.c.h.b16 %v1217
  %v1564 = vunpack.c.l.b16 %v1218
  %v1565 = vunpack.c.h.b16 %v1218
  %v1566 = vunpack.c.l.b16 %v1219
  %v1567 = vunpack.c.h.b16 %v1219
  %v1568 = vunpack.c.l.b16 %v1220
  %v1569 = vunpack.c.h.b16 %v1220
  %v1570 = vunpack.c.l.b16 %v1221
  %v1571 = vunpack.c.h.b16 %v1221
  %v1572 = vunpack.c.l.b16 %v1222
  %v1573 = vunpack.c.h.b16 %v1222
  %v1574 = vunpack.c.l.b16 %v1223
  %v1575 = vunpack.c.h.b16 %v1223
  %v1576 = vunpack.c.l.b16 %v1224
  %v1577 = vunpack.c.h.b16 %v1224
  %v1578 = vunpack.c.l.b16 %v1225
  %v1579 = vunpack.c.h.b16 %v1225
  %v1580 = vunpack.c.l.b16 %v1226
  %v1581 = vunpack.c.h.b16 %v1226
  %v1582 = vunpack.c.l.b16 %v1227
  %v1583 = vunpack.c.h.b16 %v1227
  %v1584 = vunpack.c.l.b16 %v1228
  %v1585 = vunpack.c.h.b16 %v1228
  %v1586 = vunpack.c.l.b16 %v1229
  %v1587 = vunpack.c.h.b16 %v1229
  %v1588 = vunpack.c.l.b16 %v1230
  %v1589 = vunpack.c.h.b16 %v1230
  %v1590 = vunpack.c.l.b16 %v1231
  %v1591 = vunpack.c.h.b16 %v1231
  %v1592 = vunpack.c.l.b16 %v1232
  %v1593 = vunpack.c.h.b16 %v1232
  %v1594 = vunpack.c.l.b16 %v1233
  %v1595 = vunpack.c.h.b16 %v1233
  %v1596 = vunpack.c.l.b16 %v1234
  %v1597 = vunpack.c.h.b16 %v1234
  %v1598 = vunpack.c.l.b16 %v1235
  %v1599 = vunpack.c.h.b16 %v1235
  %v1600 = vunpack.c.l.b16 %v1236
  %v1601 = vunpack.c.h.b16 %v1236
  %v1602 = vunpack.c.l.b16 %v1237
  %v1603 = vunpack.c.h.b16 %v1237
  %v1604 = vpack.c.b16 %v1542, %v1540
  %v1605 = vpack.c.b16 %v1543, %v1541
  %v1606 = vpack.c.b16 %v1546, %v1544
  %v1607 = vpack.c.b16 %v1547, %v1545
  %v1608 = vpack.c.b16 %v1550, %v1548
  %v1609 = vpack.c.b16 %v1551, %v1549
  %v1610 = vpack.c.b16 %v1554, %v1552
  %v1611 = vpack.c.b16 %v1555, %v1553
  %v1612 = vpack.c.b16 %v1558, %v1556
  %v1613 = vpack.c.b16 %v1559, %v1557
  %v1614 = vpack.c.b16 %v1562, %v1560
  %v1615 = vpack.c.b16 %v1563, %v1561
  %v1616 = vpack.c.b16 %v1566, %v1564
  %v1617 = vpack.c.b16 %v1567, %v1565
  %v1618 = vpack.c.b16 %v1570, %v1568
  %v1619 = vpack.c.b16 %v1571, %v1569
  %v1620 = vpack.c.b16 %v1574, %v1572
  %v1621 = vpack.c.b16 %v1575, %v1573
  %v1622 = vpack.c.b16 %v1578, %v1576
  %v1623 = vpack.c.b16 %v1579, %v1577
  %v1624 = vpack.c.b16 %v1582, %v1580
  %v1625 = vpack.c.b16 %v1583, %v1581
  %v1626 = vpack.c.b16 %v1586, %v1584
  %v1627 = vpack.c.b16 %v1587, %v1585
  %v1628 = vpack.c.b16 %v1590, %v1588
  %v1629 = vpack.c.b16 %v1591, %v1589
  %v1630 = vpack.c.b16 %v1594, %v1592
  %v1631 = vpack.c.b16 %v1595, %v1593
  %v1632 = vpack.c.b16 %v1598, %v1596
  %v1633 = vpack.c.b16 %v1599, %v1597
  %v1634 = vpack.c.b16 %v1602, %v1600
  %v1635 = vpack.c.b16 %v1603, %v1601
  %1668 = vmatprep.subr.bf16.mxu0 %v1619
  %1669 = vmatpush1.bf16.msra.mxu0 %v1618
  %1670 = vmatprep.subr.bf16.mxu0 %v1617
  %1671 = vmatpush1.bf16.msra.mxu0 %v1616
  %1672 = vmatprep.subr.bf16.mxu0 %v1615
  %1673 = vmatpush1.bf16.msra.mxu0 %v1614
  %1674 = vmatprep.subr.bf16.mxu0 %v1613
  %1675 = vmatpush1.bf16.msra.mxu0 %v1612
  %1676 = vmatprep.subr.bf16.mxu0 %v1611
  %1677 = vmatpush1.bf16.msra.mxu0 %v1610
  %1678 = vmatprep.subr.bf16.mxu0 %v1609
  %1679 = vmatpush1.bf16.msra.mxu0 %v1608
  %1680 = vmatprep.subr.bf16.mxu0 %v1607
  %1681 = vmatpush1.bf16.msra.mxu0 %v1606
  %1682 = vmatprep.subr.bf16.mxu0 %v1605
  %1683 = vmatpush1.bf16.msra.mxu0 %v1604
  %1684 = vmatprep.subr.bf16.mxu0 %v1635
  %1685 = vmatpush2.bf16.msra.mxu0 %v1634
  %1686 = vmatprep.subr.bf16.mxu0 %v1633
  %1687 = vmatpush2.bf16.msra.mxu0 %v1632
  %1688 = vmatprep.subr.bf16.mxu0 %v1631
  %1689 = vmatpush2.bf16.msra.mxu0 %v1630
  %1690 = vmatprep.subr.bf16.mxu0 %v1629
  %1691 = vmatpush2.bf16.msra.mxu0 %v1628
  %1692 = vmatprep.subr.bf16.mxu0 %v1627
  %1693 = vmatpush2.bf16.msra.mxu0 %v1626
  %1694 = vmatprep.subr.bf16.mxu0 %v1625
  %1695 = vmatpush2.bf16.msra.mxu0 %v1624
  %1696 = vmatprep.subr.bf16.mxu0 %v1623
  %1697 = vmatpush2.bf16.msra.mxu0 %v1622
  %1698 = vmatprep.subr.bf16.mxu0 %v1621
  %1699 = vmatpush2.bf16.msra.mxu0 %v1620
  %1700 = vmatprep.mubr.bf16.mxu0 %v1205
  %1701 = vmatmul.mubr.bf16.gmra.mxu0 %v1204
  %v1702 = vpop.f32.mrf.mxu0
  %v1703 = vadd.f32 %v1500, %v1702
  %v1704 = vpop.f32.mrf.mxu0
  %v1705 = vadd.f32 %v1502, %v1704
  %v1706 = vpop.f32.mrf.mxu0
  %v1707 = vadd.f32 %v1504, %v1706
  %v1708 = vpop.f32.mrf.mxu0
  %v1709 = vadd.f32 %v1506, %v1708
  %1710 = vdwg.mxu0
  %v1711 = vld [vmem:[#allocation2] sm:$0xfc]
  %v1712 = vld [vmem:[#allocation2 + $0x8] sm:$0xfc]
  %v1713 = vld [vmem:[#allocation2 + $0x10] sm:$0x3]
  %v1714 = vld [vmem:[#allocation2 + $0x18] sm:$0x3]
  %v1715 = vld [vmem:[#allocation2 + $0x20] sm:$0xfc]
  %v1716 = vld [vmem:[#allocation2 + $0x28] sm:$0xfc]
  %v1717 = vld [vmem:[#allocation2 + $0x30] sm:$0x3]
  %v1718 = vld [vmem:[#allocation2 + $0x38] sm:$0x3]
  %v1727 = vrot.slane %v1711, 2
  %v1728 = vrot.slane %v1713, 2
  %v1729 = vsel %vm596, %v1727, %v1728
  %v1730 = vrot.slane %v1712, 2
  %v1731 = vrot.slane %v1714, 2
  %v1732 = vsel %vm596, %v1730, %v1731
  %v1733 = vrot.slane %v1715, 2
  %v1734 = vrot.slane %v1717, 2
  %v1735 = vsel %vm596, %v1733, %v1734
  %v1736 = vrot.slane %v1716, 2
  %v1737 = vrot.slane %v1718, 2
  %v1738 = vsel %vm596, %v1736, %v1737
  %v1743 = vpack.c.bf16 %v1735, %v1729
  %v1744 = vpack.c.bf16 %v1738, %v1732
  %s1745 = scalar_lea.vmem %s2, 512
  %v1746 = vld [vmem:[%s1745] sm:$0xff]
  %v1747 = vld [vmem:[%s1745 + $0x8] sm:$0xff]
  %v1748 = vld [vmem:[%s1745 + $0x10] sm:$0xff]
  %v1749 = vld [vmem:[%s1745 + $0x18] sm:$0xff]
  %v1750 = vld [vmem:[%s1745 + $0x20] sm:$0xff]
  %v1751 = vld [vmem:[%s1745 + $0x28] sm:$0xff]
  %v1752 = vld [vmem:[%s1745 + $0x30] sm:$0xff]
  %v1753 = vld [vmem:[%s1745 + $0x38] sm:$0xff]
  %v1754 = vld [vmem:[%s1745 + $0x40] sm:$0xff]
  %v1755 = vld [vmem:[%s1745 + $0x48] sm:$0xff]
  %v1756 = vld [vmem:[%s1745 + $0x50] sm:$0xff]
  %v1757 = vld [vmem:[%s1745 + $0x58] sm:$0xff]
  %v1758 = vld [vmem:[%s1745 + $0x60] sm:$0xff]
  %v1759 = vld [vmem:[%s1745 + $0x68] sm:$0xff]
  %v1760 = vld [vmem:[%s1745 + $0x70] sm:$0xff]
  %v1761 = vld [vmem:[%s1745 + $0x78] sm:$0xff]
  %v1762 = vld [vmem:[%s1745 + $0x80] sm:$0xff]
  %v1763 = vld [vmem:[%s1745 + $0x88] sm:$0xff]
  %v1764 = vld [vmem:[%s1745 + $0x90] sm:$0xff]
  %v1765 = vld [vmem:[%s1745 + $0x98] sm:$0xff]
  %v1766 = vld [vmem:[%s1745 + $0xa0] sm:$0xff]
  %v1767 = vld [vmem:[%s1745 + $0xa8] sm:$0xff]
  %v1768 = vld [vmem:[%s1745 + $0xb0] sm:$0xff]
  %v1769 = vld [vmem:[%s1745 + $0xb8] sm:$0xff]
  %v1770 = vld [vmem:[%s1745 + $0xc0] sm:$0xff]
  %v1771 = vld [vmem:[%s1745 + $0xc8] sm:$0xff]
  %v1772 = vld [vmem:[%s1745 + $0xd0] sm:$0xff]
  %v1773 = vld [vmem:[%s1745 + $0xd8] sm:$0xff]
  %v1774 = vld [vmem:[%s1745 + $0xe0] sm:$0xff]
  %v1775 = vld [vmem:[%s1745 + $0xe8] sm:$0xff]
  %v1776 = vld [vmem:[%s1745 + $0xf0] sm:$0xff]
  %v1777 = vld [vmem:[%s1745 + $0xf8] sm:$0xff]
  %v1810 = vunpack.c.l.b16 %v1746
  %v1811 = vunpack.c.h.b16 %v1746
  %v1812 = vunpack.c.l.b16 %v1747
  %v1813 = vunpack.c.h.b16 %v1747
  %v1814 = vunpack.c.l.b16 %v1748
  %v1815 = vunpack.c.h.b16 %v1748
  %v1816 = vunpack.c.l.b16 %v1749
  %v1817 = vunpack.c.h.b16 %v1749
  %v1818 = vunpack.c.l.b16 %v1750
  %v1819 = vunpack.c.h.b16 %v1750
  %v1820 = vunpack.c.l.b16 %v1751
  %v1821 = vunpack.c.h.b16 %v1751
  %v1822 = vunpack.c.l.b16 %v1752
  %v1823 = vunpack.c.h.b16 %v1752
  %v1824 = vunpack.c.l.b16 %v1753
  %v1825 = vunpack.c.h.b16 %v1753
  %v1826 = vunpack.c.l.b16 %v1754
  %v1827 = vunpack.c.h.b16 %v1754
  %v1828 = vunpack.c.l.b16 %v1755
  %v1829 = vunpack.c.h.b16 %v1755
  %v1830 = vunpack.c.l.b16 %v1756
  %v1831 = vunpack.c.h.b16 %v1756
  %v1832 = vunpack.c.l.b16 %v1757
  %v1833 = vunpack.c.h.b16 %v1757
  %v1834 = vunpack.c.l.b16 %v1758
  %v1835 = vunpack.c.h.b16 %v1758
  %v1836 = vunpack.c.l.b16 %v1759
  %v1837 = vunpack.c.h.b16 %v1759
  %v1838 = vunpack.c.l.b16 %v1760
  %v1839 = vunpack.c.h.b16 %v1760
  %v1840 = vunpack.c.l.b16 %v1761
  %v1841 = vunpack.c.h.b16 %v1761
  %v1842 = vunpack.c.l.b16 %v1762
  %v1843 = vunpack.c.h.b16 %v1762
  %v1844 = vunpack.c.l.b16 %v1763
  %v1845 = vunpack.c.h.b16 %v1763
  %v1846 = vunpack.c.l.b16 %v1764
  %v1847 = vunpack.c.h.b16 %v1764
  %v1848 = vunpack.c.l.b16 %v1765
  %v1849 = vunpack.c.h.b16 %v1765
  %v1850 = vunpack.c.l.b16 %v1766
  %v1851 = vunpack.c.h.b16 %v1766
  %v1852 = vunpack.c.l.b16 %v1767
  %v1853 = vunpack.c.h.b16 %v1767
  %v1854 = vunpack.c.l.b16 %v1768
  %v1855 = vunpack.c.h.b16 %v1768
  %v1856 = vunpack.c.l.b16 %v1769
  %v1857 = vunpack.c.h.b16 %v1769
  %v1858 = vunpack.c.l.b16 %v1770
  %v1859 = vunpack.c.h.b16 %v1770
  %v1860 = vunpack.c.l.b16 %v1771
  %v1861 = vunpack.c.h.b16 %v1771
  %v1862 = vunpack.c.l.b16 %v1772
  %v1863 = vunpack.c.h.b16 %v1772
  %v1864 = vunpack.c.l.b16 %v1773
  %v1865 = vunpack.c.h.b16 %v1773
  %v1866 = vunpack.c.l.b16 %v1774
  %v1867 = vunpack.c.h.b16 %v1774
  %v1868 = vunpack.c.l.b16 %v1775
  %v1869 = vunpack.c.h.b16 %v1775
  %v1870 = vunpack.c.l.b16 %v1776
  %v1871 = vunpack.c.h.b16 %v1776
  %v1872 = vunpack.c.l.b16 %v1777
  %v1873 = vunpack.c.h.b16 %v1777
  %v1874 = vpack.c.b16 %v1812, %v1810
  %v1875 = vpack.c.b16 %v1813, %v1811
  %v1876 = vpack.c.b16 %v1816, %v1814
  %v1877 = vpack.c.b16 %v1817, %v1815
  %v1878 = vpack.c.b16 %v1820, %v1818
  %v1879 = vpack.c.b16 %v1821, %v1819
  %v1880 = vpack.c.b16 %v1824, %v1822
  %v1881 = vpack.c.b16 %v1825, %v1823
  %v1882 = vpack.c.b16 %v1828, %v1826
  %v1883 = vpack.c.b16 %v1829, %v1827
  %v1884 = vpack.c.b16 %v1832, %v1830
  %v1885 = vpack.c.b16 %v1833, %v1831
  %v1886 = vpack.c.b16 %v1836, %v1834
  %v1887 = vpack.c.b16 %v1837, %v1835
  %v1888 = vpack.c.b16 %v1840, %v1838
  %v1889 = vpack.c.b16 %v1841, %v1839
  %v1890 = vpack.c.b16 %v1844, %v1842
  %v1891 = vpack.c.b16 %v1845, %v1843
  %v1892 = vpack.c.b16 %v1848, %v1846
  %v1893 = vpack.c.b16 %v1849, %v1847
  %v1894 = vpack.c.b16 %v1852, %v1850
  %v1895 = vpack.c.b16 %v1853, %v1851
  %v1896 = vpack.c.b16 %v1856, %v1854
  %v1897 = vpack.c.b16 %v1857, %v1855
  %v1898 = vpack.c.b16 %v1860, %v1858
  %v1899 = vpack.c.b16 %v1861, %v1859
  %v1900 = vpack.c.b16 %v1864, %v1862
  %v1901 = vpack.c.b16 %v1865, %v1863
  %v1902 = vpack.c.b16 %v1868, %v1866
  %v1903 = vpack.c.b16 %v1869, %v1867
  %v1904 = vpack.c.b16 %v1872, %v1870
  %v1905 = vpack.c.b16 %v1873, %v1871
  %1938 = vmatprep.subr.bf16.mxu0 %v1889
  %1939 = vmatpush1.bf16.msra.mxu0 %v1888
  %1940 = vmatprep.subr.bf16.mxu0 %v1887
  %1941 = vmatpush1.bf16.msra.mxu0 %v1886
  %1942 = vmatprep.subr.bf16.mxu0 %v1885
  %1943 = vmatpush1.bf16.msra.mxu0 %v1884
  %1944 = vmatprep.subr.bf16.mxu0 %v1883
  %1945 = vmatpush1.bf16.msra.mxu0 %v1882
  %1946 = vmatprep.subr.bf16.mxu0 %v1881
  %1947 = vmatpush1.bf16.msra.mxu0 %v1880
  %1948 = vmatprep.subr.bf16.mxu0 %v1879
  %1949 = vmatpush1.bf16.msra.mxu0 %v1878
  %1950 = vmatprep.subr.bf16.mxu0 %v1877
  %1951 = vmatpush1.bf16.msra.mxu0 %v1876
  %1952 = vmatprep.subr.bf16.mxu0 %v1875
  %1953 = vmatpush1.bf16.msra.mxu0 %v1874
  %1954 = vmatprep.subr.bf16.mxu0 %v1905
  %1955 = vmatpush2.bf16.msra.mxu0 %v1904
  %1956 = vmatprep.subr.bf16.mxu0 %v1903
  %1957 = vmatpush2.bf16.msra.mxu0 %v1902
  %1958 = vmatprep.subr.bf16.mxu0 %v1901
  %1959 = vmatpush2.bf16.msra.mxu0 %v1900
  %1960 = vmatprep.subr.bf16.mxu0 %v1899
  %1961 = vmatpush2.bf16.msra.mxu0 %v1898
  %1962 = vmatprep.subr.bf16.mxu0 %v1897
  %1963 = vmatpush2.bf16.msra.mxu0 %v1896
  %1964 = vmatprep.subr.bf16.mxu0 %v1895
  %1965 = vmatpush2.bf16.msra.mxu0 %v1894
  %1966 = vmatprep.subr.bf16.mxu0 %v1893
  %1967 = vmatpush2.bf16.msra.mxu0 %v1892
  %1968 = vmatprep.subr.bf16.mxu0 %v1891
  %1969 = vmatpush2.bf16.msra.mxu0 %v1890
  %1970 = vmatprep.mubr.bf16.mxu0 %v1744
  %1971 = vmatmul.mubr.bf16.gmra.mxu0 %v1743
  %v1972 = vpop.f32.mrf.mxu0
  %v1973 = vadd.f32 0.0, %v1972
  %v1974 = vpop.f32.mrf.mxu0
  %v1975 = vadd.f32 0.0, %v1974
  %v1976 = vpop.f32.mrf.mxu0
  %v1977 = vadd.f32 0.0, %v1976
  %v1978 = vpop.f32.mrf.mxu0
  %v1979 = vadd.f32 0.0, %v1978
  %1980 = vdwg.mxu0
  %v1981 = vadd.f32 %v1703, %v1973
  %v1982 = vadd.f32 %v1705, %v1975
  %v1983 = vadd.f32 %v1707, %v1977
  %v1984 = vadd.f32 %v1709, %v1979
  %v1985 = vld [vmem:[%s5] sm:$0x3]
  %v1986 = vld [vmem:[%s6] sm:$0x3]
  %v1987 = vadd.f32 %v1981, %v1983
  %v1988 = vrot.slane %v1987, 4
  %v1989 = vadd.f32 %v1987, %v1988
  %v1990 = vrot.slane %v1989, 2
  %v1991 = vadd.f32 %v1989, %v1990
  %v1992 = vrot.slane %v1991, 1
  %v1993 = vadd.f32 %v1991, %v1992
  %v1994 = vadd.f32 %v1982, %v1984
  %v1995 = vrot.slane %v1994, 4
  %v1996 = vadd.f32 %v1994, %v1995
  %v1997 = vrot.slane %v1996, 2
  %v1998 = vadd.f32 %v1996, %v1997
  %v1999 = vrot.slane %v1998, 1
  %v2000 = vadd.f32 %v1998, %v1999
  %v2001 = vld [vmem:[%s7] sm:$0xff]
  %v2002 = vld [vmem:[%s7 + $0x8] sm:$0xff]
  %v2003 = vld [vmem:[%s7 + $0x10] sm:$0xff]
  %v2004 = vld [vmem:[%s7 + $0x18] sm:$0xff]
  %v2005 = vld [vmem:[%s7 + $0x20] sm:$0xff]
  %v2006 = vld [vmem:[%s7 + $0x28] sm:$0xff]
  %v2007 = vld [vmem:[%s7 + $0x30] sm:$0xff]
  %v2008 = vld [vmem:[%s7 + $0x38] sm:$0xff]
  %v2009 = vld [vmem:[%s7 + $0x40] sm:$0xff]
  %v2010 = vld [vmem:[%s7 + $0x48] sm:$0xff]
  %v2011 = vld [vmem:[%s7 + $0x50] sm:$0xff]
  %v2012 = vld [vmem:[%s7 + $0x58] sm:$0xff]
  %v2013 = vld [vmem:[%s7 + $0x60] sm:$0xff]
  %v2014 = vld [vmem:[%s7 + $0x68] sm:$0xff]
  %v2015 = vld [vmem:[%s7 + $0x70] sm:$0xff]
  %v2016 = vld [vmem:[%s7 + $0x78] sm:$0xff]
  %v2017 = vld [vmem:[%s7 + $0x80] sm:$0xff]
  %v2018 = vld [vmem:[%s7 + $0x88] sm:$0xff]
  %v2019 = vld [vmem:[%s7 + $0x90] sm:$0xff]
  %v2020 = vld [vmem:[%s7 + $0x98] sm:$0xff]
  %v2021 = vld [vmem:[%s7 + $0xa0] sm:$0xff]
  %v2022 = vld [vmem:[%s7 + $0xa8] sm:$0xff]
  %v2023 = vld [vmem:[%s7 + $0xb0] sm:$0xff]
  %v2024 = vld [vmem:[%s7 + $0xb8] sm:$0xff]
  %v2025 = vld [vmem:[%s7 + $0xc0] sm:$0xff]
  %v2026 = vld [vmem:[%s7 + $0xc8] sm:$0xff]
  %v2027 = vld [vmem:[%s7 + $0xd0] sm:$0xff]
  %v2028 = vld [vmem:[%s7 + $0xd8] sm:$0xff]
  %v2029 = vld [vmem:[%s7 + $0xe0] sm:$0xff]
  %v2030 = vld [vmem:[%s7 + $0xe8] sm:$0xff]
  %v2031 = vld [vmem:[%s7 + $0xf0] sm:$0xff]
  %v2032 = vld [vmem:[%s7 + $0xf8] sm:$0xff]
  %v2033 = vld [vmem:[%s7 + $0x100] sm:$0xff]
  %v2034 = vld [vmem:[%s7 + $0x108] sm:$0xff]
  %v2035 = vld [vmem:[%s7 + $0x110] sm:$0xff]
  %v2036 = vld [vmem:[%s7 + $0x118] sm:$0xff]
  %v2037 = vld [vmem:[%s7 + $0x120] sm:$0xff]
  %v2038 = vld [vmem:[%s7 + $0x128] sm:$0xff]
  %v2039 = vld [vmem:[%s7 + $0x130] sm:$0xff]
  %v2040 = vld [vmem:[%s7 + $0x138] sm:$0xff]
  %v2041 = vld [vmem:[%s7 + $0x140] sm:$0xff]
  %v2042 = vld [vmem:[%s7 + $0x148] sm:$0xff]
  %v2043 = vld [vmem:[%s7 + $0x150] sm:$0xff]
  %v2044 = vld [vmem:[%s7 + $0x158] sm:$0xff]
  %v2045 = vld [vmem:[%s7 + $0x160] sm:$0xff]
  %v2046 = vld [vmem:[%s7 + $0x168] sm:$0xff]
  %v2047 = vld [vmem:[%s7 + $0x170] sm:$0xff]
  %v2048 = vld [vmem:[%s7 + $0x178] sm:$0xff]
  %v2049 = vld [vmem:[%s7 + $0x180] sm:$0xff]
  %v2050 = vld [vmem:[%s7 + $0x188] sm:$0xff]
  %v2051 = vld [vmem:[%s7 + $0x190] sm:$0xff]
  %v2052 = vld [vmem:[%s7 + $0x198] sm:$0xff]
  %v2053 = vld [vmem:[%s7 + $0x1a0] sm:$0xff]
  %v2054 = vld [vmem:[%s7 + $0x1a8] sm:$0xff]
  %v2055 = vld [vmem:[%s7 + $0x1b0] sm:$0xff]
  %v2056 = vld [vmem:[%s7 + $0x1b8] sm:$0xff]
  %v2057 = vld [vmem:[%s7 + $0x1c0] sm:$0xff]
  %v2058 = vld [vmem:[%s7 + $0x1c8] sm:$0xff]
  %v2059 = vld [vmem:[%s7 + $0x1d0] sm:$0xff]
  %v2060 = vld [vmem:[%s7 + $0x1d8] sm:$0xff]
  %v2061 = vld [vmem:[%s7 + $0x1e0] sm:$0xff]
  %v2062 = vld [vmem:[%s7 + $0x1e8] sm:$0xff]
  %v2063 = vld [vmem:[%s7 + $0x1f0] sm:$0xff]
  %v2064 = vld [vmem:[%s7 + $0x1f8] sm:$0xff]
  %2065 = vmatprep.subr.mxu0 %v2032
  %2066 = vmatpush1.msra.mxu0 %v2031
  %2067 = vmatprep.subr.mxu0 %v2030
  %2068 = vmatpush1.msra.mxu0 %v2029
  %2069 = vmatprep.subr.mxu0 %v2028
  %2070 = vmatpush1.msra.mxu0 %v2027
  %2071 = vmatprep.subr.mxu0 %v2026
  %2072 = vmatpush1.msra.mxu0 %v2025
  %2073 = vmatprep.subr.mxu0 %v2024
  %2074 = vmatpush1.msra.mxu0 %v2023
  %2075 = vmatprep.subr.mxu0 %v2022
  %2076 = vmatpush1.msra.mxu0 %v2021
  %2077 = vmatprep.subr.mxu0 %v2020
  %2078 = vmatpush1.msra.mxu0 %v2019
  %2079 = vmatprep.subr.mxu0 %v2018
  %2080 = vmatpush1.msra.mxu0 %v2017
  %2081 = vmatprep.subr.mxu0 %v2016
  %2082 = vmatpush1.msra.mxu0 %v2015
  %2083 = vmatprep.subr.mxu0 %v2014
  %2084 = vmatpush1.msra.mxu0 %v2013
  %2085 = vmatprep.subr.mxu0 %v2012
  %2086 = vmatpush1.msra.mxu0 %v2011
  %2087 = vmatprep.subr.mxu0 %v2010
  %2088 = vmatpush1.msra.mxu0 %v2009
  %2089 = vmatprep.subr.mxu0 %v2008
  %2090 = vmatpush1.msra.mxu0 %v2007
  %2091 = vmatprep.subr.mxu0 %v2006
  %2092 = vmatpush1.msra.mxu0 %v2005
  %2093 = vmatprep.subr.mxu0 %v2004
  %2094 = vmatpush1.msra.mxu0 %v2003
  %2095 = vmatprep.subr.mxu0 %v2002
  %2096 = vmatpush1.msra.mxu0 %v2001
  %2097 = vmatprep.subr.mxu0 %v2064
  %2098 = vmatpush2.msra.mxu0 %v2063
  %2099 = vmatprep.subr.mxu0 %v2062
  %2100 = vmatpush2.msra.mxu0 %v2061
  %2101 = vmatprep.subr.mxu0 %v2060
  %2102 = vmatpush2.msra.mxu0 %v2059
  %2103 = vmatprep.subr.mxu0 %v2058
  %2104 = vmatpush2.msra.mxu0 %v2057
  %2105 = vmatprep.subr.mxu0 %v2056
  %2106 = vmatpush2.msra.mxu0 %v2055
  %2107 = vmatprep.subr.mxu0 %v2054
  %2108 = vmatpush2.msra.mxu0 %v2053
  %2109 = vmatprep.subr.mxu0 %v2052
  %2110 = vmatpush2.msra.mxu0 %v2051
  %2111 = vmatprep.subr.mxu0 %v2050
  %2112 = vmatpush2.msra.mxu0 %v2049
  %2113 = vmatprep.subr.mxu0 %v2048
  %2114 = vmatpush2.msra.mxu0 %v2047
  %2115 = vmatprep.subr.mxu0 %v2046
  %2116 = vmatpush2.msra.mxu0 %v2045
  %2117 = vmatprep.subr.mxu0 %v2044
  %2118 = vmatpush2.msra.mxu0 %v2043
  %2119 = vmatprep.subr.mxu0 %v2042
  %2120 = vmatpush2.msra.mxu0 %v2041
  %2121 = vmatprep.subr.mxu0 %v2040
  %2122 = vmatpush2.msra.mxu0 %v2039
  %2123 = vmatprep.subr.mxu0 %v2038
  %2124 = vmatpush2.msra.mxu0 %v2037
  %2125 = vmatprep.subr.mxu0 %v2036
  %2126 = vmatpush2.msra.mxu0 %v2035
  %2127 = vmatprep.subr.mxu0 %v2034
  %2128 = vmatpush2.msra.mxu0 %v2033
  %2129 = vmatprep.mubr.f32.mxu0 %v2000
  %2130 = vmatmul.mubr.f32.gmra.mxu0 %v1993
  %v2131 = vpop.f32.mrf.mxu0
  %v2132 = vadd.f32 0.0, %v2131
  %v2133 = vpop.f32.mrf.mxu0
  %v2134 = vadd.f32 0.0, %v2133
  %2135 = vdwg.mxu0
  %v2136 = vmul.f32 %v1981, %v1981
  %v2137 = vmul.f32 %v1982, %v1982
  %v2138 = vmul.f32 %v1983, %v1983
  %v2139 = vmul.f32 %v1984, %v1984
  %v2140 = vadd.f32 %v2136, %v2138
  %v2141 = vrot.slane %v2140, 4
  %v2142 = vadd.f32 %v2140, %v2141
  %v2143 = vrot.slane %v2142, 2
  %v2144 = vadd.f32 %v2142, %v2143
  %v2145 = vrot.slane %v2144, 1
  %v2146 = vadd.f32 %v2144, %v2145
  %v2147 = vadd.f32 %v2137, %v2139
  %v2148 = vrot.slane %v2147, 4
  %v2149 = vadd.f32 %v2147, %v2148
  %v2150 = vrot.slane %v2149, 2
  %v2151 = vadd.f32 %v2149, %v2150
  %v2152 = vrot.slane %v2151, 1
  %v2153 = vadd.f32 %v2151, %v2152
  %2154 = vmatprep.subr.mxu0 %v2032
  %2155 = vmatpush1.msra.mxu0 %v2031
  %2156 = vmatprep.subr.mxu0 %v2030
  %2157 = vmatpush1.msra.mxu0 %v2029
  %2158 = vmatprep.subr.mxu0 %v2028
  %2159 = vmatpush1.msra.mxu0 %v2027
  %2160 = vmatprep.subr.mxu0 %v2026
  %2161 = vmatpush1.msra.mxu0 %v2025
  %2162 = vmatprep.subr.mxu0 %v2024
  %2163 = vmatpush1.msra.mxu0 %v2023
  %2164 = vmatprep.subr.mxu0 %v2022
  %2165 = vmatpush1.msra.mxu0 %v2021
  %2166 = vmatprep.subr.mxu0 %v2020
  %2167 = vmatpush1.msra.mxu0 %v2019
  %2168 = vmatprep.subr.mxu0 %v2018
  %2169 = vmatpush1.msra.mxu0 %v2017
  %2170 = vmatprep.subr.mxu0 %v2016
  %2171 = vmatpush1.msra.mxu0 %v2015
  %2172 = vmatprep.subr.mxu0 %v2014
  %2173 = vmatpush1.msra.mxu0 %v2013
  %2174 = vmatprep.subr.mxu0 %v2012
  %2175 = vmatpush1.msra.mxu0 %v2011
  %2176 = vmatprep.subr.mxu0 %v2010
  %2177 = vmatpush1.msra.mxu0 %v2009
  %2178 = vmatprep.subr.mxu0 %v2008
  %2179 = vmatpush1.msra.mxu0 %v2007
  %2180 = vmatprep.subr.mxu0 %v2006
  %2181 = vmatpush1.msra.mxu0 %v2005
  %2182 = vmatprep.subr.mxu0 %v2004
  %2183 = vmatpush1.msra.mxu0 %v2003
  %2184 = vmatprep.subr.mxu0 %v2002
  %2185 = vmatpush1.msra.mxu0 %v2001
  %2186 = vmatprep.subr.mxu0 %v2064
  %2187 = vmatpush2.msra.mxu0 %v2063
  %2188 = vmatprep.subr.mxu0 %v2062
  %2189 = vmatpush2.msra.mxu0 %v2061
  %2190 = vmatprep.subr.mxu0 %v2060
  %2191 = vmatpush2.msra.mxu0 %v2059
  %2192 = vmatprep.subr.mxu0 %v2058
  %2193 = vmatpush2.msra.mxu0 %v2057
  %2194 = vmatprep.subr.mxu0 %v2056
  %2195 = vmatpush2.msra.mxu0 %v2055
  %2196 = vmatprep.subr.mxu0 %v2054
  %2197 = vmatpush2.msra.mxu0 %v2053
  %2198 = vmatprep.subr.mxu0 %v2052
  %2199 = vmatpush2.msra.mxu0 %v2051
  %2200 = vmatprep.subr.mxu0 %v2050
  %2201 = vmatpush2.msra.mxu0 %v2049
  %2202 = vmatprep.subr.mxu0 %v2048
  %2203 = vmatpush2.msra.mxu0 %v2047
  %2204 = vmatprep.subr.mxu0 %v2046
  %2205 = vmatpush2.msra.mxu0 %v2045
  %2206 = vmatprep.subr.mxu0 %v2044
  %2207 = vmatpush2.msra.mxu0 %v2043
  %2208 = vmatprep.subr.mxu0 %v2042
  %2209 = vmatpush2.msra.mxu0 %v2041
  %2210 = vmatprep.subr.mxu0 %v2040
  %2211 = vmatpush2.msra.mxu0 %v2039
  %2212 = vmatprep.subr.mxu0 %v2038
  %2213 = vmatpush2.msra.mxu0 %v2037
  %2214 = vmatprep.subr.mxu0 %v2036
  %2215 = vmatpush2.msra.mxu0 %v2035
  %2216 = vmatprep.subr.mxu0 %v2034
  %2217 = vmatpush2.msra.mxu0 %v2033
  %2218 = vmatprep.mubr.f32.mxu0 %v2153
  %2219 = vmatmul.mubr.f32.gmra.mxu0 %v2146
  %v2220 = vpop.f32.mrf.mxu0
  %v2221 = vadd.f32 0.0, %v2220
  %v2222 = vpop.f32.mrf.mxu0
  %v2223 = vadd.f32 0.0, %v2222
  %2224 = vdwg.mxu0
  %v2225 = vmul.f32 %v2132, 0.0078125
  %v2226 = vmul.f32 %v2134, 0.0078125
  %v2227 = vmul.f32 %v2221, 0.0078125
  %v2228 = vmul.f32 %v2223, 0.0078125
  %v2229 = vmul.f32 %v2225, %v2225
  %v2230 = vmul.f32 %v2226, %v2226
  %v2231 = vsub.f32 %v2227, %v2229
  %v2232 = vsub.f32 %v2228, %v2230
  %v2233 = vlaneseq
  %v2234 = vshrl.u32 %v2233, 7
  %v2235 = vsub.s32 0, %v2234
  %v2236 = vrot.slane %v2225, %v2235
  %v2237 = vlaneseq
  %v2238 = vshrl.u32 %v2237, 7
  %v2239 = vsub.s32 0, %v2238
  %v2240 = vrot.slane %v2226, %v2239
  %v2241 = vsub.f32 %v1981, %v2236
  %v2242 = vsub.f32 %v1982, %v2240
  %v2243 = vsub.f32 %v1983, %v2236
  %v2244 = vsub.f32 %v1984, %v2240
  %v2245 = vadd.f32 %v2231, 0.0001
  %v2246 = vadd.f32 %v2232, 0.0001
  %v2247 = vrsqrt.pop %v2245
  %v2248 = vrsqrt.pop %v2246
  %v2251 = vcombine.low %v2247, %v2248
  %v2253 = vunpack.c.l.s4 1966171168
  %v2254 = vunpack.c.0.s8 %v2253
  %v2255 = vlaneseq
  %v2256 = vshrl.u32 %v2255, 7
  %v2257 = vsub.s32 %v2254, %v2256
  %v2258 = vrot.slane %v2251, %v2257
  %v2260 = vunpack.c.l.s4 1966171168
  %v2261 = vunpack.c.0.s8 %v2260
  %v2262 = vlaneseq
  %v2263 = vshrl.u32 %v2262, 7
  %v2264 = vsub.s32 %v2261, %v2263
  %v2265 = vrot.slane %v2258, %v2264
  %v2267 = vmul.f32 %v1985, %v2265
  %v2269 = vlaneseq
  %v2270 = vshrl.u32 %v2269, 7
  %v2271 = vsub.s32 0, %v2270
  %v2272 = vrot.slane %v2267, %v2271
  %v2273 = vlaneseq
  %v2274 = vshrl.u32 %v2273, 7
  %v2275 = vsub.s32 1, %v2274
  %v2276 = vrot.slane %v2267, %v2275
  %v2279 = vmul.f32 %v2241, %v2272
  %v2280 = vmul.f32 %v2242, %v2276
  %v2281 = vmul.f32 %v2243, %v2272
  %v2282 = vmul.f32 %v2244, %v2276
  %v2284 = vlaneseq
  %v2285 = vshrl.u32 %v2284, 7
  %v2286 = vsub.s32 0, %v2285
  %v2287 = vrot.slane %v1986, %v2286
  %v2288 = vlaneseq
  %v2289 = vshrl.u32 %v2288, 7
  %v2290 = vsub.s32 1, %v2289
  %v2291 = vrot.slane %v1986, %v2290
  %v2294 = vadd.f32 %v2279, %v2287
  %v2295 = vadd.f32 %v2280, %v2291
  %v2296 = vadd.f32 %v2281, %v2287
  %v2297 = vadd.f32 %v2282, %v2291
  %v2298 = vld [vmem:[%s0] sm:$0xff]
  %v2299 = vld [vmem:[%s0 + $0x8] sm:$0xff]
  %v2300 = vld [vmem:[%s0 + $0x10] sm:$0xff]
  %v2301 = vld [vmem:[%s0 + $0x18] sm:$0xff]
  %v2302 = vadd.f32 %v2294, %v2298
  %v2303 = vadd.f32 %v2295, %v2299
  %v2304 = vadd.f32 %v2296, %v2300
  %v2305 = vadd.f32 %v2297, %v2301
  %vm2306 = vcmp.ge.f32.partialorder %v2302, 0.0
  %vm2307 = vcmp.ge.f32.partialorder %v2303, 0.0
  %vm2308 = vcmp.ge.f32.partialorder %v2304, 0.0
  %vm2309 = vcmp.ge.f32.partialorder %v2305, 0.0
  %v2310 = vmul.f32 %v2302, 0.02
  %v2311 = vmul.f32 %v2303, 0.02
  %v2312 = vmul.f32 %v2304, 0.02
  %v2313 = vmul.f32 %v2305, 0.02
  %v2314 = vsel %vm2306, %v2302, %v2310
  %v2315 = vsel %vm2307, %v2303, %v2311
  %v2316 = vsel %vm2308, %v2304, %v2312
  %v2317 = vsel %vm2309, %v2305, %v2313
  %2318 = vst [vmem:[%s8] sm:$0xff] %v2314
  %2319 = vst [vmem:[%s8 + $0x8] sm:$0xff] %v2315
  %2320 = vst [vmem:[%s8 + $0x10] sm:$0xff] %v2316
  %2321 = vst [vmem:[%s8 + $0x18] sm:$0xff] %v2317
  // Predicated region
  $region34: #{residual_block.1} parent=0 // pred_check
    _
  $region35: #{residual_block.1} parent=0 // pred_check_branch
    %2323 = sbr.rel (0) target = $region37
  $region36: #{residual_block.1} parent=0 // pred_region
    _
  $region37: #{residual_block.1} parent=0 // pred_fallthru
    _
  // Predicated region
  $region38: #{residual_block.1} parent=0 // pred_check
    _
  $region39: #{residual_block.1} parent=0 // pred_check_branch
    %2325 = sbr.rel (0) target = $region41
  $region40: #{residual_block.1} parent=0 // pred_region
    _
  $region41: #{residual_block.1} parent=0 // pred_fallthru
    _

</llo_original>
